<compile_context>
chip_gen: v6e
topology: v6e:2x2x1
jax: 0.10.0
libtpu: 0.0.40
codegen_flags: <defaults>
</compile_context>

<pallas_src>
import functools

import jax
import jax.numpy as jnp
from jax.experimental import pallas as pl
from jax.experimental.pallas import tpu as pltpu

NEG_SLOPE = 0.01  # torch.nn.LeakyReLU default negative_slope


def _leaky_relu(v):
    return jnp.where(v > 0, v, NEG_SLOPE * v)


def encoder_kernel(x_ref, w1_ref, b1_ref, w2_ref, s2_ref, b2_ref, o_ref):
    """Fused linear1 + LeakyReLU + (dequantized) linear2 + bias + LeakyReLU.

    Grid: (outdim // tn, Hpad // tk).  Axis 0 ("parallel") tiles output
    columns; axis 1 ("arbitrary") is the reduction over the padded hidden dim
    (a single step with the default tk = Hpad).  The (B, tn) f32 output block
    is resident across axis 1 and serves as the accumulator.
    """
    k = pl.program_id(1)

    @pl.when(k == 0)
    def _():
        o_ref[...] = jnp.zeros_like(o_ref)

    # linear1 slice (+ bias, LeakyReLU).  With tk = Hpad the k axis has one
    # step, so W1/x/b1 keep a constant block index and are DMA'd exactly once;
    # h is recomputed at most once per output tile (i.e. once per TensorCore
    # on megacore parts), which is negligible (2 x indim x 4096 MACs).
    h = jnp.dot(x_ref[...], w1_ref[...], preferred_element_type=jnp.float32)
    h = _leaky_relu(h + b1_ref[...]).astype(jnp.bfloat16)

    # linear2 partial product.  W2 streams from HBM as int8 and is dequantized
    # to bf16 in VMEM (int8 -> f32 -> bf16, both standard converts, lossless);
    # the per-output-channel scale is applied in the epilogue so the MXU
    # accumulation stays plain f32.
    w2 = w2_ref[...].astype(jnp.float32).astype(jnp.bfloat16)
    o_ref[...] += jnp.dot(h, w2, preferred_element_type=jnp.float32)

    @pl.when(k == pl.num_programs(1) - 1)
    def _():
        o_ref[...] = _leaky_relu(o_ref[...] * s2_ref[...] + b2_ref[...])


@functools.partial(jax.jit, static_argnames=("tn", "tk"))
def _encoder_pallas(x, w1_t, b1, w2_q, w2_scale, b2, *, tn, tk):
    """x: (B, indim) f32; w1_t: (indim, Hpad) bf16; b1: (1, Hpad) f32;
    w2_q: (Hpad, outdim) int8; w2_scale: (1, outdim) f32; b2: (1, outdim) f32."""
    B, indim = x.shape
    Hpad, outdim = w2_q.shape
    assert Hpad % tk == 0 and outdim % tn == 0

    x = x.astype(jnp.bfloat16)

    grid = (outdim // tn, Hpad // tk)
    flops = grid[0] * 2 * B * indim * Hpad + 2 * B * Hpad * outdim
    bytes_accessed = (
        x.size * 2                       # x (bf16), streamed once
        + w1_t.size * 2                  # W1 (bf16), streamed once
        + b1.size * 4
        + w2_q.size * 1                  # W2 (int8), dominant stream
        + w2_scale.size * 4
        + b2.size * 4
        + B * outdim * 4                 # output
    )

    return pl.pallas_call(
        encoder_kernel,
        out_shape=jax.ShapeDtypeStruct((B, outdim), jnp.float32),
        grid_spec=pltpu.PrefetchScalarGridSpec(
            num_scalar_prefetch=0,
            grid=grid,
            in_specs=[
                pl.BlockSpec((B, indim), lambda n, k: (0, 0)),     # x (tiny, once)
                pl.BlockSpec((indim, tk), lambda n, k: (0, k)),    # W1.T tile
                pl.BlockSpec((1, tk), lambda n, k: (0, k)),        # b1 tile
                pl.BlockSpec((tk, tn), lambda n, k: (k, n)),       # W2.T int8 tile
                pl.BlockSpec((1, tn), lambda n, k: (0, n)),        # per-col scale
                pl.BlockSpec((1, tn), lambda n, k: (0, n)),        # b2 tile
            ],
            out_specs=pl.BlockSpec((B, tn), lambda n, k: (0, n)),  # acc + out
        ),
        compiler_params=pltpu.CompilerParams(
            # Output tiles are independent (megacore-shardable on v7x); the
            # hidden-dim reduction is the trailing "arbitrary" axis.
            dimension_semantics=("parallel", "arbitrary"),
        ),
        cost_estimate=pl.CostEstimate(
            flops=flops, transcendentals=0, bytes_accessed=bytes_accessed),
    )(x, w1_t, b1, w2_q, w2_scale, b2)


def _select_tiles(outdim, hidden_pad):
    """Trace-time, per-generation tile selection.

    Default (v7x / v5e / anything unknown): tn=512, grid (outdim/512, 1) —
    lane-dense, feeds both TensorCores on megacore parts, and the int8 W2
    buffers stay far inside v5e's 16 MiB scoped-VMEM default.
    v6e (single TensorCore, 32 MiB scoped default): tn=outdim → grid (1, 1),
    one fully contiguous W2 DMA and minimal per-step overhead.
    """
    tk = hidden_pad
    tn = min(512, outdim)
    try:
        kind = jax.devices()[0].device_kind.lower()
        if "v6" in kind:
            tn = outdim
    except Exception:
        pass
    return tn, tk


def encoder_forward(x, w1_t, b1, w2_q, w2_scale, b2):
    Hpad, outdim = w2_q.shape
    tn, tk = _select_tiles(outdim, Hpad)
    return _encoder_pallas(x, w1_t, b1, w2_q, w2_scale, b2, tn=tn, tk=tk)


def make_params(key, indim, hidden=4089, outdim=1024):
    """Deterministic synthetic params with torch.nn.Linear shapes/init style."""
    k1, k2, k3, k4 = jax.random.split(key, 4)
    bound1 = 1.0 / jnp.sqrt(indim)
    bound2 = 1.0 / jnp.sqrt(hidden)
    # torch layout: weight (out_features, in_features)
    W1 = jax.random.uniform(k1, (hidden, indim), jnp.float32, -bound1, bound1)
    b1 = jax.random.uniform(k2, (hidden,), jnp.float32, -bound1, bound1)
    W2 = jax.random.uniform(k3, (outdim, hidden), jnp.float32, -bound2, bound2)
    b2 = jax.random.uniform(k4, (outdim,), jnp.float32, -bound2, bound2)
    return W1, b1, W2, b2


def _quantize_w2(w2_t):
    """Symmetric per-output-channel int8 quantization of W2.T (Hpad, outdim)."""
    amax = jnp.max(jnp.abs(w2_t), axis=0, keepdims=True)            # (1, outdim)
    scale = jnp.where(amax > 0, amax / 127.0, 1.0).astype(jnp.float32)
    q = jnp.clip(jnp.round(w2_t / scale), -127, 127).astype(jnp.int8)
    return q, scale


def pad_params(W1, b1, W2, b2, hidden_pad=4096):
    """Matmul-friendly layout: transpose, zero-pad hidden 4089->4096,
    bf16 W1, int8 W2 + per-channel f32 scales."""
    hidden = W1.shape[0]
    pad = hidden_pad - hidden
    w1_t = jnp.pad(W1.T, ((0, 0), (0, pad))).astype(jnp.bfloat16)    # (indim, Hpad)
    b1_p = jnp.pad(b1, (0, pad))[None, :].astype(jnp.float32)        # (1, Hpad), pads = 0
    w2_t = jnp.pad(W2.T, ((0, pad), (0, 0))).astype(jnp.float32)     # (Hpad, outdim)
    w2_q, w2_s = _quantize_w2(w2_t)                                  # int8 + (1, outdim) f32
    b2_p = b2[None, :].astype(jnp.float32)                           # (1, outdim)
    return w1_t, b1_p, w2_q, w2_s, b2_p


if __name__ == "__main__":
    key = jax.random.PRNGKey(0)
    kx, kp = jax.random.split(key)

    B, INDIM = 2, 32
    x = jax.random.normal(kx, (B, INDIM), jnp.float32)

    W1, b1, W2, b2 = make_params(kp, INDIM)
    w1_t, b1_p, w2_q, w2_s, b2_p = pad_params(W1, b1, W2, b2)

    out = encoder_forward(x, w1_t, b1_p, w2_q, w2_s, b2_p)
    out = jax.block_until_ready(out)

    # Pure-JAX f32 reference of the PyTorch forward.  Kernel uses bf16 W1/h
    # and int8 W2 (f32 accumulation), so tolerance is loosened accordingly.
    h_ref = x @ W1.T + b1
    h_ref = jnp.where(h_ref > 0, h_ref, NEG_SLOPE * h_ref)
    y_ref = h_ref @ W2.T + b2
    y_ref = jnp.where(y_ref > 0, y_ref, NEG_SLOPE * y_ref)

    assert out.shape == (B, 1024)
    max_err = float(jnp.max(jnp.abs(out - y_ref)))
    assert jnp.allclose(out, y_ref, atol=3e-2, rtol=3e-2), max_err
    print("KERNEL_OK")
</pallas_src>

<mosaic_0001>
module attributes {stable_mosaic.version = 11 : i64} {
  func.func @encoder_kernel(%arg0: i32, %arg1: i32, %arg2: memref<2x32xbf16, #tpu.memory_space<vmem>>, %arg3: memref<32x4096xbf16, #tpu.memory_space<vmem>>, %arg4: memref<1x4096xf32, #tpu.memory_space<vmem>>, %arg5: memref<4096x512xi8, #tpu.memory_space<vmem>>, %arg6: memref<1x512xf32, #tpu.memory_space<vmem>>, %arg7: memref<1x512xf32, #tpu.memory_space<vmem>>, %arg8: memref<2x512xf32, #tpu.memory_space<vmem>>) attributes {dimension_semantics = [#tpu.dimension_semantics<parallel>, #tpu.dimension_semantics<arbitrary>], iteration_bounds = array<i64: 2, 1>, scalar_prefetch = 0 : i64, scratch_operands = 0 : i64, tpu.core_type = #tpu.core_type<tc>, window_params = [{pipeline_mode = #tpu.pipeline_mode<synchronous>, transform_indices = @transform_0, window_bounds = array<i64: 2, 32>}, {transform_indices = @transform_1, window_bounds = array<i64: 32, 4096>}, {transform_indices = @transform_2, window_bounds = array<i64: 1, 4096>}, {transform_indices = @transform_3, window_bounds = array<i64: 4096, 512>}, {transform_indices = @transform_4, window_bounds = array<i64: 1, 512>}, {transform_indices = @transform_5, window_bounds = array<i64: 1, 512>}, {transform_indices = @transform_6, window_bounds = array<i64: 2, 512>}]} {
    %c0_i32 = arith.constant 0 : i32
    %0 = arith.cmpi eq, %arg1, %c0_i32 : i32
    %1 = arith.extui %0 : i1 to i32
    %c0_i32_0 = arith.constant 0 : i32
    %2 = arith.cmpi ne, %1, %c0_i32_0 : i32
    scf.if %2 {
      %cst_17 = arith.constant 0.000000e+00 : f32
      %25 = vector.broadcast %cst_17 : f32 to vector<2x512xf32>
      %c0_18 = arith.constant 0 : index
      %c0_19 = arith.constant 0 : index
      %26 = vector.load %arg8[%c0_18, %c0_19] : memref<2x512xf32, #tpu.memory_space<vmem>>, vector<2x512xf32>
      tpu.vector_store %arg8[%c0_18, %c0_19], %25 {strides = array<i32>} : memref<2x512xf32, #tpu.memory_space<vmem>>, vector<2x512xf32>,
    } else {
    }
    %c0 = arith.constant 0 : index
    %c0_1 = arith.constant 0 : index
    %3 = vector.load %arg2[%c0, %c0_1] : memref<2x32xbf16, #tpu.memory_space<vmem>>, vector<2x32xbf16>
    %c0_2 = arith.constant 0 : index
    %c0_3 = arith.constant 0 : index
    %4 = vector.load %arg3[%c0_2, %c0_3] : memref<32x4096xbf16, #tpu.memory_space<vmem>>, vector<32x4096xbf16>
    %cst = arith.constant dense<0.000000e+00> : vector<2x4096xf32>
    %5 = tpu.matmul %3, %4, %cst {dimension_numbers = #tpu.dot_dimension_numbers<[1], [0], [0], [1], [0, 0, 1, 1], [], []>} : vector<2x32xbf16>, vector<32x4096xbf16>, vector<2x4096xf32> -> vector<2x4096xf32>
    %c0_4 = arith.constant 0 : index
    %c0_5 = arith.constant 0 : index
    %6 = vector.load %arg4[%c0_4, %c0_5] : memref<1x4096xf32, #tpu.memory_space<vmem>>, vector<1x4096xf32>
    %7 = vector.broadcast %6 : vector<1x4096xf32> to vector<2x4096xf32>
    %8 = arith.addf %5, %7 : vector<2x4096xf32>
    %cst_6 = arith.constant 0.000000e+00 : f32
    %9 = vector.broadcast %cst_6 : f32 to vector<2x4096xf32>
    %10 = arith.cmpf ogt, %8, %9 : vector<2x4096xf32>
    %cst_7 = arith.constant 0.00999999977 : f32
    %11 = vector.broadcast %cst_7 : f32 to vector<2x4096xf32>
    %12 = arith.mulf %11, %8 : vector<2x4096xf32>
    %13 = arith.select %10, %8, %12 : vector<2x4096xi1>, vector<2x4096xf32>
    %14 = arith.truncf %13 : vector<2x4096xf32> to vector<2x4096xbf16>
    %c0_8 = arith.constant 0 : index
    %c0_9 = arith.constant 0 : index
    %15 = vector.load %arg5[%c0_8, %c0_9] : memref<4096x512xi8, #tpu.memory_space<vmem>>, vector<4096x512xi8>
    %16 = arith.sitofp %15 : vector<4096x512xi8> to vector<4096x512xf32>
    %17 = arith.truncf %16 : vector<4096x512xf32> to vector<4096x512xbf16>
    %c0_10 = arith.constant 0 : index
    %c0_11 = arith.constant 0 : index
    %18 = vector.load %arg8[%c0_10, %c0_11] : memref<2x512xf32, #tpu.memory_space<vmem>>, vector<2x512xf32>
    %cst_12 = arith.constant dense<0.000000e+00> : vector<2x512xf32>
    %19 = tpu.matmul %14, %17, %cst_12 {dimension_numbers = #tpu.dot_dimension_numbers<[1], [0], [0], [1], [0, 0, 1, 1], [], []>} : vector<2x4096xbf16>, vector<4096x512xbf16>, vector<2x512xf32> -> vector<2x512xf32>
    %20 = arith.addf %18, %19 : vector<2x512xf32>
    %c0_13 = arith.constant 0 : index
    %c0_14 = arith.constant 0 : index
    %21 = vector.load %arg8[%c0_13, %c0_14] : memref<2x512xf32, #tpu.memory_space<vmem>>, vector<2x512xf32>
    tpu.vector_store %arg8[%c0_13, %c0_14], %20 {strides = array<i32>} : memref<2x512xf32, #tpu.memory_space<vmem>>, vector<2x512xf32>,
    %c0_i32_15 = arith.constant 0 : i32
    %22 = arith.cmpi eq, %arg1, %c0_i32_15 : i32
    %23 = arith.extui %22 : i1 to i32
    %c0_i32_16 = arith.constant 0 : i32
    %24 = arith.cmpi ne, %23, %c0_i32_16 : i32
    scf.if %24 {
      %c0_17 = arith.constant 0 : index
      %c0_18 = arith.constant 0 : index
      %25 = vector.load %arg8[%c0_17, %c0_18] : memref<2x512xf32, #tpu.memory_space<vmem>>, vector<2x512xf32>
      %c0_19 = arith.constant 0 : index
      %c0_20 = arith.constant 0 : index
      %26 = vector.load %arg6[%c0_19, %c0_20] : memref<1x512xf32, #tpu.memory_space<vmem>>, vector<1x512xf32>
      %27 = vector.broadcast %26 : vector<1x512xf32> to vector<2x512xf32>
      %28 = arith.mulf %25, %27 : vector<2x512xf32>
      %c0_21 = arith.constant 0 : index
      %c0_22 = arith.constant 0 : index
      %29 = vector.load %arg7[%c0_21, %c0_22] : memref<1x512xf32, #tpu.memory_space<vmem>>, vector<1x512xf32>
      %30 = vector.broadcast %29 : vector<1x512xf32> to vector<2x512xf32>
      %31 = arith.addf %28, %30 : vector<2x512xf32>
      %cst_23 = arith.constant 0.000000e+00 : f32
      %32 = vector.broadcast %cst_23 : f32 to vector<2x512xf32>
      %33 = arith.cmpf ogt, %31, %32 : vector<2x512xf32>
      %cst_24 = arith.constant 0.00999999977 : f32
      %34 = vector.broadcast %cst_24 : f32 to vector<2x512xf32>
      %35 = arith.mulf %34, %31 : vector<2x512xf32>
      %36 = arith.select %33, %31, %35 : vector<2x512xi1>, vector<2x512xf32>
      %c0_25 = arith.constant 0 : index
      %c0_26 = arith.constant 0 : index
      %37 = vector.load %arg8[%c0_25, %c0_26] : memref<2x512xf32, #tpu.memory_space<vmem>>, vector<2x512xf32>
      tpu.vector_store %arg8[%c0_25, %c0_26], %36 {strides = array<i32>} : memref<2x512xf32, #tpu.memory_space<vmem>>, vector<2x512xf32>,
    } else {
    }
    return
  }
  func.func @transform_0(%arg0: i32, %arg1: i32) -> (i32, i32) {
    %c0_i32 = arith.constant 0 : i32
    %c0_i32_0 = arith.constant 0 : i32
    %c0_i32_1 = arith.constant 0 : i32
    return %c0_i32, %c0_i32_0 : i32, i32
  }
  func.func @transform_1(%arg0: i32, %arg1: i32) -> (i32, i32) {
    %c0_i32 = arith.constant 0 : i32
    %c0_i32_0 = arith.constant 0 : i32
    return %c0_i32, %arg1 : i32, i32
  }
  func.func @transform_2(%arg0: i32, %arg1: i32) -> (i32, i32) {
    %c0_i32 = arith.constant 0 : i32
    %c0_i32_0 = arith.constant 0 : i32
    return %c0_i32, %arg1 : i32, i32
  }
  func.func @transform_3(%arg0: i32, %arg1: i32) -> (i32, i32) {
    %c0_i32 = arith.constant 0 : i32
    return %arg1, %arg0 : i32, i32
  }
  func.func @transform_4(%arg0: i32, %arg1: i32) -> (i32, i32) {
    %c0_i32 = arith.constant 0 : i32
    %c0_i32_0 = arith.constant 0 : i32
    return %c0_i32, %arg0 : i32, i32
  }
  func.func @transform_5(%arg0: i32, %arg1: i32) -> (i32, i32) {
    %c0_i32 = arith.constant 0 : i32
    %c0_i32_0 = arith.constant 0 : i32
    return %c0_i32, %arg0 : i32, i32
  }
  func.func @transform_6(%arg0: i32, %arg1: i32) -> (i32, i32) {
    %c0_i32 = arith.constant 0 : i32
    %c0_i32_0 = arith.constant 0 : i32
    return %c0_i32, %arg0 : i32, i32
  }
}

</mosaic_0001>

<llo_original>
// kernel: _encoder_pallas.1
$region0: #{_encoder_pallas.1}
  #allocation0 [shape = 'u32[]', space=smem, size = 0x4, offset = 0x4, fixed_abs, tag = 'smem constant byte address 0x4 - core index']
  #allocation1 [shape = 'u32[144,128]{1,0:T(1,128)}', space=vmem, size = 0x12000, scoped, tag = 'internal scratch']
  %s0 = inlined_call_operand.vmem [shape: bf16[2,32], index: 0, kind: input, shape index: {}]
  %s1 = inlined_call_operand.hbm [shape: bf16[32,4096], index: 1, kind: input, shape index: {}]
  %s2 = inlined_call_operand.hbm [shape: f32[1,4096], index: 2, kind: input, shape index: {}]
  %s3 = inlined_call_operand.hbm [shape: s8[4096,1024], index: 3, kind: input, shape index: {}]
  %s4 = inlined_call_operand.hbm [shape: f32[1,1024], index: 4, kind: input, shape index: {}]
  %s5 = inlined_call_operand.hbm [shape: f32[1,1024], index: 5, kind: input, shape index: {}]
  %s6 = inlined_call_operand.hbm [shape: f32[2,1024], index: 6, kind: output, shape index: {}]
  %s7 = sld [smem:[#allocation0]]
  $region85: #{_encoder_pallas.1} parent=0
    _
  %s9 = ssub.s32 1, %s7
  %s10 = scalar_select 0, %s9, %s7
  $region1: #{_encoder_pallas.1} parent=0
    #allocation2 [shape = 'u8[262144]{0}', space=vmem, size = 0x40000, scoped, tag = 'input window, operand 1, single buffered']
    #allocation3 [shape = 's32[2]{0}', space=sflag, size = 0x8, scoped, tag = 'scoped memory for _encoder_pallas.1']
    #allocation4 [shape = 's32[2]{0}', space=sflag, size = 0x8, scoped, tag = 'scoped memory for _encoder_pallas.1']
    #allocation5 [shape = 'u8[16384]{0}', space=vmem, size = 0x4000, scoped, tag = 'input window, operand 2, single buffered']
    #allocation6 [shape = 's32[1]{0}', space=sflag, size = 0x4, scoped, tag = 'scoped memory for _encoder_pallas.1']
    #allocation7 [shape = 'u8[4194304]{0}', space=vmem, size = 0x400000, scoped, tag = 'input window, operand 3']
    #allocation8 [shape = 'u8[4096]{0}', space=vmem, size = 0x1000, scoped, tag = 'input window, operand 4']
    #allocation9 [shape = 'u8[4096]{0}', space=vmem, size = 0x1000, scoped, tag = 'input window, operand 5']
    #allocation10 [shape = 'u8[8192]{0}', space=vmem, size = 0x2000, scoped, tag = 'output window, operand 0']
    %11 = vsyncpa [#allocation3], 0
    %12 = vsyncpa [#allocation6], 0
    %13 = vsyncpa [#allocation4], 0
    %s14 = scalar_lea.sflag [#allocation4], 1
    %15 = vsyncpa %s14, 0
    loop: start=0, step=1, limit=4
    $region2: #{_encoder_pallas.1} parent=1 // loop_pre_header
      _
    $region3: #{_encoder_pallas.1} parent=1 // loop_header
      %s17 = sphi 0, %s21
      %p18 = scmp.ge.s32.totalorder %s17, 4
      %s24 = sphi 0, %s36
      %s25 = sphi 0, %s32
      %s26 = sphi 0, %s24
      %s27 = sphi 0, %s25
      %s28 = sphi 0, %s26
      %s29 = sphi 0, %s27
      %s37 = sphi 0, %s37
      %s39 = sphi 0, %s37
      %s40 = sphi 0, %s39
      %s54 = sphi 0, %s40
      %s60 = sphi 0, %s62
      %s63 = sphi 0, %s60
      %s64 = sphi 0, %s63
      %s80 = sphi 0, %s64
      %s86 = sphi 0, %s88
      %s89 = sphi 0, %s86
      %s90 = sphi 0, %s89
      %s106 = sphi 0, %s90
      %s114 = sphi 0, %s116
      %s117 = sphi 0, %s114
      %s118 = sphi 0, %s117
      %s134 = sphi 0, %s118
      %s140 = sphi 0, %s142
      %s143 = sphi 0, %s140
      %s144 = sphi 0, %s143
      %s160 = sphi 0, %s144
      %s166 = sphi 0, %s168
      %s169 = sphi 0, %s166
      %s170 = sphi 0, %s169
      %s186 = sphi 0, %s170
      %s192 = sphi 0, %s194
      %s195 = sphi 0, %s192
      %s196 = sphi 0, %s195
      %s212 = sphi 0, %s196
    $region4: #{_encoder_pallas.1} parent=1 // loop_header_branch
      %20 = sbr.rel (%p18) target = $region8
    $region5: #{_encoder_pallas.1} parent=1 // loop_body
      %s22 = ssub.s32 %s17, 1
      %s23 = ssub.s32 %s17, 2
      %s30 = sadd.s32 1, %s25
      %p31 = scmp.ge.s32.totalorder %s30, 1
      %s32 = scalar_select %p31, 0, %s30
      %s33 = sadd.s32 1, %s24
      %s34 = scalar_select %p31, %s33, %s24
      %p35 = scmp.ge.s32.totalorder %s34, 2
      %s36 = scalar_select %p35, 0, %s34
      %s38 = sadd.s32 %s37, 1
      %p41 = scmp.eq.s32.totalorder %s17, 1
      %p42 = scmp.ne.s32.totalorder %s37, %s39
      %p43 = scmp.eq.s32.totalorder %s17, 0
      %p44 = por %p42, %p43
      %p45 = scmp.ne.s32.totalorder %s37, %s39
      %p46 = scmp.eq.s32.totalorder %s22, 1
      %p47 = por %p45, %p46
      %p48 = scmp.ne.s32.totalorder %s39, %s40
      %p49 = scmp.eq.s32.totalorder %s22, 0
      %p50 = por %p48, %p49
      %p51 = scmp.ne.s32.totalorder %s39, %s40
      %p52 = scmp.eq.s32.totalorder %s23, 1
      %p53 = por %p51, %p52
      %p55 = scmp.ne.s32.totalorder %s40, %s54
      %p56 = scmp.eq.s32.totalorder %s23, 0
      %p57 = por %p55, %p56
      %s58 = ssub.s32 %s25, %s32
      %p59 = scmp.eq.s32.totalorder %s58, 0
      %s61 = sadd.s32 %s60, 1
      %s62 = scalar_select %p59, %s60, %s61
      %p65 = pneg %p59
      %p66 = scmp.eq.s32.totalorder %s17, 1
      %p67 = por %p65, %p66
      %p68 = scmp.ne.s32.totalorder %s60, %s63
      %p69 = scmp.eq.s32.totalorder %s17, 0
      %p70 = por %p68, %p69
      %p71 = scmp.ne.s32.totalorder %s60, %s63
      %p72 = scmp.eq.s32.totalorder %s22, 1
      %p73 = por %p71, %p72
      %p74 = scmp.ne.s32.totalorder %s63, %s64
      %p75 = scmp.eq.s32.totalorder %s22, 0
      %p76 = por %p74, %p75
      %p77 = scmp.ne.s32.totalorder %s63, %s64
      %p78 = scmp.eq.s32.totalorder %s23, 1
      %p79 = por %p77, %p78
      %p81 = scmp.ne.s32.totalorder %s64, %s80
      %p82 = scmp.eq.s32.totalorder %s23, 0
      %p83 = por %p81, %p82
      %s84 = ssub.s32 %s25, %s32
      %p85 = scmp.eq.s32.totalorder %s84, 0
      %s87 = sadd.s32 %s86, 1
      %s88 = scalar_select %p85, %s86, %s87
      %p91 = pneg %p85
      %p92 = scmp.eq.s32.totalorder %s17, 1
      %p93 = por %p91, %p92
      %p94 = scmp.ne.s32.totalorder %s86, %s89
      %p95 = scmp.eq.s32.totalorder %s17, 0
      %p96 = por %p94, %p95
      %p97 = scmp.ne.s32.totalorder %s86, %s89
      %p98 = scmp.eq.s32.totalorder %s22, 1
      %p99 = por %p97, %p98
      %p100 = scmp.ne.s32.totalorder %s89, %s90
      %p101 = scmp.eq.s32.totalorder %s22, 0
      %p102 = por %p100, %p101
      %p103 = scmp.ne.s32.totalorder %s89, %s90
      %p104 = scmp.eq.s32.totalorder %s23, 1
      %p105 = por %p103, %p104
      %p107 = scmp.ne.s32.totalorder %s90, %s106
      %p108 = scmp.eq.s32.totalorder %s23, 0
      %p109 = por %p107, %p108
      %s110 = ssub.s32 %s25, %s32
      %s111 = ssub.s32 %s24, %s36
      %s112 = sor.u32 %s110, %s111
      %p113 = scmp.eq.s32.totalorder %s112, 0
      %s115 = sadd.s32 %s114, 1
      %s116 = scalar_select %p113, %s114, %s115
      %p119 = pneg %p113
      %p120 = scmp.eq.s32.totalorder %s17, 1
      %p121 = por %p119, %p120
      %p122 = scmp.ne.s32.totalorder %s114, %s117
      %p123 = scmp.eq.s32.totalorder %s17, 0
      %p124 = por %p122, %p123
      %p125 = scmp.ne.s32.totalorder %s114, %s117
      %p126 = scmp.eq.s32.totalorder %s22, 1
      %p127 = por %p125, %p126
      %p128 = scmp.ne.s32.totalorder %s117, %s118
      %p129 = scmp.eq.s32.totalorder %s22, 0
      %p130 = por %p128, %p129
      %p131 = scmp.ne.s32.totalorder %s117, %s118
      %p132 = scmp.eq.s32.totalorder %s23, 1
      %p133 = por %p131, %p132
      %p135 = scmp.ne.s32.totalorder %s118, %s134
      %p136 = scmp.eq.s32.totalorder %s23, 0
      %p137 = por %p135, %p136
      %s138 = ssub.s32 %s24, %s36
      %p139 = scmp.eq.s32.totalorder %s138, 0
      %s141 = sadd.s32 %s140, 1
      %s142 = scalar_select %p139, %s140, %s141
      %p145 = pneg %p139
      %p146 = scmp.eq.s32.totalorder %s17, 1
      %p147 = por %p145, %p146
      %p148 = scmp.ne.s32.totalorder %s140, %s143
      %p149 = scmp.eq.s32.totalorder %s17, 0
      %p150 = por %p148, %p149
      %p151 = scmp.ne.s32.totalorder %s140, %s143
      %p152 = scmp.eq.s32.totalorder %s22, 1
      %p153 = por %p151, %p152
      %p154 = scmp.ne.s32.totalorder %s143, %s144
      %p155 = scmp.eq.s32.totalorder %s22, 0
      %p156 = por %p154, %p155
      %p157 = scmp.ne.s32.totalorder %s143, %s144
      %p158 = scmp.eq.s32.totalorder %s23, 1
      %p159 = por %p157, %p158
      %p161 = scmp.ne.s32.totalorder %s144, %s160
      %p162 = scmp.eq.s32.totalorder %s23, 0
      %p163 = por %p161, %p162
      %s164 = ssub.s32 %s24, %s36
      %p165 = scmp.eq.s32.totalorder %s164, 0
      %s167 = sadd.s32 %s166, 1
      %s168 = scalar_select %p165, %s166, %s167
      %p171 = pneg %p165
      %p172 = scmp.eq.s32.totalorder %s17, 1
      %p173 = por %p171, %p172
      %p174 = scmp.ne.s32.totalorder %s166, %s169
      %p175 = scmp.eq.s32.totalorder %s17, 0
      %p176 = por %p174, %p175
      %p177 = scmp.ne.s32.totalorder %s166, %s169
      %p178 = scmp.eq.s32.totalorder %s22, 1
      %p179 = por %p177, %p178
      %p180 = scmp.ne.s32.totalorder %s169, %s170
      %p181 = scmp.eq.s32.totalorder %s22, 0
      %p182 = por %p180, %p181
      %p183 = scmp.ne.s32.totalorder %s169, %s170
      %p184 = scmp.eq.s32.totalorder %s23, 1
      %p185 = por %p183, %p184
      %p187 = scmp.ne.s32.totalorder %s170, %s186
      %p188 = scmp.eq.s32.totalorder %s23, 0
      %p189 = por %p187, %p188
      %s190 = ssub.s32 %s24, %s36
      %p191 = scmp.eq.s32.totalorder %s190, 0
      %s193 = sadd.s32 %s192, 1
      %s194 = scalar_select %p191, %s192, %s193
      %p197 = pneg %p191
      %p198 = scmp.eq.s32.totalorder %s17, 1
      %p199 = por %p197, %p198
      %p200 = scmp.ne.s32.totalorder %s192, %s195
      %p201 = scmp.eq.s32.totalorder %s17, 0
      %p202 = por %p200, %p201
      %p203 = scmp.ne.s32.totalorder %s192, %s195
      %p204 = scmp.eq.s32.totalorder %s22, 1
      %p205 = por %p203, %p204
      %p206 = scmp.ne.s32.totalorder %s195, %s196
      %p207 = scmp.eq.s32.totalorder %s22, 0
      %p208 = por %p206, %p207
      %p209 = scmp.ne.s32.totalorder %s195, %s196
      %p210 = scmp.eq.s32.totalorder %s23, 1
      %p211 = por %p209, %p210
      %p213 = scmp.ne.s32.totalorder %s196, %s212
      %p214 = scmp.eq.s32.totalorder %s23, 0
      %p215 = por %p213, %p214
      %p216 = scmp.le.s32.totalorder 1, %s17
      %p217 = scmp.lt.s32.totalorder %s17, 3
      %p218 = pnand %p216, %p217
      %p219 = pneg %p218
      // Predicated region
      $region9: #{_encoder_pallas.1} parent=5 // pred_check
        _
      $region10: #{_encoder_pallas.1} parent=5 // pred_check_branch
        %221 = sbr.rel (%p218) target = $region12
      $region11: #{_encoder_pallas.1} parent=5 // pred_region
        %s222 = ssub.s32 %s17, 1
        // Predicated region
        $region13: #{_encoder_pallas.1} parent=11 // pred_check
          %p223 = pneg %p50
        $region14: #{_encoder_pallas.1} parent=11 // pred_check_branch
          %225 = sbr.rel (%p223) target = $region16
        $region15: #{_encoder_pallas.1} parent=11 // pred_region
          _
        $region16: #{_encoder_pallas.1} parent=11 // pred_fallthru
          _
        // Predicated region
        $region17: #{_encoder_pallas.1} parent=11 // pred_check
          %p226 = pneg %p76
        $region18: #{_encoder_pallas.1} parent=11 // pred_check_branch
          %228 = sbr.rel (%p226) target = $region20
        $region19: #{_encoder_pallas.1} parent=11 // pred_region
          %s229 = smul.u32 32, %s27
          %s231 = ssub.s32 8192, 8192
          %232 = vsyncadd [#allocation3], %s231
          %s233 = smul.addr %s229, 64
          %s234 = scalar_lea.hbm %s1, %s233
          %s235 = sshll.u32 [#allocation2], 4
          %s236 = int_to_ptr.vmem [resolvable:$true] %s235
          %241 = dma.hbm_to_vmem [thread:$0]  %s234, 8192, %s236, [#allocation3], 2048, 2048, 128
        $region20: #{_encoder_pallas.1} parent=11 // pred_fallthru
          _
        // Predicated region
        $region21: #{_encoder_pallas.1} parent=11 // pred_check
          %p242 = pneg %p102
        $region22: #{_encoder_pallas.1} parent=11 // pred_check_branch
          %244 = sbr.rel (%p242) target = $region24
        $region23: #{_encoder_pallas.1} parent=11 // pred_region
          %s245 = smul.u32 32, %s27
          %s247 = ssub.s32 512, 512
          %248 = vsyncadd [#allocation6], %s247
          %s249 = smul.addr %s245, 16
          %s250 = scalar_lea.hbm %s2, %s249
          %s252 = sshll.u32 [#allocation5], 4
          %s253 = int_to_ptr.vmem [resolvable:$true] %s252
          %255 = dma.hbm_to_vmem [thread:$0]  %s250, 512, %s253, [#allocation6]
        $region24: #{_encoder_pallas.1} parent=11 // pred_fallthru
          _
      $region12: #{_encoder_pallas.1} parent=5 // pred_fallthru
        _
      %p256 = scmp.lt.s32.totalorder %s17, 2
      // Predicated region
      $region25: #{_encoder_pallas.1} parent=5 // pred_check
        %p257 = pneg %p256
      $region26: #{_encoder_pallas.1} parent=5 // pred_check_branch
        %259 = sbr.rel (%p257) target = $region28
      $region27: #{_encoder_pallas.1} parent=5 // pred_region
        // Predicated region
        $region29: #{_encoder_pallas.1} parent=27 // pred_check
          %p260 = pneg %p124
        $region30: #{_encoder_pallas.1} parent=27 // pred_check_branch
          %262 = sbr.rel (%p260) target = $region32
        $region31: #{_encoder_pallas.1} parent=27 // pred_region
          %s263 = sand.u32 %s17, 1
          %s264 = scalar_lea.sflag [#allocation3], %s263
          %s265 = sand.u32 %s114, 1
          %s266 = smul.addr %s265, 4096
          %s267 = scalar_lea.vmem [#allocation7], %s266
          %s268 = smul.u32 128, %s25
          %s269 = smul.u32 4, %s24
          %s271 = ssub.s32 65536, 65536
          %272 = vsyncadd %s264, %s271
          %s273 = smul.addr %s268, 8
          %s274 = sadd.s32 %s269, %s273
          %s275 = smul.addr %s274, 128
          %s276 = scalar_lea.hbm %s3, %s275
          %s277 = sshll.u32 %s267, 4
          %s278 = int_to_ptr.vmem [resolvable:$true] %s277
          %283 = dma.hbm_to_vmem [thread:$0]  %s276, 65536, %s278, %s264, 1024, 512, 32
        $region32: #{_encoder_pallas.1} parent=27 // pred_fallthru
          _
        // Predicated region
        $region33: #{_encoder_pallas.1} parent=27 // pred_check
          %p284 = pneg %p150
        $region34: #{_encoder_pallas.1} parent=27 // pred_check_branch
          %286 = sbr.rel (%p284) target = $region36
        $region35: #{_encoder_pallas.1} parent=27 // pred_region
          %s287 = sand.u32 %s17, 1
          %s288 = scalar_lea.sflag [#allocation3], %s287
          %s289 = sand.u32 %s140, 1
          %s290 = smul.addr %s289, 4
          %s291 = scalar_lea.vmem [#allocation8], %s290
          %s292 = smul.u32 4, %s24
          %s294 = ssub.s32 64, 64
          %295 = vsyncadd %s288, %s294
          %s296 = smul.addr %s292, 16
          %s297 = scalar_lea.hbm %s4, %s296
          %s299 = sshll.u32 %s291, 4
          %s300 = int_to_ptr.vmem [resolvable:$true] %s299
          %302 = dma.hbm_to_vmem [thread:$0]  %s297, 64, %s300, %s288
        $region36: #{_encoder_pallas.1} parent=27 // pred_fallthru
          _
        // Predicated region
        $region37: #{_encoder_pallas.1} parent=27 // pred_check
          %p303 = pneg %p176
        $region38: #{_encoder_pallas.1} parent=27 // pred_check_branch
          %305 = sbr.rel (%p303) target = $region40
        $region39: #{_encoder_pallas.1} parent=27 // pred_region
          %s306 = sand.u32 %s17, 1
          %s307 = scalar_lea.sflag [#allocation3], %s306
          %s308 = sand.u32 %s166, 1
          %s309 = smul.addr %s308, 4
          %s310 = scalar_lea.vmem [#allocation9], %s309
          %s311 = smul.u32 4, %s24
          %s313 = ssub.s32 64, 64
          %314 = vsyncadd %s307, %s313
          %s315 = smul.addr %s311, 16
          %s316 = scalar_lea.hbm %s5, %s315
          %s318 = sshll.u32 %s310, 4
          %s319 = int_to_ptr.vmem [resolvable:$true] %s318
          %321 = dma.hbm_to_vmem [thread:$0]  %s316, 64, %s319, %s307
        $region40: #{_encoder_pallas.1} parent=27 // pred_fallthru
          _
      $region28: #{_encoder_pallas.1} parent=5 // pred_fallthru
        _
      %p322 = scmp.le.s32.totalorder 1, %s17
      %p323 = scmp.lt.s32.totalorder %s17, 3
      %p324 = pnand %p322, %p323
      %p325 = pneg %p324
      // Predicated region
      $region41: #{_encoder_pallas.1} parent=5 // pred_check
        _
      $region42: #{_encoder_pallas.1} parent=5 // pred_check_branch
        %327 = sbr.rel (%p324) target = $region44
      $region43: #{_encoder_pallas.1} parent=5 // pred_region
        %s328 = ssub.s32 %s17, 1
        // Predicated region
        $region45: #{_encoder_pallas.1} parent=43 // pred_check
          %p329 = pneg %p76
        $region46: #{_encoder_pallas.1} parent=43 // pred_check_branch
          %331 = sbr.rel (%p329) target = $region48
        $region47: #{_encoder_pallas.1} parent=43 // pred_region
          %332 = dma.done [#allocation3], 8192
        $region48: #{_encoder_pallas.1} parent=43 // pred_fallthru
          _
        // Predicated region
        $region49: #{_encoder_pallas.1} parent=43 // pred_check
          %p333 = pneg %p102
        $region50: #{_encoder_pallas.1} parent=43 // pred_check_branch
          %335 = sbr.rel (%p333) target = $region52
        $region51: #{_encoder_pallas.1} parent=43 // pred_region
          %336 = dma.done [#allocation6], 512
        $region52: #{_encoder_pallas.1} parent=43 // pred_fallthru
          _
        %s337 = sand.u32 %s22, 1
        %s338 = scalar_lea.sflag [#allocation3], %s337
        %s339 = sand.u32 %s117, 1
        %s340 = smul.addr %s339, 4096
        %s341 = scalar_lea.vmem [#allocation7], %s340
        // Predicated region
        $region53: #{_encoder_pallas.1} parent=43 // pred_check
          %p342 = pneg %p130
        $region54: #{_encoder_pallas.1} parent=43 // pred_check_branch
          %344 = sbr.rel (%p342) target = $region56
        $region55: #{_encoder_pallas.1} parent=43 // pred_region
          %345 = dma.done %s338, 65536
        $region56: #{_encoder_pallas.1} parent=43 // pred_fallthru
          _
        %s346 = sand.u32 %s22, 1
        %s347 = scalar_lea.sflag [#allocation3], %s346
        %s348 = sand.u32 %s143, 1
        %s349 = smul.addr %s348, 4
        %s350 = scalar_lea.vmem [#allocation8], %s349
        // Predicated region
        $region57: #{_encoder_pallas.1} parent=43 // pred_check
          %p351 = pneg %p156
        $region58: #{_encoder_pallas.1} parent=43 // pred_check_branch
          %353 = sbr.rel (%p351) target = $region60
        $region59: #{_encoder_pallas.1} parent=43 // pred_region
          %354 = dma.done %s347, 64
        $region60: #{_encoder_pallas.1} parent=43 // pred_fallthru
          _
        %s355 = sand.u32 %s22, 1
        %s356 = scalar_lea.sflag [#allocation3], %s355
        %s357 = sand.u32 %s169, 1
        %s358 = smul.addr %s357, 4
        %s359 = scalar_lea.vmem [#allocation9], %s358
        // Predicated region
        $region61: #{_encoder_pallas.1} parent=43 // pred_check
          %p360 = pneg %p182
        $region62: #{_encoder_pallas.1} parent=43 // pred_check_branch
          %362 = sbr.rel (%p360) target = $region64
        $region63: #{_encoder_pallas.1} parent=43 // pred_region
          %363 = dma.done %s356, 64
        $region64: #{_encoder_pallas.1} parent=43 // pred_fallthru
          _
        %p364 = pneg %p50
        %p365 = pneg %p47
        %p366 = pneg %p76
        %p367 = pneg %p73
        %p368 = pneg %p102
        %p369 = pneg %p99
        %s370 = sand.u32 %s22, 1
        %s371 = scalar_lea.sflag [#allocation3], %s370
        %s372 = sand.u32 %s117, 1
        %s373 = smul.addr %s372, 4096
        %s374 = scalar_lea.vmem [#allocation7], %s373
        %p375 = pneg %p130
        %p376 = pneg %p127
        %s377 = sand.u32 %s22, 1
        %s378 = scalar_lea.sflag [#allocation3], %s377
        %s379 = sand.u32 %s143, 1
        %s380 = smul.addr %s379, 4
        %s381 = scalar_lea.vmem [#allocation8], %s380
        %p382 = pneg %p156
        %p383 = pneg %p153
        %s384 = sand.u32 %s22, 1
        %s385 = scalar_lea.sflag [#allocation3], %s384
        %s386 = sand.u32 %s169, 1
        %s387 = smul.addr %s386, 4
        %s388 = scalar_lea.vmem [#allocation9], %s387
        %p389 = pneg %p182
        %p390 = pneg %p179
        %p391 = pneg %p208
        %p392 = pneg %p205
        %s393 = sand.u32 %s195, 1
        %s394 = scalar_lea.sflag [#allocation4], %s393
        %s395 = sand.u32 %s195, 1
        %s396 = smul.addr %s395, 8
        %s397 = scalar_lea.vmem [#allocation10], %s396
        %s398 = smul.u32 32, %s27
        %s399 = smul.u32 32, %s27
        %s400 = smul.u32 128, %s27
        %s401 = smul.u32 4, %s26
        %s402 = smul.u32 4, %s26
        %s403 = smul.u32 4, %s26
        %s404 = smul.u32 4, %s26
        %p406 = scmp.eq.s32.totalorder %s27, 0
        // Predicated region
        $region65: #{_encoder_pallas.1} parent=43 // pred_check
          %p407 = pneg %p406
        $region66: #{_encoder_pallas.1} parent=43 // pred_check_branch
          %409 = sbr.rel (%p407) target = $region68
        $region67: #{_encoder_pallas.1} parent=43 // pred_region
          %410 = vst [vmem:[%s397] sm:$0xff] 0.0
        $region68: #{_encoder_pallas.1} parent=43 // pred_fallthru
          _
        %v411 = vld [vmem:[%s0] sm:$0x1]
        %v412 = vld [vmem:[#allocation2] sm:$0xff]
        %v413 = vld [vmem:[#allocation2 + $0x8] sm:$0xff]
        %v414 = vld [vmem:[#allocation2 + $0x10] sm:$0xff]
        %v415 = vld [vmem:[#allocation2 + $0x18] sm:$0xff]
        %v416 = vld [vmem:[#allocation2 + $0x20] sm:$0xff]
        %v417 = vld [vmem:[#allocation2 + $0x28] sm:$0xff]
        %v418 = vld [vmem:[#allocation2 + $0x30] sm:$0xff]
        %v419 = vld [vmem:[#allocation2 + $0x38] sm:$0xff]
        %v420 = vld [vmem:[#allocation2 + $0x40] sm:$0xff]
        %v421 = vld [vmem:[#allocation2 + $0x48] sm:$0xff]
        %v422 = vld [vmem:[#allocation2 + $0x50] sm:$0xff]
        %v423 = vld [vmem:[#allocation2 + $0x58] sm:$0xff]
        %v424 = vld [vmem:[#allocation2 + $0x60] sm:$0xff]
        %v425 = vld [vmem:[#allocation2 + $0x68] sm:$0xff]
        %v426 = vld [vmem:[#allocation2 + $0x70] sm:$0xff]
        %v427 = vld [vmem:[#allocation2 + $0x78] sm:$0xff]
        %v428 = vld [vmem:[#allocation2 + $0x80] sm:$0xff]
        %v429 = vld [vmem:[#allocation2 + $0x88] sm:$0xff]
        %v430 = vld [vmem:[#allocation2 + $0x90] sm:$0xff]
        %v431 = vld [vmem:[#allocation2 + $0x98] sm:$0xff]
        %v432 = vld [vmem:[#allocation2 + $0xa0] sm:$0xff]
        %v433 = vld [vmem:[#allocation2 + $0xa8] sm:$0xff]
        %v434 = vld [vmem:[#allocation2 + $0xb0] sm:$0xff]
        %v435 = vld [vmem:[#allocation2 + $0xb8] sm:$0xff]
        %v436 = vld [vmem:[#allocation2 + $0xc0] sm:$0xff]
        %v437 = vld [vmem:[#allocation2 + $0xc8] sm:$0xff]
        %v438 = vld [vmem:[#allocation2 + $0xd0] sm:$0xff]
        %v439 = vld [vmem:[#allocation2 + $0xd8] sm:$0xff]
        %v440 = vld [vmem:[#allocation2 + $0xe0] sm:$0xff]
        %v441 = vld [vmem:[#allocation2 + $0xe8] sm:$0xff]
        %v442 = vld [vmem:[#allocation2 + $0xf0] sm:$0xff]
        %v443 = vld [vmem:[#allocation2 + $0xf8] sm:$0xff]
        %v444 = vld [vmem:[#allocation2 + $0x100] sm:$0xff]
        %v445 = vld [vmem:[#allocation2 + $0x108] sm:$0xff]
        %v446 = vld [vmem:[#allocation2 + $0x110] sm:$0xff]
        %v447 = vld [vmem:[#allocation2 + $0x118] sm:$0xff]
        %v448 = vld [vmem:[#allocation2 + $0x120] sm:$0xff]
        %v449 = vld [vmem:[#allocation2 + $0x128] sm:$0xff]
        %v450 = vld [vmem:[#allocation2 + $0x130] sm:$0xff]
        %v451 = vld [vmem:[#allocation2 + $0x138] sm:$0xff]
        %v452 = vld [vmem:[#allocation2 + $0x140] sm:$0xff]
        %v453 = vld [vmem:[#allocation2 + $0x148] sm:$0xff]
        %v454 = vld [vmem:[#allocation2 + $0x150] sm:$0xff]
        %v455 = vld [vmem:[#allocation2 + $0x158] sm:$0xff]
        %v456 = vld [vmem:[#allocation2 + $0x160] sm:$0xff]
        %v457 = vld [vmem:[#allocation2 + $0x168] sm:$0xff]
        %v458 = vld [vmem:[#allocation2 + $0x170] sm:$0xff]
        %v459 = vld [vmem:[#allocation2 + $0x178] sm:$0xff]
        %v460 = vld [vmem:[#allocation2 + $0x180] sm:$0xff]
        %v461 = vld [vmem:[#allocation2 + $0x188] sm:$0xff]
        %v462 = vld [vmem:[#allocation2 + $0x190] sm:$0xff]
        %v463 = vld [vmem:[#allocation2 + $0x198] sm:$0xff]
        %v464 = vld [vmem:[#allocation2 + $0x1a0] sm:$0xff]
        %v465 = vld [vmem:[#allocation2 + $0x1a8] sm:$0xff]
        %v466 = vld [vmem:[#allocation2 + $0x1b0] sm:$0xff]
        %v467 = vld [vmem:[#allocation2 + $0x1b8] sm:$0xff]
        %v468 = vld [vmem:[#allocation2 + $0x1c0] sm:$0xff]
        %v469 = vld [vmem:[#allocation2 + $0x1c8] sm:$0xff]
        %v470 = vld [vmem:[#allocation2 + $0x1d0] sm:$0xff]
        %v471 = vld [vmem:[#allocation2 + $0x1d8] sm:$0xff]
        %v472 = vld [vmem:[#allocation2 + $0x1e0] sm:$0xff]
        %v473 = vld [vmem:[#allocation2 + $0x1e8] sm:$0xff]
        %v474 = vld [vmem:[#allocation2 + $0x1f0] sm:$0xff]
        %v475 = vld [vmem:[#allocation2 + $0x1f8] sm:$0xff]
        %v476 = vld [vmem:[#allocation5] sm:$0xff]
        %v477 = vld [vmem:[#allocation5 + $0x8] sm:$0xff]
        %v478 = vld [vmem:[#allocation5 + $0x10] sm:$0xff]
        %v479 = vld [vmem:[#allocation5 + $0x18] sm:$0xff]
        %v484 = vlaneseq
        %v485 = vshrl.u32 %v484, 7
        %v486 = vsub.s32 0, %v485
        %v487 = vrot.slane %v476, %v486
        %v488 = vlaneseq
        %v489 = vshrl.u32 %v488, 7
        %v490 = vsub.s32 1, %v489
        %v491 = vrot.slane %v476, %v490
        %v492 = vlaneseq
        %v493 = vshrl.u32 %v492, 7
        %v494 = vsub.s32 2, %v493
        %v495 = vrot.slane %v476, %v494
        %v496 = vlaneseq
        %v497 = vshrl.u32 %v496, 7
        %v498 = vsub.s32 3, %v497
        %v499 = vrot.slane %v476, %v498
        %v500 = vlaneseq
        %v501 = vshrl.u32 %v500, 7
        %v502 = vsub.s32 4, %v501
        %v503 = vrot.slane %v476, %v502
        %v504 = vlaneseq
        %v505 = vshrl.u32 %v504, 7
        %v506 = vsub.s32 5, %v505
        %v507 = vrot.slane %v476, %v506
        %v508 = vlaneseq
        %v509 = vshrl.u32 %v508, 7
        %v510 = vsub.s32 6, %v509
        %v511 = vrot.slane %v476, %v510
        %v512 = vlaneseq
        %v513 = vshrl.u32 %v512, 7
        %v514 = vsub.s32 7, %v513
        %v515 = vrot.slane %v476, %v514
        %v516 = vlaneseq
        %v517 = vshrl.u32 %v516, 7
        %v518 = vsub.s32 0, %v517
        %v519 = vrot.slane %v477, %v518
        %v520 = vlaneseq
        %v521 = vshrl.u32 %v520, 7
        %v522 = vsub.s32 1, %v521
        %v523 = vrot.slane %v477, %v522
        %v524 = vlaneseq
        %v525 = vshrl.u32 %v524, 7
        %v526 = vsub.s32 2, %v525
        %v527 = vrot.slane %v477, %v526
        %v528 = vlaneseq
        %v529 = vshrl.u32 %v528, 7
        %v530 = vsub.s32 3, %v529
        %v531 = vrot.slane %v477, %v530
        %v532 = vlaneseq
        %v533 = vshrl.u32 %v532, 7
        %v534 = vsub.s32 4, %v533
        %v535 = vrot.slane %v477, %v534
        %v536 = vlaneseq
        %v537 = vshrl.u32 %v536, 7
        %v538 = vsub.s32 5, %v537
        %v539 = vrot.slane %v477, %v538
        %v540 = vlaneseq
        %v541 = vshrl.u32 %v540, 7
        %v542 = vsub.s32 6, %v541
        %v543 = vrot.slane %v477, %v542
        %v544 = vlaneseq
        %v545 = vshrl.u32 %v544, 7
        %v546 = vsub.s32 7, %v545
        %v547 = vrot.slane %v477, %v546
        %v548 = vlaneseq
        %v549 = vshrl.u32 %v548, 7
        %v550 = vsub.s32 0, %v549
        %v551 = vrot.slane %v478, %v550
        %v552 = vlaneseq
        %v553 = vshrl.u32 %v552, 7
        %v554 = vsub.s32 1, %v553
        %v555 = vrot.slane %v478, %v554
        %v556 = vlaneseq
        %v557 = vshrl.u32 %v556, 7
        %v558 = vsub.s32 2, %v557
        %v559 = vrot.slane %v478, %v558
        %v560 = vlaneseq
        %v561 = vshrl.u32 %v560, 7
        %v562 = vsub.s32 3, %v561
        %v563 = vrot.slane %v478, %v562
        %v564 = vlaneseq
        %v565 = vshrl.u32 %v564, 7
        %v566 = vsub.s32 4, %v565
        %v567 = vrot.slane %v478, %v566
        %v568 = vlaneseq
        %v569 = vshrl.u32 %v568, 7
        %v570 = vsub.s32 5, %v569
        %v571 = vrot.slane %v478, %v570
        %v572 = vlaneseq
        %v573 = vshrl.u32 %v572, 7
        %v574 = vsub.s32 6, %v573
        %v575 = vrot.slane %v478, %v574
        %v576 = vlaneseq
        %v577 = vshrl.u32 %v576, 7
        %v578 = vsub.s32 7, %v577
        %v579 = vrot.slane %v478, %v578
        %v580 = vlaneseq
        %v581 = vshrl.u32 %v580, 7
        %v582 = vsub.s32 0, %v581
        %v583 = vrot.slane %v479, %v582
        %v584 = vlaneseq
        %v585 = vshrl.u32 %v584, 7
        %v586 = vsub.s32 1, %v585
        %v587 = vrot.slane %v479, %v586
        %v588 = vlaneseq
        %v589 = vshrl.u32 %v588, 7
        %v590 = vsub.s32 2, %v589
        %v591 = vrot.slane %v479, %v590
        %v592 = vlaneseq
        %v593 = vshrl.u32 %v592, 7
        %v594 = vsub.s32 3, %v593
        %v595 = vrot.slane %v479, %v594
        %v596 = vlaneseq
        %v597 = vshrl.u32 %v596, 7
        %v598 = vsub.s32 4, %v597
        %v599 = vrot.slane %v479, %v598
        %v600 = vlaneseq
        %v601 = vshrl.u32 %v600, 7
        %v602 = vsub.s32 5, %v601
        %v603 = vrot.slane %v479, %v602
        %v604 = vlaneseq
        %v605 = vshrl.u32 %v604, 7
        %v606 = vsub.s32 6, %v605
        %v607 = vrot.slane %v479, %v606
        %v608 = vlaneseq
        %v609 = vshrl.u32 %v608, 7
        %v610 = vsub.s32 7, %v609
        %v611 = vrot.slane %v479, %v610
        %v708 = vunpack.c.l.b16 %v412
        %v709 = vunpack.c.h.b16 %v412
        %v710 = vunpack.c.l.b16 %v413
        %v711 = vunpack.c.h.b16 %v413
        %v712 = vunpack.c.l.b16 %v414
        %v713 = vunpack.c.h.b16 %v414
        %v714 = vunpack.c.l.b16 %v415
        %v715 = vunpack.c.h.b16 %v415
        %v716 = vunpack.c.l.b16 %v416
        %v717 = vunpack.c.h.b16 %v416
        %v718 = vunpack.c.l.b16 %v417
        %v719 = vunpack.c.h.b16 %v417
        %v720 = vunpack.c.l.b16 %v418
        %v721 = vunpack.c.h.b16 %v418
        %v722 = vunpack.c.l.b16 %v419
        %v723 = vunpack.c.h.b16 %v419
        %v724 = vunpack.c.l.b16 %v420
        %v725 = vunpack.c.h.b16 %v420
        %v726 = vunpack.c.l.b16 %v421
        %v727 = vunpack.c.h.b16 %v421
        %v728 = vunpack.c.l.b16 %v422
        %v729 = vunpack.c.h.b16 %v422
        %v730 = vunpack.c.l.b16 %v423
        %v731 = vunpack.c.h.b16 %v423
        %v732 = vunpack.c.l.b16 %v424
        %v733 = vunpack.c.h.b16 %v424
        %v734 = vunpack.c.l.b16 %v425
        %v735 = vunpack.c.h.b16 %v425
        %v736 = vunpack.c.l.b16 %v426
        %v737 = vunpack.c.h.b16 %v426
        %v738 = vunpack.c.l.b16 %v427
        %v739 = vunpack.c.h.b16 %v427
        %v740 = vunpack.c.l.b16 %v428
        %v741 = vunpack.c.h.b16 %v428
        %v742 = vunpack.c.l.b16 %v429
        %v743 = vunpack.c.h.b16 %v429
        %v744 = vunpack.c.l.b16 %v430
        %v745 = vunpack.c.h.b16 %v430
        %v746 = vunpack.c.l.b16 %v431
        %v747 = vunpack.c.h.b16 %v431
        %v748 = vunpack.c.l.b16 %v432
        %v749 = vunpack.c.h.b16 %v432
        %v750 = vunpack.c.l.b16 %v433
        %v751 = vunpack.c.h.b16 %v433
        %v752 = vunpack.c.l.b16 %v434
        %v753 = vunpack.c.h.b16 %v434
        %v754 = vunpack.c.l.b16 %v435
        %v755 = vunpack.c.h.b16 %v435
        %v756 = vunpack.c.l.b16 %v436
        %v757 = vunpack.c.h.b16 %v436
        %v758 = vunpack.c.l.b16 %v437
        %v759 = vunpack.c.h.b16 %v437
        %v760 = vunpack.c.l.b16 %v438
        %v761 = vunpack.c.h.b16 %v438
        %v762 = vunpack.c.l.b16 %v439
        %v763 = vunpack.c.h.b16 %v439
        %v764 = vunpack.c.l.b16 %v440
        %v765 = vunpack.c.h.b16 %v440
        %v766 = vunpack.c.l.b16 %v441
        %v767 = vunpack.c.h.b16 %v441
        %v768 = vunpack.c.l.b16 %v442
        %v769 = vunpack.c.h.b16 %v442
        %v770 = vunpack.c.l.b16 %v443
        %v771 = vunpack.c.h.b16 %v443
        %v772 = vunpack.c.l.b16 %v444
        %v773 = vunpack.c.h.b16 %v444
        %v774 = vunpack.c.l.b16 %v445
        %v775 = vunpack.c.h.b16 %v445
        %v776 = vunpack.c.l.b16 %v446
        %v777 = vunpack.c.h.b16 %v446
        %v778 = vunpack.c.l.b16 %v447
        %v779 = vunpack.c.h.b16 %v447
        %v780 = vunpack.c.l.b16 %v448
        %v781 = vunpack.c.h.b16 %v448
        %v782 = vunpack.c.l.b16 %v449
        %v783 = vunpack.c.h.b16 %v449
        %v784 = vunpack.c.l.b16 %v450
        %v785 = vunpack.c.h.b16 %v450
        %v786 = vunpack.c.l.b16 %v451
        %v787 = vunpack.c.h.b16 %v451
        %v788 = vunpack.c.l.b16 %v452
        %v789 = vunpack.c.h.b16 %v452
        %v790 = vunpack.c.l.b16 %v453
        %v791 = vunpack.c.h.b16 %v453
        %v792 = vunpack.c.l.b16 %v454
        %v793 = vunpack.c.h.b16 %v454
        %v794 = vunpack.c.l.b16 %v455
        %v795 = vunpack.c.h.b16 %v455
        %v796 = vunpack.c.l.b16 %v456
        %v797 = vunpack.c.h.b16 %v456
        %v798 = vunpack.c.l.b16 %v457
        %v799 = vunpack.c.h.b16 %v457
        %v800 = vunpack.c.l.b16 %v458
        %v801 = vunpack.c.h.b16 %v458
        %v802 = vunpack.c.l.b16 %v459
        %v803 = vunpack.c.h.b16 %v459
        %v804 = vunpack.c.l.b16 %v460
        %v805 = vunpack.c.h.b16 %v460
        %v806 = vunpack.c.l.b16 %v461
        %v807 = vunpack.c.h.b16 %v461
        %v808 = vunpack.c.l.b16 %v462
        %v809 = vunpack.c.h.b16 %v462
        %v810 = vunpack.c.l.b16 %v463
        %v811 = vunpack.c.h.b16 %v463
        %v812 = vunpack.c.l.b16 %v464
        %v813 = vunpack.c.h.b16 %v464
        %v814 = vunpack.c.l.b16 %v465
        %v815 = vunpack.c.h.b16 %v465
        %v816 = vunpack.c.l.b16 %v466
        %v817 = vunpack.c.h.b16 %v466
        %v818 = vunpack.c.l.b16 %v467
        %v819 = vunpack.c.h.b16 %v467
        %v820 = vunpack.c.l.b16 %v468
        %v821 = vunpack.c.h.b16 %v468
        %v822 = vunpack.c.l.b16 %v469
        %v823 = vunpack.c.h.b16 %v469
        %v824 = vunpack.c.l.b16 %v470
        %v825 = vunpack.c.h.b16 %v470
        %v826 = vunpack.c.l.b16 %v471
        %v827 = vunpack.c.h.b16 %v471
        %v828 = vunpack.c.l.b16 %v472
        %v829 = vunpack.c.h.b16 %v472
        %v830 = vunpack.c.l.b16 %v473
        %v831 = vunpack.c.h.b16 %v473
        %v832 = vunpack.c.l.b16 %v474
        %v833 = vunpack.c.h.b16 %v474
        %v834 = vunpack.c.l.b16 %v475
        %v835 = vunpack.c.h.b16 %v475
        %v836 = vpack.c.b16 %v740, %v708
        %v837 = vpack.c.b16 %v741, %v709
        %v838 = vpack.c.b16 %v742, %v710
        %v839 = vpack.c.b16 %v743, %v711
        %v840 = vpack.c.b16 %v744, %v712
        %v841 = vpack.c.b16 %v745, %v713
        %v842 = vpack.c.b16 %v746, %v714
        %v843 = vpack.c.b16 %v747, %v715
        %v844 = vpack.c.b16 %v748, %v716
        %v845 = vpack.c.b16 %v749, %v717
        %v846 = vpack.c.b16 %v750, %v718
        %v847 = vpack.c.b16 %v751, %v719
        %v848 = vpack.c.b16 %v752, %v720
        %v849 = vpack.c.b16 %v753, %v721
        %v850 = vpack.c.b16 %v754, %v722
        %v851 = vpack.c.b16 %v755, %v723
        %v852 = vpack.c.b16 %v756, %v724
        %v853 = vpack.c.b16 %v757, %v725
        %v854 = vpack.c.b16 %v758, %v726
        %v855 = vpack.c.b16 %v759, %v727
        %v856 = vpack.c.b16 %v760, %v728
        %v857 = vpack.c.b16 %v761, %v729
        %v858 = vpack.c.b16 %v762, %v730
        %v859 = vpack.c.b16 %v763, %v731
        %v860 = vpack.c.b16 %v764, %v732
        %v861 = vpack.c.b16 %v765, %v733
        %v862 = vpack.c.b16 %v766, %v734
        %v863 = vpack.c.b16 %v767, %v735
        %v864 = vpack.c.b16 %v768, %v736
        %v865 = vpack.c.b16 %v769, %v737
        %v866 = vpack.c.b16 %v770, %v738
        %v867 = vpack.c.b16 %v771, %v739
        %v868 = vpack.c.b16 %v804, %v772
        %v869 = vpack.c.b16 %v805, %v773
        %v870 = vpack.c.b16 %v806, %v774
        %v871 = vpack.c.b16 %v807, %v775
        %v872 = vpack.c.b16 %v808, %v776
        %v873 = vpack.c.b16 %v809, %v777
        %v874 = vpack.c.b16 %v810, %v778
        %v875 = vpack.c.b16 %v811, %v779
        %v876 = vpack.c.b16 %v812, %v780
        %v877 = vpack.c.b16 %v813, %v781
        %v878 = vpack.c.b16 %v814, %v782
        %v879 = vpack.c.b16 %v815, %v783
        %v880 = vpack.c.b16 %v816, %v784
        %v881 = vpack.c.b16 %v817, %v785
        %v882 = vpack.c.b16 %v818, %v786
        %v883 = vpack.c.b16 %v819, %v787
        %v884 = vpack.c.b16 %v820, %v788
        %v885 = vpack.c.b16 %v821, %v789
        %v886 = vpack.c.b16 %v822, %v790
        %v887 = vpack.c.b16 %v823, %v791
        %v888 = vpack.c.b16 %v824, %v792
        %v889 = vpack.c.b16 %v825, %v793
        %v890 = vpack.c.b16 %v826, %v794
        %v891 = vpack.c.b16 %v827, %v795
        %v892 = vpack.c.b16 %v828, %v796
        %v893 = vpack.c.b16 %v829, %v797
        %v894 = vpack.c.b16 %v830, %v798
        %v895 = vpack.c.b16 %v831, %v799
        %v896 = vpack.c.b16 %v832, %v800
        %v897 = vpack.c.b16 %v833, %v801
        %v898 = vpack.c.b16 %v834, %v802
        %v899 = vpack.c.b16 %v835, %v803
        %vm964 = vcmask 261120
        %v966 = vsel %vm964, %v411, 0
        %968 = vmatprep.subr.bf16.mxu0 0
        %969 = vmatpush1.bf16.msra.mxu0 0
        %970 = vmatprep.subr.bf16.mxu0 0
        %971 = vmatpush1.bf16.msra.mxu0 0
        %972 = vmatprep.subr.bf16.mxu0 0
        %973 = vmatpush1.bf16.msra.mxu0 0
        %974 = vmatprep.subr.bf16.mxu0 0
        %975 = vmatpush1.bf16.msra.mxu0 0
        %976 = vmatprep.subr.bf16.mxu0 0
        %977 = vmatpush1.bf16.msra.mxu0 0
        %978 = vmatprep.subr.bf16.mxu0 0
        %979 = vmatpush1.bf16.msra.mxu0 0
        %980 = vmatprep.subr.bf16.mxu0 %v869
        %981 = vmatpush1.bf16.msra.mxu0 %v868
        %982 = vmatprep.subr.bf16.mxu0 %v837
        %983 = vmatpush1.bf16.msra.mxu0 %v836
        %984 = vmatprep.subr.bf16.mxu0 0
        %985 = vmatpush2.bf16.msra.mxu0 0
        %986 = vmatprep.subr.bf16.mxu0 0
        %987 = vmatpush2.bf16.msra.mxu0 0
        %988 = vmatprep.subr.bf16.mxu0 0
        %989 = vmatpush2.bf16.msra.mxu0 0
        %990 = vmatprep.subr.bf16.mxu0 0
        %991 = vmatpush2.bf16.msra.mxu0 0
        %992 = vmatprep.subr.bf16.mxu0 0
        %993 = vmatpush2.bf16.msra.mxu0 0
        %994 = vmatprep.subr.bf16.mxu0 0
        %995 = vmatpush2.bf16.msra.mxu0 0
        %996 = vmatprep.subr.bf16.mxu0 0
        %997 = vmatpush2.bf16.msra.mxu0 0
        %998 = vmatprep.subr.bf16.mxu0 0
        %999 = vmatpush2.bf16.msra.mxu0 0
        %1000 = vmatprep.mubr.bf16.mxu0 0
        %1001 = vmatmul.mubr.bf16.gmra.mxu0 %v966
        %v1002 = vpop.f32.mrf.mxu0
        %v1003 = vadd.f32 %v487, %v1002
        %v1004 = vpop.f32.mrf.mxu0
        %v1005 = vadd.f32 %v491, %v1004
        %v1006 = vpop.f32.mrf.mxu0
        %v1007 = vpop.f32.mrf.mxu0
        %1008 = vdwg.mxu0
        %1009 = vmatprep.subr.bf16.mxu0 0
        %1010 = vmatpush1.bf16.msra.mxu0 0
        %1011 = vmatprep.subr.bf16.mxu0 0
        %1012 = vmatpush1.bf16.msra.mxu0 0
        %1013 = vmatprep.subr.bf16.mxu0 0
        %1014 = vmatpush1.bf16.msra.mxu0 0
        %1015 = vmatprep.subr.bf16.mxu0 0
        %1016 = vmatpush1.bf16.msra.mxu0 0
        %1017 = vmatprep.subr.bf16.mxu0 0
        %1018 = vmatpush1.bf16.msra.mxu0 0
        %1019 = vmatprep.subr.bf16.mxu0 0
        %1020 = vmatpush1.bf16.msra.mxu0 0
        %1021 = vmatprep.subr.bf16.mxu0 %v871
        %1022 = vmatpush1.bf16.msra.mxu0 %v870
        %1023 = vmatprep.subr.bf16.mxu0 %v839
        %1024 = vmatpush1.bf16.msra.mxu0 %v838
        %1025 = vmatprep.subr.bf16.mxu0 0
        %1026 = vmatpush2.bf16.msra.mxu0 0
        %1027 = vmatprep.subr.bf16.mxu0 0
        %1028 = vmatpush2.bf16.msra.mxu0 0
        %1029 = vmatprep.subr.bf16.mxu0 0
        %1030 = vmatpush2.bf16.msra.mxu0 0
        %1031 = vmatprep.subr.bf16.mxu0 0
        %1032 = vmatpush2.bf16.msra.mxu0 0
        %1033 = vmatprep.subr.bf16.mxu0 0
        %1034 = vmatpush2.bf16.msra.mxu0 0
        %1035 = vmatprep.subr.bf16.mxu0 0
        %1036 = vmatpush2.bf16.msra.mxu0 0
        %1037 = vmatprep.subr.bf16.mxu0 0
        %1038 = vmatpush2.bf16.msra.mxu0 0
        %1039 = vmatprep.subr.bf16.mxu0 0
        %1040 = vmatpush2.bf16.msra.mxu0 0
        %1041 = vmatprep.mubr.bf16.mxu0 0
        %1042 = vmatmul.mubr.bf16.gmra.mxu0 %v966
        %v1043 = vpop.f32.mrf.mxu0
        %v1044 = vadd.f32 %v495, %v1043
        %v1045 = vpop.f32.mrf.mxu0
        %v1046 = vadd.f32 %v499, %v1045
        %v1047 = vpop.f32.mrf.mxu0
        %v1048 = vpop.f32.mrf.mxu0
        %1049 = vdwg.mxu0
        %1050 = vmatprep.subr.bf16.mxu0 0
        %1051 = vmatpush1.bf16.msra.mxu0 0
        %1052 = vmatprep.subr.bf16.mxu0 0
        %1053 = vmatpush1.bf16.msra.mxu0 0
        %1054 = vmatprep.subr.bf16.mxu0 0
        %1055 = vmatpush1.bf16.msra.mxu0 0
        %1056 = vmatprep.subr.bf16.mxu0 0
        %1057 = vmatpush1.bf16.msra.mxu0 0
        %1058 = vmatprep.subr.bf16.mxu0 0
        %1059 = vmatpush1.bf16.msra.mxu0 0
        %1060 = vmatprep.subr.bf16.mxu0 0
        %1061 = vmatpush1.bf16.msra.mxu0 0
        %1062 = vmatprep.subr.bf16.mxu0 %v873
        %1063 = vmatpush1.bf16.msra.mxu0 %v872
        %1064 = vmatprep.subr.bf16.mxu0 %v841
        %1065 = vmatpush1.bf16.msra.mxu0 %v840
        %1066 = vmatprep.subr.bf16.mxu0 0
        %1067 = vmatpush2.bf16.msra.mxu0 0
        %1068 = vmatprep.subr.bf16.mxu0 0
        %1069 = vmatpush2.bf16.msra.mxu0 0
        %1070 = vmatprep.subr.bf16.mxu0 0
        %1071 = vmatpush2.bf16.msra.mxu0 0
        %1072 = vmatprep.subr.bf16.mxu0 0
        %1073 = vmatpush2.bf16.msra.mxu0 0
        %1074 = vmatprep.subr.bf16.mxu0 0
        %1075 = vmatpush2.bf16.msra.mxu0 0
        %1076 = vmatprep.subr.bf16.mxu0 0
        %1077 = vmatpush2.bf16.msra.mxu0 0
        %1078 = vmatprep.subr.bf16.mxu0 0
        %1079 = vmatpush2.bf16.msra.mxu0 0
        %1080 = vmatprep.subr.bf16.mxu0 0
        %1081 = vmatpush2.bf16.msra.mxu0 0
        %1082 = vmatprep.mubr.bf16.mxu0 0
        %1083 = vmatmul.mubr.bf16.gmra.mxu0 %v966
        %v1084 = vpop.f32.mrf.mxu0
        %v1085 = vadd.f32 %v503, %v1084
        %v1086 = vpop.f32.mrf.mxu0
        %v1087 = vadd.f32 %v507, %v1086
        %v1088 = vpop.f32.mrf.mxu0
        %v1089 = vpop.f32.mrf.mxu0
        %1090 = vdwg.mxu0
        %1091 = vmatprep.subr.bf16.mxu0 0
        %1092 = vmatpush1.bf16.msra.mxu0 0
        %1093 = vmatprep.subr.bf16.mxu0 0
        %1094 = vmatpush1.bf16.msra.mxu0 0
        %1095 = vmatprep.subr.bf16.mxu0 0
        %1096 = vmatpush1.bf16.msra.mxu0 0
        %1097 = vmatprep.subr.bf16.mxu0 0
        %1098 = vmatpush1.bf16.msra.mxu0 0
        %1099 = vmatprep.subr.bf16.mxu0 0
        %1100 = vmatpush1.bf16.msra.mxu0 0
        %1101 = vmatprep.subr.bf16.mxu0 0
        %1102 = vmatpush1.bf16.msra.mxu0 0
        %1103 = vmatprep.subr.bf16.mxu0 %v875
        %1104 = vmatpush1.bf16.msra.mxu0 %v874
        %1105 = vmatprep.subr.bf16.mxu0 %v843
        %1106 = vmatpush1.bf16.msra.mxu0 %v842
        %1107 = vmatprep.subr.bf16.mxu0 0
        %1108 = vmatpush2.bf16.msra.mxu0 0
        %1109 = vmatprep.subr.bf16.mxu0 0
        %1110 = vmatpush2.bf16.msra.mxu0 0
        %1111 = vmatprep.subr.bf16.mxu0 0
        %1112 = vmatpush2.bf16.msra.mxu0 0
        %1113 = vmatprep.subr.bf16.mxu0 0
        %1114 = vmatpush2.bf16.msra.mxu0 0
        %1115 = vmatprep.subr.bf16.mxu0 0
        %1116 = vmatpush2.bf16.msra.mxu0 0
        %1117 = vmatprep.subr.bf16.mxu0 0
        %1118 = vmatpush2.bf16.msra.mxu0 0
        %1119 = vmatprep.subr.bf16.mxu0 0
        %1120 = vmatpush2.bf16.msra.mxu0 0
        %1121 = vmatprep.subr.bf16.mxu0 0
        %1122 = vmatpush2.bf16.msra.mxu0 0
        %1123 = vmatprep.mubr.bf16.mxu0 0
        %1124 = vmatmul.mubr.bf16.gmra.mxu0 %v966
        %v1125 = vpop.f32.mrf.mxu0
        %v1126 = vadd.f32 %v511, %v1125
        %v1127 = vpop.f32.mrf.mxu0
        %v1128 = vadd.f32 %v515, %v1127
        %v1129 = vpop.f32.mrf.mxu0
        %v1130 = vpop.f32.mrf.mxu0
        %1131 = vdwg.mxu0
        %1132 = vmatprep.subr.bf16.mxu0 0
        %1133 = vmatpush1.bf16.msra.mxu0 0
        %1134 = vmatprep.subr.bf16.mxu0 0
        %1135 = vmatpush1.bf16.msra.mxu0 0
        %1136 = vmatprep.subr.bf16.mxu0 0
        %1137 = vmatpush1.bf16.msra.mxu0 0
        %1138 = vmatprep.subr.bf16.mxu0 0
        %1139 = vmatpush1.bf16.msra.mxu0 0
        %1140 = vmatprep.subr.bf16.mxu0 0
        %1141 = vmatpush1.bf16.msra.mxu0 0
        %1142 = vmatprep.subr.bf16.mxu0 0
        %1143 = vmatpush1.bf16.msra.mxu0 0
        %1144 = vmatprep.subr.bf16.mxu0 %v877
        %1145 = vmatpush1.bf16.msra.mxu0 %v876
        %1146 = vmatprep.subr.bf16.mxu0 %v845
        %1147 = vmatpush1.bf16.msra.mxu0 %v844
        %1148 = vmatprep.subr.bf16.mxu0 0
        %1149 = vmatpush2.bf16.msra.mxu0 0
        %1150 = vmatprep.subr.bf16.mxu0 0
        %1151 = vmatpush2.bf16.msra.mxu0 0
        %1152 = vmatprep.subr.bf16.mxu0 0
        %1153 = vmatpush2.bf16.msra.mxu0 0
        %1154 = vmatprep.subr.bf16.mxu0 0
        %1155 = vmatpush2.bf16.msra.mxu0 0
        %1156 = vmatprep.subr.bf16.mxu0 0
        %1157 = vmatpush2.bf16.msra.mxu0 0
        %1158 = vmatprep.subr.bf16.mxu0 0
        %1159 = vmatpush2.bf16.msra.mxu0 0
        %1160 = vmatprep.subr.bf16.mxu0 0
        %1161 = vmatpush2.bf16.msra.mxu0 0
        %1162 = vmatprep.subr.bf16.mxu0 0
        %1163 = vmatpush2.bf16.msra.mxu0 0
        %1164 = vmatprep.mubr.bf16.mxu0 0
        %1165 = vmatmul.mubr.bf16.gmra.mxu0 %v966
        %v1166 = vpop.f32.mrf.mxu0
        %v1167 = vadd.f32 %v519, %v1166
        %v1168 = vpop.f32.mrf.mxu0
        %v1169 = vadd.f32 %v523, %v1168
        %v1170 = vpop.f32.mrf.mxu0
        %v1171 = vpop.f32.mrf.mxu0
        %1172 = vdwg.mxu0
        %1173 = vmatprep.subr.bf16.mxu0 0
        %1174 = vmatpush1.bf16.msra.mxu0 0
        %1175 = vmatprep.subr.bf16.mxu0 0
        %1176 = vmatpush1.bf16.msra.mxu0 0
        %1177 = vmatprep.subr.bf16.mxu0 0
        %1178 = vmatpush1.bf16.msra.mxu0 0
        %1179 = vmatprep.subr.bf16.mxu0 0
        %1180 = vmatpush1.bf16.msra.mxu0 0
        %1181 = vmatprep.subr.bf16.mxu0 0
        %1182 = vmatpush1.bf16.msra.mxu0 0
        %1183 = vmatprep.subr.bf16.mxu0 0
        %1184 = vmatpush1.bf16.msra.mxu0 0
        %1185 = vmatprep.subr.bf16.mxu0 %v879
        %1186 = vmatpush1.bf16.msra.mxu0 %v878
        %1187 = vmatprep.subr.bf16.mxu0 %v847
        %1188 = vmatpush1.bf16.msra.mxu0 %v846
        %1189 = vmatprep.subr.bf16.mxu0 0
        %1190 = vmatpush2.bf16.msra.mxu0 0
        %1191 = vmatprep.subr.bf16.mxu0 0
        %1192 = vmatpush2.bf16.msra.mxu0 0
        %1193 = vmatprep.subr.bf16.mxu0 0
        %1194 = vmatpush2.bf16.msra.mxu0 0
        %1195 = vmatprep.subr.bf16.mxu0 0
        %1196 = vmatpush2.bf16.msra.mxu0 0
        %1197 = vmatprep.subr.bf16.mxu0 0
        %1198 = vmatpush2.bf16.msra.mxu0 0
        %1199 = vmatprep.subr.bf16.mxu0 0
        %1200 = vmatpush2.bf16.msra.mxu0 0
        %1201 = vmatprep.subr.bf16.mxu0 0
        %1202 = vmatpush2.bf16.msra.mxu0 0
        %1203 = vmatprep.subr.bf16.mxu0 0
        %1204 = vmatpush2.bf16.msra.mxu0 0
        %1205 = vmatprep.mubr.bf16.mxu0 0
        %1206 = vmatmul.mubr.bf16.gmra.mxu0 %v966
        %v1207 = vpop.f32.mrf.mxu0
        %v1208 = vadd.f32 %v527, %v1207
        %v1209 = vpop.f32.mrf.mxu0
        %v1210 = vadd.f32 %v531, %v1209
        %v1211 = vpop.f32.mrf.mxu0
        %v1212 = vpop.f32.mrf.mxu0
        %1213 = vdwg.mxu0
        %1214 = vmatprep.subr.bf16.mxu0 0
        %1215 = vmatpush1.bf16.msra.mxu0 0
        %1216 = vmatprep.subr.bf16.mxu0 0
        %1217 = vmatpush1.bf16.msra.mxu0 0
        %1218 = vmatprep.subr.bf16.mxu0 0
        %1219 = vmatpush1.bf16.msra.mxu0 0
        %1220 = vmatprep.subr.bf16.mxu0 0
        %1221 = vmatpush1.bf16.msra.mxu0 0
        %1222 = vmatprep.subr.bf16.mxu0 0
        %1223 = vmatpush1.bf16.msra.mxu0 0
        %1224 = vmatprep.subr.bf16.mxu0 0
        %1225 = vmatpush1.bf16.msra.mxu0 0
        %1226 = vmatprep.subr.bf16.mxu0 %v881
        %1227 = vmatpush1.bf16.msra.mxu0 %v880
        %1228 = vmatprep.subr.bf16.mxu0 %v849
        %1229 = vmatpush1.bf16.msra.mxu0 %v848
        %1230 = vmatprep.subr.bf16.mxu0 0
        %1231 = vmatpush2.bf16.msra.mxu0 0
        %1232 = vmatprep.subr.bf16.mxu0 0
        %1233 = vmatpush2.bf16.msra.mxu0 0
        %1234 = vmatprep.subr.bf16.mxu0 0
        %1235 = vmatpush2.bf16.msra.mxu0 0
        %1236 = vmatprep.subr.bf16.mxu0 0
        %1237 = vmatpush2.bf16.msra.mxu0 0
        %1238 = vmatprep.subr.bf16.mxu0 0
        %1239 = vmatpush2.bf16.msra.mxu0 0
        %1240 = vmatprep.subr.bf16.mxu0 0
        %1241 = vmatpush2.bf16.msra.mxu0 0
        %1242 = vmatprep.subr.bf16.mxu0 0
        %1243 = vmatpush2.bf16.msra.mxu0 0
        %1244 = vmatprep.subr.bf16.mxu0 0
        %1245 = vmatpush2.bf16.msra.mxu0 0
        %1246 = vmatprep.mubr.bf16.mxu0 0
        %1247 = vmatmul.mubr.bf16.gmra.mxu0 %v966
        %v1248 = vpop.f32.mrf.mxu0
        %v1249 = vadd.f32 %v535, %v1248
        %v1250 = vpop.f32.mrf.mxu0
        %v1251 = vadd.f32 %v539, %v1250
        %v1252 = vpop.f32.mrf.mxu0
        %v1253 = vpop.f32.mrf.mxu0
        %1254 = vdwg.mxu0
        %1255 = vmatprep.subr.bf16.mxu0 0
        %1256 = vmatpush1.bf16.msra.mxu0 0
        %1257 = vmatprep.subr.bf16.mxu0 0
        %1258 = vmatpush1.bf16.msra.mxu0 0
        %1259 = vmatprep.subr.bf16.mxu0 0
        %1260 = vmatpush1.bf16.msra.mxu0 0
        %1261 = vmatprep.subr.bf16.mxu0 0
        %1262 = vmatpush1.bf16.msra.mxu0 0
        %1263 = vmatprep.subr.bf16.mxu0 0
        %1264 = vmatpush1.bf16.msra.mxu0 0
        %1265 = vmatprep.subr.bf16.mxu0 0
        %1266 = vmatpush1.bf16.msra.mxu0 0
        %1267 = vmatprep.subr.bf16.mxu0 %v883
        %1268 = vmatpush1.bf16.msra.mxu0 %v882
        %1269 = vmatprep.subr.bf16.mxu0 %v851
        %1270 = vmatpush1.bf16.msra.mxu0 %v850
        %1271 = vmatprep.subr.bf16.mxu0 0
        %1272 = vmatpush2.bf16.msra.mxu0 0
        %1273 = vmatprep.subr.bf16.mxu0 0
        %1274 = vmatpush2.bf16.msra.mxu0 0
        %1275 = vmatprep.subr.bf16.mxu0 0
        %1276 = vmatpush2.bf16.msra.mxu0 0
        %1277 = vmatprep.subr.bf16.mxu0 0
        %1278 = vmatpush2.bf16.msra.mxu0 0
        %1279 = vmatprep.subr.bf16.mxu0 0
        %1280 = vmatpush2.bf16.msra.mxu0 0
        %1281 = vmatprep.subr.bf16.mxu0 0
        %1282 = vmatpush2.bf16.msra.mxu0 0
        %1283 = vmatprep.subr.bf16.mxu0 0
        %1284 = vmatpush2.bf16.msra.mxu0 0
        %1285 = vmatprep.subr.bf16.mxu0 0
        %1286 = vmatpush2.bf16.msra.mxu0 0
        %1287 = vmatprep.mubr.bf16.mxu0 0
        %1288 = vmatmul.mubr.bf16.gmra.mxu0 %v966
        %v1289 = vpop.f32.mrf.mxu0
        %v1290 = vadd.f32 %v543, %v1289
        %v1291 = vpop.f32.mrf.mxu0
        %v1292 = vadd.f32 %v547, %v1291
        %v1293 = vpop.f32.mrf.mxu0
        %v1294 = vpop.f32.mrf.mxu0
        %1295 = vdwg.mxu0
        %1296 = vmatprep.subr.bf16.mxu0 0
        %1297 = vmatpush1.bf16.msra.mxu0 0
        %1298 = vmatprep.subr.bf16.mxu0 0
        %1299 = vmatpush1.bf16.msra.mxu0 0
        %1300 = vmatprep.subr.bf16.mxu0 0
        %1301 = vmatpush1.bf16.msra.mxu0 0
        %1302 = vmatprep.subr.bf16.mxu0 0
        %1303 = vmatpush1.bf16.msra.mxu0 0
        %1304 = vmatprep.subr.bf16.mxu0 0
        %1305 = vmatpush1.bf16.msra.mxu0 0
        %1306 = vmatprep.subr.bf16.mxu0 0
        %1307 = vmatpush1.bf16.msra.mxu0 0
        %1308 = vmatprep.subr.bf16.mxu0 %v885
        %1309 = vmatpush1.bf16.msra.mxu0 %v884
        %1310 = vmatprep.subr.bf16.mxu0 %v853
        %1311 = vmatpush1.bf16.msra.mxu0 %v852
        %1312 = vmatprep.subr.bf16.mxu0 0
        %1313 = vmatpush2.bf16.msra.mxu0 0
        %1314 = vmatprep.subr.bf16.mxu0 0
        %1315 = vmatpush2.bf16.msra.mxu0 0
        %1316 = vmatprep.subr.bf16.mxu0 0
        %1317 = vmatpush2.bf16.msra.mxu0 0
        %1318 = vmatprep.subr.bf16.mxu0 0
        %1319 = vmatpush2.bf16.msra.mxu0 0
        %1320 = vmatprep.subr.bf16.mxu0 0
        %1321 = vmatpush2.bf16.msra.mxu0 0
        %1322 = vmatprep.subr.bf16.mxu0 0
        %1323 = vmatpush2.bf16.msra.mxu0 0
        %1324 = vmatprep.subr.bf16.mxu0 0
        %1325 = vmatpush2.bf16.msra.mxu0 0
        %1326 = vmatprep.subr.bf16.mxu0 0
        %1327 = vmatpush2.bf16.msra.mxu0 0
        %1328 = vmatprep.mubr.bf16.mxu0 0
        %1329 = vmatmul.mubr.bf16.gmra.mxu0 %v966
        %v1330 = vpop.f32.mrf.mxu0
        %v1331 = vadd.f32 %v551, %v1330
        %v1332 = vpop.f32.mrf.mxu0
        %v1333 = vadd.f32 %v555, %v1332
        %v1334 = vpop.f32.mrf.mxu0
        %v1335 = vpop.f32.mrf.mxu0
        %1336 = vdwg.mxu0
        %1337 = vmatprep.subr.bf16.mxu0 0
        %1338 = vmatpush1.bf16.msra.mxu0 0
        %1339 = vmatprep.subr.bf16.mxu0 0
        %1340 = vmatpush1.bf16.msra.mxu0 0
        %1341 = vmatprep.subr.bf16.mxu0 0
        %1342 = vmatpush1.bf16.msra.mxu0 0
        %1343 = vmatprep.subr.bf16.mxu0 0
        %1344 = vmatpush1.bf16.msra.mxu0 0
        %1345 = vmatprep.subr.bf16.mxu0 0
        %1346 = vmatpush1.bf16.msra.mxu0 0
        %1347 = vmatprep.subr.bf16.mxu0 0
        %1348 = vmatpush1.bf16.msra.mxu0 0
        %1349 = vmatprep.subr.bf16.mxu0 %v887
        %1350 = vmatpush1.bf16.msra.mxu0 %v886
        %1351 = vmatprep.subr.bf16.mxu0 %v855
        %1352 = vmatpush1.bf16.msra.mxu0 %v854
        %1353 = vmatprep.subr.bf16.mxu0 0
        %1354 = vmatpush2.bf16.msra.mxu0 0
        %1355 = vmatprep.subr.bf16.mxu0 0
        %1356 = vmatpush2.bf16.msra.mxu0 0
        %1357 = vmatprep.subr.bf16.mxu0 0
        %1358 = vmatpush2.bf16.msra.mxu0 0
        %1359 = vmatprep.subr.bf16.mxu0 0
        %1360 = vmatpush2.bf16.msra.mxu0 0
        %1361 = vmatprep.subr.bf16.mxu0 0
        %1362 = vmatpush2.bf16.msra.mxu0 0
        %1363 = vmatprep.subr.bf16.mxu0 0
        %1364 = vmatpush2.bf16.msra.mxu0 0
        %1365 = vmatprep.subr.bf16.mxu0 0
        %1366 = vmatpush2.bf16.msra.mxu0 0
        %1367 = vmatprep.subr.bf16.mxu0 0
        %1368 = vmatpush2.bf16.msra.mxu0 0
        %1369 = vmatprep.mubr.bf16.mxu0 0
        %1370 = vmatmul.mubr.bf16.gmra.mxu0 %v966
        %v1371 = vpop.f32.mrf.mxu0
        %v1372 = vadd.f32 %v559, %v1371
        %v1373 = vpop.f32.mrf.mxu0
        %v1374 = vadd.f32 %v563, %v1373
        %v1375 = vpop.f32.mrf.mxu0
        %v1376 = vpop.f32.mrf.mxu0
        %1377 = vdwg.mxu0
        %1378 = vmatprep.subr.bf16.mxu0 0
        %1379 = vmatpush1.bf16.msra.mxu0 0
        %1380 = vmatprep.subr.bf16.mxu0 0
        %1381 = vmatpush1.bf16.msra.mxu0 0
        %1382 = vmatprep.subr.bf16.mxu0 0
        %1383 = vmatpush1.bf16.msra.mxu0 0
        %1384 = vmatprep.subr.bf16.mxu0 0
        %1385 = vmatpush1.bf16.msra.mxu0 0
        %1386 = vmatprep.subr.bf16.mxu0 0
        %1387 = vmatpush1.bf16.msra.mxu0 0
        %1388 = vmatprep.subr.bf16.mxu0 0
        %1389 = vmatpush1.bf16.msra.mxu0 0
        %1390 = vmatprep.subr.bf16.mxu0 %v889
        %1391 = vmatpush1.bf16.msra.mxu0 %v888
        %1392 = vmatprep.subr.bf16.mxu0 %v857
        %1393 = vmatpush1.bf16.msra.mxu0 %v856
        %1394 = vmatprep.subr.bf16.mxu0 0
        %1395 = vmatpush2.bf16.msra.mxu0 0
        %1396 = vmatprep.subr.bf16.mxu0 0
        %1397 = vmatpush2.bf16.msra.mxu0 0
        %1398 = vmatprep.subr.bf16.mxu0 0
        %1399 = vmatpush2.bf16.msra.mxu0 0
        %1400 = vmatprep.subr.bf16.mxu0 0
        %1401 = vmatpush2.bf16.msra.mxu0 0
        %1402 = vmatprep.subr.bf16.mxu0 0
        %1403 = vmatpush2.bf16.msra.mxu0 0
        %1404 = vmatprep.subr.bf16.mxu0 0
        %1405 = vmatpush2.bf16.msra.mxu0 0
        %1406 = vmatprep.subr.bf16.mxu0 0
        %1407 = vmatpush2.bf16.msra.mxu0 0
        %1408 = vmatprep.subr.bf16.mxu0 0
        %1409 = vmatpush2.bf16.msra.mxu0 0
        %1410 = vmatprep.mubr.bf16.mxu0 0
        %1411 = vmatmul.mubr.bf16.gmra.mxu0 %v966
        %v1412 = vpop.f32.mrf.mxu0
        %v1413 = vadd.f32 %v567, %v1412
        %v1414 = vpop.f32.mrf.mxu0
        %v1415 = vadd.f32 %v571, %v1414
        %v1416 = vpop.f32.mrf.mxu0
        %v1417 = vpop.f32.mrf.mxu0
        %1418 = vdwg.mxu0
        %1419 = vmatprep.subr.bf16.mxu0 0
        %1420 = vmatpush1.bf16.msra.mxu0 0
        %1421 = vmatprep.subr.bf16.mxu0 0
        %1422 = vmatpush1.bf16.msra.mxu0 0
        %1423 = vmatprep.subr.bf16.mxu0 0
        %1424 = vmatpush1.bf16.msra.mxu0 0
        %1425 = vmatprep.subr.bf16.mxu0 0
        %1426 = vmatpush1.bf16.msra.mxu0 0
        %1427 = vmatprep.subr.bf16.mxu0 0
        %1428 = vmatpush1.bf16.msra.mxu0 0
        %1429 = vmatprep.subr.bf16.mxu0 0
        %1430 = vmatpush1.bf16.msra.mxu0 0
        %1431 = vmatprep.subr.bf16.mxu0 %v891
        %1432 = vmatpush1.bf16.msra.mxu0 %v890
        %1433 = vmatprep.subr.bf16.mxu0 %v859
        %1434 = vmatpush1.bf16.msra.mxu0 %v858
        %1435 = vmatprep.subr.bf16.mxu0 0
        %1436 = vmatpush2.bf16.msra.mxu0 0
        %1437 = vmatprep.subr.bf16.mxu0 0
        %1438 = vmatpush2.bf16.msra.mxu0 0
        %1439 = vmatprep.subr.bf16.mxu0 0
        %1440 = vmatpush2.bf16.msra.mxu0 0
        %1441 = vmatprep.subr.bf16.mxu0 0
        %1442 = vmatpush2.bf16.msra.mxu0 0
        %1443 = vmatprep.subr.bf16.mxu0 0
        %1444 = vmatpush2.bf16.msra.mxu0 0
        %1445 = vmatprep.subr.bf16.mxu0 0
        %1446 = vmatpush2.bf16.msra.mxu0 0
        %1447 = vmatprep.subr.bf16.mxu0 0
        %1448 = vmatpush2.bf16.msra.mxu0 0
        %1449 = vmatprep.subr.bf16.mxu0 0
        %1450 = vmatpush2.bf16.msra.mxu0 0
        %1451 = vmatprep.mubr.bf16.mxu0 0
        %1452 = vmatmul.mubr.bf16.gmra.mxu0 %v966
        %v1453 = vpop.f32.mrf.mxu0
        %v1454 = vadd.f32 %v575, %v1453
        %v1455 = vpop.f32.mrf.mxu0
        %v1456 = vadd.f32 %v579, %v1455
        %v1457 = vpop.f32.mrf.mxu0
        %v1458 = vpop.f32.mrf.mxu0
        %1459 = vdwg.mxu0
        %1460 = vmatprep.subr.bf16.mxu0 0
        %1461 = vmatpush1.bf16.msra.mxu0 0
        %1462 = vmatprep.subr.bf16.mxu0 0
        %1463 = vmatpush1.bf16.msra.mxu0 0
        %1464 = vmatprep.subr.bf16.mxu0 0
        %1465 = vmatpush1.bf16.msra.mxu0 0
        %1466 = vmatprep.subr.bf16.mxu0 0
        %1467 = vmatpush1.bf16.msra.mxu0 0
        %1468 = vmatprep.subr.bf16.mxu0 0
        %1469 = vmatpush1.bf16.msra.mxu0 0
        %1470 = vmatprep.subr.bf16.mxu0 0
        %1471 = vmatpush1.bf16.msra.mxu0 0
        %1472 = vmatprep.subr.bf16.mxu0 %v893
        %1473 = vmatpush1.bf16.msra.mxu0 %v892
        %1474 = vmatprep.subr.bf16.mxu0 %v861
        %1475 = vmatpush1.bf16.msra.mxu0 %v860
        %1476 = vmatprep.subr.bf16.mxu0 0
        %1477 = vmatpush2.bf16.msra.mxu0 0
        %1478 = vmatprep.subr.bf16.mxu0 0
        %1479 = vmatpush2.bf16.msra.mxu0 0
        %1480 = vmatprep.subr.bf16.mxu0 0
        %1481 = vmatpush2.bf16.msra.mxu0 0
        %1482 = vmatprep.subr.bf16.mxu0 0
        %1483 = vmatpush2.bf16.msra.mxu0 0
        %1484 = vmatprep.subr.bf16.mxu0 0
        %1485 = vmatpush2.bf16.msra.mxu0 0
        %1486 = vmatprep.subr.bf16.mxu0 0
        %1487 = vmatpush2.bf16.msra.mxu0 0
        %1488 = vmatprep.subr.bf16.mxu0 0
        %1489 = vmatpush2.bf16.msra.mxu0 0
        %1490 = vmatprep.subr.bf16.mxu0 0
        %1491 = vmatpush2.bf16.msra.mxu0 0
        %1492 = vmatprep.mubr.bf16.mxu0 0
        %1493 = vmatmul.mubr.bf16.gmra.mxu0 %v966
        %v1494 = vpop.f32.mrf.mxu0
        %v1495 = vadd.f32 %v583, %v1494
        %v1496 = vpop.f32.mrf.mxu0
        %v1497 = vadd.f32 %v587, %v1496
        %v1498 = vpop.f32.mrf.mxu0
        %v1499 = vpop.f32.mrf.mxu0
        %1500 = vdwg.mxu0
        %1501 = vmatprep.subr.bf16.mxu0 0
        %1502 = vmatpush1.bf16.msra.mxu0 0
        %1503 = vmatprep.subr.bf16.mxu0 0
        %1504 = vmatpush1.bf16.msra.mxu0 0
        %1505 = vmatprep.subr.bf16.mxu0 0
        %1506 = vmatpush1.bf16.msra.mxu0 0
        %1507 = vmatprep.subr.bf16.mxu0 0
        %1508 = vmatpush1.bf16.msra.mxu0 0
        %1509 = vmatprep.subr.bf16.mxu0 0
        %1510 = vmatpush1.bf16.msra.mxu0 0
        %1511 = vmatprep.subr.bf16.mxu0 0
        %1512 = vmatpush1.bf16.msra.mxu0 0
        %1513 = vmatprep.subr.bf16.mxu0 %v895
        %1514 = vmatpush1.bf16.msra.mxu0 %v894
        %1515 = vmatprep.subr.bf16.mxu0 %v863
        %1516 = vmatpush1.bf16.msra.mxu0 %v862
        %1517 = vmatprep.subr.bf16.mxu0 0
        %1518 = vmatpush2.bf16.msra.mxu0 0
        %1519 = vmatprep.subr.bf16.mxu0 0
        %1520 = vmatpush2.bf16.msra.mxu0 0
        %1521 = vmatprep.subr.bf16.mxu0 0
        %1522 = vmatpush2.bf16.msra.mxu0 0
        %1523 = vmatprep.subr.bf16.mxu0 0
        %1524 = vmatpush2.bf16.msra.mxu0 0
        %1525 = vmatprep.subr.bf16.mxu0 0
        %1526 = vmatpush2.bf16.msra.mxu0 0
        %1527 = vmatprep.subr.bf16.mxu0 0
        %1528 = vmatpush2.bf16.msra.mxu0 0
        %1529 = vmatprep.subr.bf16.mxu0 0
        %1530 = vmatpush2.bf16.msra.mxu0 0
        %1531 = vmatprep.subr.bf16.mxu0 0
        %1532 = vmatpush2.bf16.msra.mxu0 0
        %1533 = vmatprep.mubr.bf16.mxu0 0
        %1534 = vmatmul.mubr.bf16.gmra.mxu0 %v966
        %v1535 = vpop.f32.mrf.mxu0
        %v1536 = vadd.f32 %v591, %v1535
        %v1537 = vpop.f32.mrf.mxu0
        %v1538 = vadd.f32 %v595, %v1537
        %v1539 = vpop.f32.mrf.mxu0
        %v1540 = vpop.f32.mrf.mxu0
        %1541 = vdwg.mxu0
        %1542 = vmatprep.subr.bf16.mxu0 0
        %1543 = vmatpush1.bf16.msra.mxu0 0
        %1544 = vmatprep.subr.bf16.mxu0 0
        %1545 = vmatpush1.bf16.msra.mxu0 0
        %1546 = vmatprep.subr.bf16.mxu0 0
        %1547 = vmatpush1.bf16.msra.mxu0 0
        %1548 = vmatprep.subr.bf16.mxu0 0
        %1549 = vmatpush1.bf16.msra.mxu0 0
        %1550 = vmatprep.subr.bf16.mxu0 0
        %1551 = vmatpush1.bf16.msra.mxu0 0
        %1552 = vmatprep.subr.bf16.mxu0 0
        %1553 = vmatpush1.bf16.msra.mxu0 0
        %1554 = vmatprep.subr.bf16.mxu0 %v897
        %1555 = vmatpush1.bf16.msra.mxu0 %v896
        %1556 = vmatprep.subr.bf16.mxu0 %v865
        %1557 = vmatpush1.bf16.msra.mxu0 %v864
        %1558 = vmatprep.subr.bf16.mxu0 0
        %1559 = vmatpush2.bf16.msra.mxu0 0
        %1560 = vmatprep.subr.bf16.mxu0 0
        %1561 = vmatpush2.bf16.msra.mxu0 0
        %1562 = vmatprep.subr.bf16.mxu0 0
        %1563 = vmatpush2.bf16.msra.mxu0 0
        %1564 = vmatprep.subr.bf16.mxu0 0
        %1565 = vmatpush2.bf16.msra.mxu0 0
        %1566 = vmatprep.subr.bf16.mxu0 0
        %1567 = vmatpush2.bf16.msra.mxu0 0
        %1568 = vmatprep.subr.bf16.mxu0 0
        %1569 = vmatpush2.bf16.msra.mxu0 0
        %1570 = vmatprep.subr.bf16.mxu0 0
        %1571 = vmatpush2.bf16.msra.mxu0 0
        %1572 = vmatprep.subr.bf16.mxu0 0
        %1573 = vmatpush2.bf16.msra.mxu0 0
        %1574 = vmatprep.mubr.bf16.mxu0 0
        %1575 = vmatmul.mubr.bf16.gmra.mxu0 %v966
        %v1576 = vpop.f32.mrf.mxu0
        %v1577 = vadd.f32 %v599, %v1576
        %v1578 = vpop.f32.mrf.mxu0
        %v1579 = vadd.f32 %v603, %v1578
        %v1580 = vpop.f32.mrf.mxu0
        %v1581 = vpop.f32.mrf.mxu0
        %1582 = vdwg.mxu0
        %1583 = vmatprep.subr.bf16.mxu0 0
        %1584 = vmatpush1.bf16.msra.mxu0 0
        %1585 = vmatprep.subr.bf16.mxu0 0
        %1586 = vmatpush1.bf16.msra.mxu0 0
        %1587 = vmatprep.subr.bf16.mxu0 0
        %1588 = vmatpush1.bf16.msra.mxu0 0
        %1589 = vmatprep.subr.bf16.mxu0 0
        %1590 = vmatpush1.bf16.msra.mxu0 0
        %1591 = vmatprep.subr.bf16.mxu0 0
        %1592 = vmatpush1.bf16.msra.mxu0 0
        %1593 = vmatprep.subr.bf16.mxu0 0
        %1594 = vmatpush1.bf16.msra.mxu0 0
        %1595 = vmatprep.subr.bf16.mxu0 %v899
        %1596 = vmatpush1.bf16.msra.mxu0 %v898
        %1597 = vmatprep.subr.bf16.mxu0 %v867
        %1598 = vmatpush1.bf16.msra.mxu0 %v866
        %1599 = vmatprep.subr.bf16.mxu0 0
        %1600 = vmatpush2.bf16.msra.mxu0 0
        %1601 = vmatprep.subr.bf16.mxu0 0
        %1602 = vmatpush2.bf16.msra.mxu0 0
        %1603 = vmatprep.subr.bf16.mxu0 0
        %1604 = vmatpush2.bf16.msra.mxu0 0
        %1605 = vmatprep.subr.bf16.mxu0 0
        %1606 = vmatpush2.bf16.msra.mxu0 0
        %1607 = vmatprep.subr.bf16.mxu0 0
        %1608 = vmatpush2.bf16.msra.mxu0 0
        %1609 = vmatprep.subr.bf16.mxu0 0
        %1610 = vmatpush2.bf16.msra.mxu0 0
        %1611 = vmatprep.subr.bf16.mxu0 0
        %1612 = vmatpush2.bf16.msra.mxu0 0
        %1613 = vmatprep.subr.bf16.mxu0 0
        %1614 = vmatpush2.bf16.msra.mxu0 0
        %1615 = vmatprep.mubr.bf16.mxu0 0
        %1616 = vmatmul.mubr.bf16.gmra.mxu0 %v966
        %v1617 = vpop.f32.mrf.mxu0
        %v1618 = vadd.f32 %v607, %v1617
        %v1619 = vpop.f32.mrf.mxu0
        %v1620 = vadd.f32 %v611, %v1619
        %v1621 = vpop.f32.mrf.mxu0
        %v1622 = vpop.f32.mrf.mxu0
        %1623 = vdwg.mxu0
        %vm1624 = vcmp.gt.f32.partialorder %v1003, 0.0
        %vm1625 = vcmp.gt.f32.partialorder %v1005, 0.0
        %vm1626 = vcmp.gt.f32.partialorder %v1044, 0.0
        %vm1627 = vcmp.gt.f32.partialorder %v1046, 0.0
        %vm1628 = vcmp.gt.f32.partialorder %v1085, 0.0
        %vm1629 = vcmp.gt.f32.partialorder %v1087, 0.0
        %vm1630 = vcmp.gt.f32.partialorder %v1126, 0.0
        %vm1631 = vcmp.gt.f32.partialorder %v1128, 0.0
        %vm1632 = vcmp.gt.f32.partialorder %v1167, 0.0
        %vm1633 = vcmp.gt.f32.partialorder %v1169, 0.0
        %vm1634 = vcmp.gt.f32.partialorder %v1208, 0.0
        %vm1635 = vcmp.gt.f32.partialorder %v1210, 0.0
        %vm1636 = vcmp.gt.f32.partialorder %v1249, 0.0
        %vm1637 = vcmp.gt.f32.partialorder %v1251, 0.0
        %vm1638 = vcmp.gt.f32.partialorder %v1290, 0.0
        %vm1639 = vcmp.gt.f32.partialorder %v1292, 0.0
        %vm1640 = vcmp.gt.f32.partialorder %v1331, 0.0
        %vm1641 = vcmp.gt.f32.partialorder %v1333, 0.0
        %vm1642 = vcmp.gt.f32.partialorder %v1372, 0.0
        %vm1643 = vcmp.gt.f32.partialorder %v1374, 0.0
        %vm1644 = vcmp.gt.f32.partialorder %v1413, 0.0
        %vm1645 = vcmp.gt.f32.partialorder %v1415, 0.0
        %vm1646 = vcmp.gt.f32.partialorder %v1454, 0.0
        %vm1647 = vcmp.gt.f32.partialorder %v1456, 0.0
        %vm1648 = vcmp.gt.f32.partialorder %v1495, 0.0
        %vm1649 = vcmp.gt.f32.partialorder %v1497, 0.0
        %vm1650 = vcmp.gt.f32.partialorder %v1536, 0.0
        %vm1651 = vcmp.gt.f32.partialorder %v1538, 0.0
        %vm1652 = vcmp.gt.f32.partialorder %v1577, 0.0
        %vm1653 = vcmp.gt.f32.partialorder %v1579, 0.0
        %vm1654 = vcmp.gt.f32.partialorder %v1618, 0.0
        %vm1655 = vcmp.gt.f32.partialorder %v1620, 0.0
        %v1656 = vmul.f32 %v1003, 0.01
        %v1657 = vmul.f32 %v1005, 0.01
        %v1658 = vmul.f32 %v1044, 0.01
        %v1659 = vmul.f32 %v1046, 0.01
        %v1660 = vmul.f32 %v1085, 0.01
        %v1661 = vmul.f32 %v1087, 0.01
        %v1662 = vmul.f32 %v1126, 0.01
        %v1663 = vmul.f32 %v1128, 0.01
        %v1664 = vmul.f32 %v1167, 0.01
        %v1665 = vmul.f32 %v1169, 0.01
        %v1666 = vmul.f32 %v1208, 0.01
        %v1667 = vmul.f32 %v1210, 0.01
        %v1668 = vmul.f32 %v1249, 0.01
        %v1669 = vmul.f32 %v1251, 0.01
        %v1670 = vmul.f32 %v1290, 0.01
        %v1671 = vmul.f32 %v1292, 0.01
        %v1672 = vmul.f32 %v1331, 0.01
        %v1673 = vmul.f32 %v1333, 0.01
        %v1674 = vmul.f32 %v1372, 0.01
        %v1675 = vmul.f32 %v1374, 0.01
        %v1676 = vmul.f32 %v1413, 0.01
        %v1677 = vmul.f32 %v1415, 0.01
        %v1678 = vmul.f32 %v1454, 0.01
        %v1679 = vmul.f32 %v1456, 0.01
        %v1680 = vmul.f32 %v1495, 0.01
        %v1681 = vmul.f32 %v1497, 0.01
        %v1682 = vmul.f32 %v1536, 0.01
        %v1683 = vmul.f32 %v1538, 0.01
        %v1684 = vmul.f32 %v1577, 0.01
        %v1685 = vmul.f32 %v1579, 0.01
        %v1686 = vmul.f32 %v1618, 0.01
        %v1687 = vmul.f32 %v1620, 0.01
        %v1688 = vsel %vm1624, %v1003, %v1656
        %v1689 = vsel %vm1625, %v1005, %v1657
        %v1690 = vsel %vm1626, %v1044, %v1658
        %v1691 = vsel %vm1627, %v1046, %v1659
        %v1692 = vsel %vm1628, %v1085, %v1660
        %v1693 = vsel %vm1629, %v1087, %v1661
        %v1694 = vsel %vm1630, %v1126, %v1662
        %v1695 = vsel %vm1631, %v1128, %v1663
        %v1696 = vsel %vm1632, %v1167, %v1664
        %v1697 = vsel %vm1633, %v1169, %v1665
        %v1698 = vsel %vm1634, %v1208, %v1666
        %v1699 = vsel %vm1635, %v1210, %v1667
        %v1700 = vsel %vm1636, %v1249, %v1668
        %v1701 = vsel %vm1637, %v1251, %v1669
        %v1702 = vsel %vm1638, %v1290, %v1670
        %v1703 = vsel %vm1639, %v1292, %v1671
        %v1704 = vsel %vm1640, %v1331, %v1672
        %v1705 = vsel %vm1641, %v1333, %v1673
        %v1706 = vsel %vm1642, %v1372, %v1674
        %v1707 = vsel %vm1643, %v1374, %v1675
        %v1708 = vsel %vm1644, %v1413, %v1676
        %v1709 = vsel %vm1645, %v1415, %v1677
        %v1710 = vsel %vm1646, %v1454, %v1678
        %v1711 = vsel %vm1647, %v1456, %v1679
        %v1712 = vsel %vm1648, %v1495, %v1680
        %v1713 = vsel %vm1649, %v1497, %v1681
        %v1714 = vsel %vm1650, %v1536, %v1682
        %v1715 = vsel %vm1651, %v1538, %v1683
        %v1716 = vsel %vm1652, %v1577, %v1684
        %v1717 = vsel %vm1653, %v1579, %v1685
        %v1718 = vsel %vm1654, %v1618, %v1686
        %v1719 = vsel %vm1655, %v1620, %v1687
        %v1720 = vpack.c.bf16 %v1688, %v1688
        %v1721 = vpack.c.bf16 %v1689, %v1689
        %v1722 = vpack.c.bf16 %v1690, %v1690
        %v1723 = vpack.c.bf16 %v1691, %v1691
        %v1724 = vpack.c.bf16 %v1692, %v1692
        %v1725 = vpack.c.bf16 %v1693, %v1693
        %v1726 = vpack.c.bf16 %v1694, %v1694
        %v1727 = vpack.c.bf16 %v1695, %v1695
        %v1728 = vpack.c.bf16 %v1696, %v1696
        %v1729 = vpack.c.bf16 %v1697, %v1697
        %v1730 = vpack.c.bf16 %v1698, %v1698
        %v1731 = vpack.c.bf16 %v1699, %v1699
        %v1732 = vpack.c.bf16 %v1700, %v1700
        %v1733 = vpack.c.bf16 %v1701, %v1701
        %v1734 = vpack.c.bf16 %v1702, %v1702
        %v1735 = vpack.c.bf16 %v1703, %v1703
        %v1736 = vpack.c.bf16 %v1704, %v1704
        %v1737 = vpack.c.bf16 %v1705, %v1705
        %v1738 = vpack.c.bf16 %v1706, %v1706
        %v1739 = vpack.c.bf16 %v1707, %v1707
        %v1740 = vpack.c.bf16 %v1708, %v1708
        %v1741 = vpack.c.bf16 %v1709, %v1709
        %v1742 = vpack.c.bf16 %v1710, %v1710
        %v1743 = vpack.c.bf16 %v1711, %v1711
        %v1744 = vpack.c.bf16 %v1712, %v1712
        %v1745 = vpack.c.bf16 %v1713, %v1713
        %v1746 = vpack.c.bf16 %v1714, %v1714
        %v1747 = vpack.c.bf16 %v1715, %v1715
        %v1748 = vpack.c.bf16 %v1716, %v1716
        %v1749 = vpack.c.bf16 %v1717, %v1717
        %v1750 = vpack.c.bf16 %v1718, %v1718
        %v1751 = vpack.c.bf16 %v1719, %v1719
        %v1752 = vld [vmem:[%s341] sm:$0xff]
        %v1753 = vld [vmem:[%s341 + $0x8] sm:$0xff]
        %v1754 = vld [vmem:[%s341 + $0x10] sm:$0xff]
        %v1755 = vld [vmem:[%s341 + $0x18] sm:$0xff]
        %v1756 = vld [vmem:[%s341 + $0x20] sm:$0xff]
        %v1757 = vld [vmem:[%s341 + $0x28] sm:$0xff]
        %v1758 = vld [vmem:[%s341 + $0x30] sm:$0xff]
        %v1759 = vld [vmem:[%s341 + $0x38] sm:$0xff]
        %v1760 = vld [vmem:[%s341 + $0x40] sm:$0xff]
        %v1761 = vld [vmem:[%s341 + $0x48] sm:$0xff]
        %v1762 = vld [vmem:[%s341 + $0x50] sm:$0xff]
        %v1763 = vld [vmem:[%s341 + $0x58] sm:$0xff]
        %v1764 = vld [vmem:[%s341 + $0x60] sm:$0xff]
        %v1765 = vld [vmem:[%s341 + $0x68] sm:$0xff]
        %v1766 = vld [vmem:[%s341 + $0x70] sm:$0xff]
        %v1767 = vld [vmem:[%s341 + $0x78] sm:$0xff]
        %v1768 = vld [vmem:[%s341 + $0x80] sm:$0xff]
        %v1769 = vld [vmem:[%s341 + $0x88] sm:$0xff]
        %v1770 = vld [vmem:[%s341 + $0x90] sm:$0xff]
        %v1771 = vld [vmem:[%s341 + $0x98] sm:$0xff]
        %v1772 = vld [vmem:[%s341 + $0xa0] sm:$0xff]
        %v1773 = vld [vmem:[%s341 + $0xa8] sm:$0xff]
        %v1774 = vld [vmem:[%s341 + $0xb0] sm:$0xff]
        %v1775 = vld [vmem:[%s341 + $0xb8] sm:$0xff]
        %v1776 = vld [vmem:[%s341 + $0xc0] sm:$0xff]
        %v1777 = vld [vmem:[%s341 + $0xc8] sm:$0xff]
        %v1778 = vld [vmem:[%s341 + $0xd0] sm:$0xff]
        %v1779 = vld [vmem:[%s341 + $0xd8] sm:$0xff]
        %v1780 = vld [vmem:[%s341 + $0xe0] sm:$0xff]
        %v1781 = vld [vmem:[%s341 + $0xe8] sm:$0xff]
        %v1782 = vld [vmem:[%s341 + $0xf0] sm:$0xff]
        %v1783 = vld [vmem:[%s341 + $0xf8] sm:$0xff]
        %v1784 = vld [vmem:[%s341 + $0x100] sm:$0xff]
        %v1785 = vld [vmem:[%s341 + $0x108] sm:$0xff]
        %v1786 = vld [vmem:[%s341 + $0x110] sm:$0xff]
        %v1787 = vld [vmem:[%s341 + $0x118] sm:$0xff]
        %v1788 = vld [vmem:[%s341 + $0x120] sm:$0xff]
        %v1789 = vld [vmem:[%s341 + $0x128] sm:$0xff]
        %v1790 = vld [vmem:[%s341 + $0x130] sm:$0xff]
        %v1791 = vld [vmem:[%s341 + $0x138] sm:$0xff]
        %v1792 = vld [vmem:[%s341 + $0x140] sm:$0xff]
        %v1793 = vld [vmem:[%s341 + $0x148] sm:$0xff]
        %v1794 = vld [vmem:[%s341 + $0x150] sm:$0xff]
        %v1795 = vld [vmem:[%s341 + $0x158] sm:$0xff]
        %v1796 = vld [vmem:[%s341 + $0x160] sm:$0xff]
        %v1797 = vld [vmem:[%s341 + $0x168] sm:$0xff]
        %v1798 = vld [vmem:[%s341 + $0x170] sm:$0xff]
        %v1799 = vld [vmem:[%s341 + $0x178] sm:$0xff]
        %v1800 = vld [vmem:[%s341 + $0x180] sm:$0xff]
        %v1801 = vld [vmem:[%s341 + $0x188] sm:$0xff]
        %v1802 = vld [vmem:[%s341 + $0x190] sm:$0xff]
        %v1803 = vld [vmem:[%s341 + $0x198] sm:$0xff]
        %v1804 = vld [vmem:[%s341 + $0x1a0] sm:$0xff]
        %v1805 = vld [vmem:[%s341 + $0x1a8] sm:$0xff]
        %v1806 = vld [vmem:[%s341 + $0x1b0] sm:$0xff]
        %v1807 = vld [vmem:[%s341 + $0x1b8] sm:$0xff]
        %v1808 = vld [vmem:[%s341 + $0x1c0] sm:$0xff]
        %v1809 = vld [vmem:[%s341 + $0x1c8] sm:$0xff]
        %v1810 = vld [vmem:[%s341 + $0x1d0] sm:$0xff]
        %v1811 = vld [vmem:[%s341 + $0x1d8] sm:$0xff]
        %v1812 = vld [vmem:[%s341 + $0x1e0] sm:$0xff]
        %v1813 = vld [vmem:[%s341 + $0x1e8] sm:$0xff]
        %v1814 = vld [vmem:[%s341 + $0x1f0] sm:$0xff]
        %v1815 = vld [vmem:[%s341 + $0x1f8] sm:$0xff]
        %v1816 = vld [vmem:[%s341 + $0x200] sm:$0xff]
        %v1817 = vld [vmem:[%s341 + $0x208] sm:$0xff]
        %v1818 = vld [vmem:[%s341 + $0x210] sm:$0xff]
        %v1819 = vld [vmem:[%s341 + $0x218] sm:$0xff]
        %v1820 = vld [vmem:[%s341 + $0x220] sm:$0xff]
        %v1821 = vld [vmem:[%s341 + $0x228] sm:$0xff]
        %v1822 = vld [vmem:[%s341 + $0x230] sm:$0xff]
        %v1823 = vld [vmem:[%s341 + $0x238] sm:$0xff]
        %v1824 = vld [vmem:[%s341 + $0x240] sm:$0xff]
        %v1825 = vld [vmem:[%s341 + $0x248] sm:$0xff]
        %v1826 = vld [vmem:[%s341 + $0x250] sm:$0xff]
        %v1827 = vld [vmem:[%s341 + $0x258] sm:$0xff]
        %v1828 = vld [vmem:[%s341 + $0x260] sm:$0xff]
        %v1829 = vld [vmem:[%s341 + $0x268] sm:$0xff]
        %v1830 = vld [vmem:[%s341 + $0x270] sm:$0xff]
        %v1831 = vld [vmem:[%s341 + $0x278] sm:$0xff]
        %v1832 = vld [vmem:[%s341 + $0x280] sm:$0xff]
        %v1833 = vld [vmem:[%s341 + $0x288] sm:$0xff]
        %v1834 = vld [vmem:[%s341 + $0x290] sm:$0xff]
        %v1835 = vld [vmem:[%s341 + $0x298] sm:$0xff]
        %v1836 = vld [vmem:[%s341 + $0x2a0] sm:$0xff]
        %v1837 = vld [vmem:[%s341 + $0x2a8] sm:$0xff]
        %v1838 = vld [vmem:[%s341 + $0x2b0] sm:$0xff]
        %v1839 = vld [vmem:[%s341 + $0x2b8] sm:$0xff]
        %v1840 = vld [vmem:[%s341 + $0x2c0] sm:$0xff]
        %v1841 = vld [vmem:[%s341 + $0x2c8] sm:$0xff]
        %v1842 = vld [vmem:[%s341 + $0x2d0] sm:$0xff]
        %v1843 = vld [vmem:[%s341 + $0x2d8] sm:$0xff]
        %v1844 = vld [vmem:[%s341 + $0x2e0] sm:$0xff]
        %v1845 = vld [vmem:[%s341 + $0x2e8] sm:$0xff]
        %v1846 = vld [vmem:[%s341 + $0x2f0] sm:$0xff]
        %v1847 = vld [vmem:[%s341 + $0x2f8] sm:$0xff]
        %v1848 = vld [vmem:[%s341 + $0x300] sm:$0xff]
        %v1849 = vld [vmem:[%s341 + $0x308] sm:$0xff]
        %v1850 = vld [vmem:[%s341 + $0x310] sm:$0xff]
        %v1851 = vld [vmem:[%s341 + $0x318] sm:$0xff]
        %v1852 = vld [vmem:[%s341 + $0x320] sm:$0xff]
        %v1853 = vld [vmem:[%s341 + $0x328] sm:$0xff]
        %v1854 = vld [vmem:[%s341 + $0x330] sm:$0xff]
        %v1855 = vld [vmem:[%s341 + $0x338] sm:$0xff]
        %v1856 = vld [vmem:[%s341 + $0x340] sm:$0xff]
        %v1857 = vld [vmem:[%s341 + $0x348] sm:$0xff]
        %v1858 = vld [vmem:[%s341 + $0x350] sm:$0xff]
        %v1859 = vld [vmem:[%s341 + $0x358] sm:$0xff]
        %v1860 = vld [vmem:[%s341 + $0x360] sm:$0xff]
        %v1861 = vld [vmem:[%s341 + $0x368] sm:$0xff]
        %v1862 = vld [vmem:[%s341 + $0x370] sm:$0xff]
        %v1863 = vld [vmem:[%s341 + $0x378] sm:$0xff]
        %v1864 = vld [vmem:[%s341 + $0x380] sm:$0xff]
        %v1865 = vld [vmem:[%s341 + $0x388] sm:$0xff]
        %v1866 = vld [vmem:[%s341 + $0x390] sm:$0xff]
        %v1867 = vld [vmem:[%s341 + $0x398] sm:$0xff]
        %v1868 = vld [vmem:[%s341 + $0x3a0] sm:$0xff]
        %v1869 = vld [vmem:[%s341 + $0x3a8] sm:$0xff]
        %v1870 = vld [vmem:[%s341 + $0x3b0] sm:$0xff]
        %v1871 = vld [vmem:[%s341 + $0x3b8] sm:$0xff]
        %v1872 = vld [vmem:[%s341 + $0x3c0] sm:$0xff]
        %v1873 = vld [vmem:[%s341 + $0x3c8] sm:$0xff]
        %v1874 = vld [vmem:[%s341 + $0x3d0] sm:$0xff]
        %v1875 = vld [vmem:[%s341 + $0x3d8] sm:$0xff]
        %v1876 = vld [vmem:[%s341 + $0x3e0] sm:$0xff]
        %v1877 = vld [vmem:[%s341 + $0x3e8] sm:$0xff]
        %v1878 = vld [vmem:[%s341 + $0x3f0] sm:$0xff]
        %v1879 = vld [vmem:[%s341 + $0x3f8] sm:$0xff]
        %v1880 = vld [vmem:[%s341 + $0x400] sm:$0xff]
        %v1881 = vld [vmem:[%s341 + $0x408] sm:$0xff]
        %v1882 = vld [vmem:[%s341 + $0x410] sm:$0xff]
        %v1883 = vld [vmem:[%s341 + $0x418] sm:$0xff]
        %v1884 = vld [vmem:[%s341 + $0x420] sm:$0xff]
        %v1885 = vld [vmem:[%s341 + $0x428] sm:$0xff]
        %v1886 = vld [vmem:[%s341 + $0x430] sm:$0xff]
        %v1887 = vld [vmem:[%s341 + $0x438] sm:$0xff]
        %v1888 = vld [vmem:[%s341 + $0x440] sm:$0xff]
        %v1889 = vld [vmem:[%s341 + $0x448] sm:$0xff]
        %v1890 = vld [vmem:[%s341 + $0x450] sm:$0xff]
        %v1891 = vld [vmem:[%s341 + $0x458] sm:$0xff]
        %v1892 = vld [vmem:[%s341 + $0x460] sm:$0xff]
        %v1893 = vld [vmem:[%s341 + $0x468] sm:$0xff]
        %v1894 = vld [vmem:[%s341 + $0x470] sm:$0xff]
        %v1895 = vld [vmem:[%s341 + $0x478] sm:$0xff]
        %v1896 = vld [vmem:[%s341 + $0x480] sm:$0xff]
        %v1897 = vld [vmem:[%s341 + $0x488] sm:$0xff]
        %v1898 = vld [vmem:[%s341 + $0x490] sm:$0xff]
        %v1899 = vld [vmem:[%s341 + $0x498] sm:$0xff]
        %v1900 = vld [vmem:[%s341 + $0x4a0] sm:$0xff]
        %v1901 = vld [vmem:[%s341 + $0x4a8] sm:$0xff]
        %v1902 = vld [vmem:[%s341 + $0x4b0] sm:$0xff]
        %v1903 = vld [vmem:[%s341 + $0x4b8] sm:$0xff]
        %v1904 = vld [vmem:[%s341 + $0x4c0] sm:$0xff]
        %v1905 = vld [vmem:[%s341 + $0x4c8] sm:$0xff]
        %v1906 = vld [vmem:[%s341 + $0x4d0] sm:$0xff]
        %v1907 = vld [vmem:[%s341 + $0x4d8] sm:$0xff]
        %v1908 = vld [vmem:[%s341 + $0x4e0] sm:$0xff]
        %v1909 = vld [vmem:[%s341 + $0x4e8] sm:$0xff]
        %v1910 = vld [vmem:[%s341 + $0x4f0] sm:$0xff]
        %v1911 = vld [vmem:[%s341 + $0x4f8] sm:$0xff]
        %v1912 = vld [vmem:[%s341 + $0x500] sm:$0xff]
        %v1913 = vld [vmem:[%s341 + $0x508] sm:$0xff]
        %v1914 = vld [vmem:[%s341 + $0x510] sm:$0xff]
        %v1915 = vld [vmem:[%s341 + $0x518] sm:$0xff]
        %v1916 = vld [vmem:[%s341 + $0x520] sm:$0xff]
        %v1917 = vld [vmem:[%s341 + $0x528] sm:$0xff]
        %v1918 = vld [vmem:[%s341 + $0x530] sm:$0xff]
        %v1919 = vld [vmem:[%s341 + $0x538] sm:$0xff]
        %v1920 = vld [vmem:[%s341 + $0x540] sm:$0xff]
        %v1921 = vld [vmem:[%s341 + $0x548] sm:$0xff]
        %v1922 = vld [vmem:[%s341 + $0x550] sm:$0xff]
        %v1923 = vld [vmem:[%s341 + $0x558] sm:$0xff]
        %v1924 = vld [vmem:[%s341 + $0x560] sm:$0xff]
        %v1925 = vld [vmem:[%s341 + $0x568] sm:$0xff]
        %v1926 = vld [vmem:[%s341 + $0x570] sm:$0xff]
        %v1927 = vld [vmem:[%s341 + $0x578] sm:$0xff]
        %v1928 = vld [vmem:[%s341 + $0x580] sm:$0xff]
        %v1929 = vld [vmem:[%s341 + $0x588] sm:$0xff]
        %v1930 = vld [vmem:[%s341 + $0x590] sm:$0xff]
        %v1931 = vld [vmem:[%s341 + $0x598] sm:$0xff]
        %v1932 = vld [vmem:[%s341 + $0x5a0] sm:$0xff]
        %v1933 = vld [vmem:[%s341 + $0x5a8] sm:$0xff]
        %v1934 = vld [vmem:[%s341 + $0x5b0] sm:$0xff]
        %v1935 = vld [vmem:[%s341 + $0x5b8] sm:$0xff]
        %v1936 = vld [vmem:[%s341 + $0x5c0] sm:$0xff]
        %v1937 = vld [vmem:[%s341 + $0x5c8] sm:$0xff]
        %v1938 = vld [vmem:[%s341 + $0x5d0] sm:$0xff]
        %v1939 = vld [vmem:[%s341 + $0x5d8] sm:$0xff]
        %v1940 = vld [vmem:[%s341 + $0x5e0] sm:$0xff]
        %v1941 = vld [vmem:[%s341 + $0x5e8] sm:$0xff]
        %v1942 = vld [vmem:[%s341 + $0x5f0] sm:$0xff]
        %v1943 = vld [vmem:[%s341 + $0x5f8] sm:$0xff]
        %v1944 = vld [vmem:[%s341 + $0x600] sm:$0xff]
        %v1945 = vld [vmem:[%s341 + $0x608] sm:$0xff]
        %v1946 = vld [vmem:[%s341 + $0x610] sm:$0xff]
        %v1947 = vld [vmem:[%s341 + $0x618] sm:$0xff]
        %v1948 = vld [vmem:[%s341 + $0x620] sm:$0xff]
        %v1949 = vld [vmem:[%s341 + $0x628] sm:$0xff]
        %v1950 = vld [vmem:[%s341 + $0x630] sm:$0xff]
        %v1951 = vld [vmem:[%s341 + $0x638] sm:$0xff]
        %v1952 = vld [vmem:[%s341 + $0x640] sm:$0xff]
        %v1953 = vld [vmem:[%s341 + $0x648] sm:$0xff]
        %v1954 = vld [vmem:[%s341 + $0x650] sm:$0xff]
        %v1955 = vld [vmem:[%s341 + $0x658] sm:$0xff]
        %v1956 = vld [vmem:[%s341 + $0x660] sm:$0xff]
        %v1957 = vld [vmem:[%s341 + $0x668] sm:$0xff]
        %v1958 = vld [vmem:[%s341 + $0x670] sm:$0xff]
        %v1959 = vld [vmem:[%s341 + $0x678] sm:$0xff]
        %v1960 = vld [vmem:[%s341 + $0x680] sm:$0xff]
        %v1961 = vld [vmem:[%s341 + $0x688] sm:$0xff]
        %v1962 = vld [vmem:[%s341 + $0x690] sm:$0xff]
        %v1963 = vld [vmem:[%s341 + $0x698] sm:$0xff]
        %v1964 = vld [vmem:[%s341 + $0x6a0] sm:$0xff]
        %v1965 = vld [vmem:[%s341 + $0x6a8] sm:$0xff]
        %v1966 = vld [vmem:[%s341 + $0x6b0] sm:$0xff]
        %v1967 = vld [vmem:[%s341 + $0x6b8] sm:$0xff]
        %v1968 = vld [vmem:[%s341 + $0x6c0] sm:$0xff]
        %v1969 = vld [vmem:[%s341 + $0x6c8] sm:$0xff]
        %v1970 = vld [vmem:[%s341 + $0x6d0] sm:$0xff]
        %v1971 = vld [vmem:[%s341 + $0x6d8] sm:$0xff]
        %v1972 = vld [vmem:[%s341 + $0x6e0] sm:$0xff]
        %v1973 = vld [vmem:[%s341 + $0x6e8] sm:$0xff]
        %v1974 = vld [vmem:[%s341 + $0x6f0] sm:$0xff]
        %v1975 = vld [vmem:[%s341 + $0x6f8] sm:$0xff]
        %v1976 = vld [vmem:[%s341 + $0x700] sm:$0xff]
        %v1977 = vld [vmem:[%s341 + $0x708] sm:$0xff]
        %v1978 = vld [vmem:[%s341 + $0x710] sm:$0xff]
        %v1979 = vld [vmem:[%s341 + $0x718] sm:$0xff]
        %v1980 = vld [vmem:[%s341 + $0x720] sm:$0xff]
        %v1981 = vld [vmem:[%s341 + $0x728] sm:$0xff]
        %v1982 = vld [vmem:[%s341 + $0x730] sm:$0xff]
        %v1983 = vld [vmem:[%s341 + $0x738] sm:$0xff]
        %v1984 = vld [vmem:[%s341 + $0x740] sm:$0xff]
        %v1985 = vld [vmem:[%s341 + $0x748] sm:$0xff]
        %v1986 = vld [vmem:[%s341 + $0x750] sm:$0xff]
        %v1987 = vld [vmem:[%s341 + $0x758] sm:$0xff]
        %v1988 = vld [vmem:[%s341 + $0x760] sm:$0xff]
        %v1989 = vld [vmem:[%s341 + $0x768] sm:$0xff]
        %v1990 = vld [vmem:[%s341 + $0x770] sm:$0xff]
        %v1991 = vld [vmem:[%s341 + $0x778] sm:$0xff]
        %v1992 = vld [vmem:[%s341 + $0x780] sm:$0xff]
        %v1993 = vld [vmem:[%s341 + $0x788] sm:$0xff]
        %v1994 = vld [vmem:[%s341 + $0x790] sm:$0xff]
        %v1995 = vld [vmem:[%s341 + $0x798] sm:$0xff]
        %v1996 = vld [vmem:[%s341 + $0x7a0] sm:$0xff]
        %v1997 = vld [vmem:[%s341 + $0x7a8] sm:$0xff]
        %v1998 = vld [vmem:[%s341 + $0x7b0] sm:$0xff]
        %v1999 = vld [vmem:[%s341 + $0x7b8] sm:$0xff]
        %v2000 = vld [vmem:[%s341 + $0x7c0] sm:$0xff]
        %v2001 = vld [vmem:[%s341 + $0x7c8] sm:$0xff]
        %v2002 = vld [vmem:[%s341 + $0x7d0] sm:$0xff]
        %v2003 = vld [vmem:[%s341 + $0x7d8] sm:$0xff]
        %v2004 = vld [vmem:[%s341 + $0x7e0] sm:$0xff]
        %v2005 = vld [vmem:[%s341 + $0x7e8] sm:$0xff]
        %v2006 = vld [vmem:[%s341 + $0x7f0] sm:$0xff]
        %v2007 = vld [vmem:[%s341 + $0x7f8] sm:$0xff]
        %v2008 = vld [vmem:[%s341 + $0x800] sm:$0xff]
        %v2009 = vld [vmem:[%s341 + $0x808] sm:$0xff]
        %v2010 = vld [vmem:[%s341 + $0x810] sm:$0xff]
        %v2011 = vld [vmem:[%s341 + $0x818] sm:$0xff]
        %v2012 = vld [vmem:[%s341 + $0x820] sm:$0xff]
        %v2013 = vld [vmem:[%s341 + $0x828] sm:$0xff]
        %v2014 = vld [vmem:[%s341 + $0x830] sm:$0xff]
        %v2015 = vld [vmem:[%s341 + $0x838] sm:$0xff]
        %v2016 = vld [vmem:[%s341 + $0x840] sm:$0xff]
        %v2017 = vld [vmem:[%s341 + $0x848] sm:$0xff]
        %v2018 = vld [vmem:[%s341 + $0x850] sm:$0xff]
        %v2019 = vld [vmem:[%s341 + $0x858] sm:$0xff]
        %v2020 = vld [vmem:[%s341 + $0x860] sm:$0xff]
        %v2021 = vld [vmem:[%s341 + $0x868] sm:$0xff]
        %v2022 = vld [vmem:[%s341 + $0x870] sm:$0xff]
        %v2023 = vld [vmem:[%s341 + $0x878] sm:$0xff]
        %v2024 = vld [vmem:[%s341 + $0x880] sm:$0xff]
        %v2025 = vld [vmem:[%s341 + $0x888] sm:$0xff]
        %v2026 = vld [vmem:[%s341 + $0x890] sm:$0xff]
        %v2027 = vld [vmem:[%s341 + $0x898] sm:$0xff]
        %v2028 = vld [vmem:[%s341 + $0x8a0] sm:$0xff]
        %v2029 = vld [vmem:[%s341 + $0x8a8] sm:$0xff]
        %v2030 = vld [vmem:[%s341 + $0x8b0] sm:$0xff]
        %v2031 = vld [vmem:[%s341 + $0x8b8] sm:$0xff]
        %v2032 = vld [vmem:[%s341 + $0x8c0] sm:$0xff]
        %v2033 = vld [vmem:[%s341 + $0x8c8] sm:$0xff]
        %v2034 = vld [vmem:[%s341 + $0x8d0] sm:$0xff]
        %v2035 = vld [vmem:[%s341 + $0x8d8] sm:$0xff]
        %v2036 = vld [vmem:[%s341 + $0x8e0] sm:$0xff]
        %v2037 = vld [vmem:[%s341 + $0x8e8] sm:$0xff]
        %v2038 = vld [vmem:[%s341 + $0x8f0] sm:$0xff]
        %v2039 = vld [vmem:[%s341 + $0x8f8] sm:$0xff]
        %v2040 = vld [vmem:[%s341 + $0x900] sm:$0xff]
        %v2041 = vld [vmem:[%s341 + $0x908] sm:$0xff]
        %v2042 = vld [vmem:[%s341 + $0x910] sm:$0xff]
        %v2043 = vld [vmem:[%s341 + $0x918] sm:$0xff]
        %v2044 = vld [vmem:[%s341 + $0x920] sm:$0xff]
        %v2045 = vld [vmem:[%s341 + $0x928] sm:$0xff]
        %v2046 = vld [vmem:[%s341 + $0x930] sm:$0xff]
        %v2047 = vld [vmem:[%s341 + $0x938] sm:$0xff]
        %v2048 = vld [vmem:[%s341 + $0x940] sm:$0xff]
        %v2049 = vld [vmem:[%s341 + $0x948] sm:$0xff]
        %v2050 = vld [vmem:[%s341 + $0x950] sm:$0xff]
        %v2051 = vld [vmem:[%s341 + $0x958] sm:$0xff]
        %v2052 = vld [vmem:[%s341 + $0x960] sm:$0xff]
        %v2053 = vld [vmem:[%s341 + $0x968] sm:$0xff]
        %v2054 = vld [vmem:[%s341 + $0x970] sm:$0xff]
        %v2055 = vld [vmem:[%s341 + $0x978] sm:$0xff]
        %v2056 = vld [vmem:[%s341 + $0x980] sm:$0xff]
        %v2057 = vld [vmem:[%s341 + $0x988] sm:$0xff]
        %v2058 = vld [vmem:[%s341 + $0x990] sm:$0xff]
        %v2059 = vld [vmem:[%s341 + $0x998] sm:$0xff]
        %v2060 = vld [vmem:[%s341 + $0x9a0] sm:$0xff]
        %v2061 = vld [vmem:[%s341 + $0x9a8] sm:$0xff]
        %v2062 = vld [vmem:[%s341 + $0x9b0] sm:$0xff]
        %v2063 = vld [vmem:[%s341 + $0x9b8] sm:$0xff]
        %v2064 = vld [vmem:[%s341 + $0x9c0] sm:$0xff]
        %v2065 = vld [vmem:[%s341 + $0x9c8] sm:$0xff]
        %v2066 = vld [vmem:[%s341 + $0x9d0] sm:$0xff]
        %v2067 = vld [vmem:[%s341 + $0x9d8] sm:$0xff]
        %v2068 = vld [vmem:[%s341 + $0x9e0] sm:$0xff]
        %v2069 = vld [vmem:[%s341 + $0x9e8] sm:$0xff]
        %v2070 = vld [vmem:[%s341 + $0x9f0] sm:$0xff]
        %v2071 = vld [vmem:[%s341 + $0x9f8] sm:$0xff]
        %v2072 = vld [vmem:[%s341 + $0xa00] sm:$0xff]
        %v2073 = vld [vmem:[%s341 + $0xa08] sm:$0xff]
        %v2074 = vld [vmem:[%s341 + $0xa10] sm:$0xff]
        %v2075 = vld [vmem:[%s341 + $0xa18] sm:$0xff]
        %v2076 = vld [vmem:[%s341 + $0xa20] sm:$0xff]
        %v2077 = vld [vmem:[%s341 + $0xa28] sm:$0xff]
        %v2078 = vld [vmem:[%s341 + $0xa30] sm:$0xff]
        %v2079 = vld [vmem:[%s341 + $0xa38] sm:$0xff]
        %v2080 = vld [vmem:[%s341 + $0xa40] sm:$0xff]
        %v2081 = vld [vmem:[%s341 + $0xa48] sm:$0xff]
        %v2082 = vld [vmem:[%s341 + $0xa50] sm:$0xff]
        %v2083 = vld [vmem:[%s341 + $0xa58] sm:$0xff]
        %v2084 = vld [vmem:[%s341 + $0xa60] sm:$0xff]
        %v2085 = vld [vmem:[%s341 + $0xa68] sm:$0xff]
        %v2086 = vld [vmem:[%s341 + $0xa70] sm:$0xff]
        %v2087 = vld [vmem:[%s341 + $0xa78] sm:$0xff]
        %v2088 = vld [vmem:[%s341 + $0xa80] sm:$0xff]
        %v2089 = vld [vmem:[%s341 + $0xa88] sm:$0xff]
        %v2090 = vld [vmem:[%s341 + $0xa90] sm:$0xff]
        %v2091 = vld [vmem:[%s341 + $0xa98] sm:$0xff]
        %v2092 = vld [vmem:[%s341 + $0xaa0] sm:$0xff]
        %v2093 = vld [vmem:[%s341 + $0xaa8] sm:$0xff]
        %v2094 = vld [vmem:[%s341 + $0xab0] sm:$0xff]
        %v2095 = vld [vmem:[%s341 + $0xab8] sm:$0xff]
        %v2096 = vld [vmem:[%s341 + $0xac0] sm:$0xff]
        %v2097 = vld [vmem:[%s341 + $0xac8] sm:$0xff]
        %v2098 = vld [vmem:[%s341 + $0xad0] sm:$0xff]
        %v2099 = vld [vmem:[%s341 + $0xad8] sm:$0xff]
        %v2100 = vld [vmem:[%s341 + $0xae0] sm:$0xff]
        %v2101 = vld [vmem:[%s341 + $0xae8] sm:$0xff]
        %v2102 = vld [vmem:[%s341 + $0xaf0] sm:$0xff]
        %v2103 = vld [vmem:[%s341 + $0xaf8] sm:$0xff]
        %v2104 = vld [vmem:[%s341 + $0xb00] sm:$0xff]
        %v2105 = vld [vmem:[%s341 + $0xb08] sm:$0xff]
        %v2106 = vld [vmem:[%s341 + $0xb10] sm:$0xff]
        %v2107 = vld [vmem:[%s341 + $0xb18] sm:$0xff]
        %v2108 = vld [vmem:[%s341 + $0xb20] sm:$0xff]
        %v2109 = vld [vmem:[%s341 + $0xb28] sm:$0xff]
        %v2110 = vld [vmem:[%s341 + $0xb30] sm:$0xff]
        %v2111 = vld [vmem:[%s341 + $0xb38] sm:$0xff]
        %v2112 = vld [vmem:[%s341 + $0xb40] sm:$0xff]
        %v2113 = vld [vmem:[%s341 + $0xb48] sm:$0xff]
        %v2114 = vld [vmem:[%s341 + $0xb50] sm:$0xff]
        %v2115 = vld [vmem:[%s341 + $0xb58] sm:$0xff]
        %v2116 = vld [vmem:[%s341 + $0xb60] sm:$0xff]
        %v2117 = vld [vmem:[%s341 + $0xb68] sm:$0xff]
        %v2118 = vld [vmem:[%s341 + $0xb70] sm:$0xff]
        %v2119 = vld [vmem:[%s341 + $0xb78] sm:$0xff]
        %v2120 = vld [vmem:[%s341 + $0xb80] sm:$0xff]
        %v2121 = vld [vmem:[%s341 + $0xb88] sm:$0xff]
        %v2122 = vld [vmem:[%s341 + $0xb90] sm:$0xff]
        %v2123 = vld [vmem:[%s341 + $0xb98] sm:$0xff]
        %v2124 = vld [vmem:[%s341 + $0xba0] sm:$0xff]
        %v2125 = vld [vmem:[%s341 + $0xba8] sm:$0xff]
        %v2126 = vld [vmem:[%s341 + $0xbb0] sm:$0xff]
        %v2127 = vld [vmem:[%s341 + $0xbb8] sm:$0xff]
        %v2128 = vld [vmem:[%s341 + $0xbc0] sm:$0xff]
        %v2129 = vld [vmem:[%s341 + $0xbc8] sm:$0xff]
        %v2130 = vld [vmem:[%s341 + $0xbd0] sm:$0xff]
        %v2131 = vld [vmem:[%s341 + $0xbd8] sm:$0xff]
        %v2132 = vld [vmem:[%s341 + $0xbe0] sm:$0xff]
        %v2133 = vld [vmem:[%s341 + $0xbe8] sm:$0xff]
        %v2134 = vld [vmem:[%s341 + $0xbf0] sm:$0xff]
        %v2135 = vld [vmem:[%s341 + $0xbf8] sm:$0xff]
        %v2136 = vld [vmem:[%s341 + $0xc00] sm:$0xff]
        %v2137 = vld [vmem:[%s341 + $0xc08] sm:$0xff]
        %v2138 = vld [vmem:[%s341 + $0xc10] sm:$0xff]
        %v2139 = vld [vmem:[%s341 + $0xc18] sm:$0xff]
        %v2140 = vld [vmem:[%s341 + $0xc20] sm:$0xff]
        %v2141 = vld [vmem:[%s341 + $0xc28] sm:$0xff]
        %v2142 = vld [vmem:[%s341 + $0xc30] sm:$0xff]
        %v2143 = vld [vmem:[%s341 + $0xc38] sm:$0xff]
        %v2144 = vld [vmem:[%s341 + $0xc40] sm:$0xff]
        %v2145 = vld [vmem:[%s341 + $0xc48] sm:$0xff]
        %v2146 = vld [vmem:[%s341 + $0xc50] sm:$0xff]
        %v2147 = vld [vmem:[%s341 + $0xc58] sm:$0xff]
        %v2148 = vld [vmem:[%s341 + $0xc60] sm:$0xff]
        %v2149 = vld [vmem:[%s341 + $0xc68] sm:$0xff]
        %v2150 = vld [vmem:[%s341 + $0xc70] sm:$0xff]
        %v2151 = vld [vmem:[%s341 + $0xc78] sm:$0xff]
        %v2152 = vld [vmem:[%s341 + $0xc80] sm:$0xff]
        %v2153 = vld [vmem:[%s341 + $0xc88] sm:$0xff]
        %v2154 = vld [vmem:[%s341 + $0xc90] sm:$0xff]
        %v2155 = vld [vmem:[%s341 + $0xc98] sm:$0xff]
        %v2156 = vld [vmem:[%s341 + $0xca0] sm:$0xff]
        %v2157 = vld [vmem:[%s341 + $0xca8] sm:$0xff]
        %v2158 = vld [vmem:[%s341 + $0xcb0] sm:$0xff]
        %v2159 = vld [vmem:[%s341 + $0xcb8] sm:$0xff]
        %v2160 = vld [vmem:[%s341 + $0xcc0] sm:$0xff]
        %v2161 = vld [vmem:[%s341 + $0xcc8] sm:$0xff]
        %v2162 = vld [vmem:[%s341 + $0xcd0] sm:$0xff]
        %v2163 = vld [vmem:[%s341 + $0xcd8] sm:$0xff]
        %v2164 = vld [vmem:[%s341 + $0xce0] sm:$0xff]
        %v2165 = vld [vmem:[%s341 + $0xce8] sm:$0xff]
        %v2166 = vld [vmem:[%s341 + $0xcf0] sm:$0xff]
        %v2167 = vld [vmem:[%s341 + $0xcf8] sm:$0xff]
        %v2168 = vld [vmem:[%s341 + $0xd00] sm:$0xff]
        %v2169 = vld [vmem:[%s341 + $0xd08] sm:$0xff]
        %v2170 = vld [vmem:[%s341 + $0xd10] sm:$0xff]
        %v2171 = vld [vmem:[%s341 + $0xd18] sm:$0xff]
        %v2172 = vld [vmem:[%s341 + $0xd20] sm:$0xff]
        %v2173 = vld [vmem:[%s341 + $0xd28] sm:$0xff]
        %v2174 = vld [vmem:[%s341 + $0xd30] sm:$0xff]
        %v2175 = vld [vmem:[%s341 + $0xd38] sm:$0xff]
        %v2176 = vld [vmem:[%s341 + $0xd40] sm:$0xff]
        %v2177 = vld [vmem:[%s341 + $0xd48] sm:$0xff]
        %v2178 = vld [vmem:[%s341 + $0xd50] sm:$0xff]
        %v2179 = vld [vmem:[%s341 + $0xd58] sm:$0xff]
        %v2180 = vld [vmem:[%s341 + $0xd60] sm:$0xff]
        %v2181 = vld [vmem:[%s341 + $0xd68] sm:$0xff]
        %v2182 = vld [vmem:[%s341 + $0xd70] sm:$0xff]
        %v2183 = vld [vmem:[%s341 + $0xd78] sm:$0xff]
        %v2184 = vld [vmem:[%s341 + $0xd80] sm:$0xff]
        %v2185 = vld [vmem:[%s341 + $0xd88] sm:$0xff]
        %v2186 = vld [vmem:[%s341 + $0xd90] sm:$0xff]
        %v2187 = vld [vmem:[%s341 + $0xd98] sm:$0xff]
        %v2188 = vld [vmem:[%s341 + $0xda0] sm:$0xff]
        %v2189 = vld [vmem:[%s341 + $0xda8] sm:$0xff]
        %v2190 = vld [vmem:[%s341 + $0xdb0] sm:$0xff]
        %v2191 = vld [vmem:[%s341 + $0xdb8] sm:$0xff]
        %v2192 = vld [vmem:[%s341 + $0xdc0] sm:$0xff]
        %v2193 = vld [vmem:[%s341 + $0xdc8] sm:$0xff]
        %v2194 = vld [vmem:[%s341 + $0xdd0] sm:$0xff]
        %v2195 = vld [vmem:[%s341 + $0xdd8] sm:$0xff]
        %v2196 = vld [vmem:[%s341 + $0xde0] sm:$0xff]
        %v2197 = vld [vmem:[%s341 + $0xde8] sm:$0xff]
        %v2198 = vld [vmem:[%s341 + $0xdf0] sm:$0xff]
        %v2199 = vld [vmem:[%s341 + $0xdf8] sm:$0xff]
        %v2200 = vld [vmem:[%s341 + $0xe00] sm:$0xff]
        %v2201 = vld [vmem:[%s341 + $0xe08] sm:$0xff]
        %v2202 = vld [vmem:[%s341 + $0xe10] sm:$0xff]
        %v2203 = vld [vmem:[%s341 + $0xe18] sm:$0xff]
        %v2204 = vld [vmem:[%s341 + $0xe20] sm:$0xff]
        %v2205 = vld [vmem:[%s341 + $0xe28] sm:$0xff]
        %v2206 = vld [vmem:[%s341 + $0xe30] sm:$0xff]
        %v2207 = vld [vmem:[%s341 + $0xe38] sm:$0xff]
        %v2208 = vld [vmem:[%s341 + $0xe40] sm:$0xff]
        %v2209 = vld [vmem:[%s341 + $0xe48] sm:$0xff]
        %v2210 = vld [vmem:[%s341 + $0xe50] sm:$0xff]
        %v2211 = vld [vmem:[%s341 + $0xe58] sm:$0xff]
        %v2212 = vld [vmem:[%s341 + $0xe60] sm:$0xff]
        %v2213 = vld [vmem:[%s341 + $0xe68] sm:$0xff]
        %v2214 = vld [vmem:[%s341 + $0xe70] sm:$0xff]
        %v2215 = vld [vmem:[%s341 + $0xe78] sm:$0xff]
        %v2216 = vld [vmem:[%s341 + $0xe80] sm:$0xff]
        %v2217 = vld [vmem:[%s341 + $0xe88] sm:$0xff]
        %v2218 = vld [vmem:[%s341 + $0xe90] sm:$0xff]
        %v2219 = vld [vmem:[%s341 + $0xe98] sm:$0xff]
        %v2220 = vld [vmem:[%s341 + $0xea0] sm:$0xff]
        %v2221 = vld [vmem:[%s341 + $0xea8] sm:$0xff]
        %v2222 = vld [vmem:[%s341 + $0xeb0] sm:$0xff]
        %v2223 = vld [vmem:[%s341 + $0xeb8] sm:$0xff]
        %v2224 = vld [vmem:[%s341 + $0xec0] sm:$0xff]
        %v2225 = vld [vmem:[%s341 + $0xec8] sm:$0xff]
        %v2226 = vld [vmem:[%s341 + $0xed0] sm:$0xff]
        %v2227 = vld [vmem:[%s341 + $0xed8] sm:$0xff]
        %v2228 = vld [vmem:[%s341 + $0xee0] sm:$0xff]
        %v2229 = vld [vmem:[%s341 + $0xee8] sm:$0xff]
        %v2230 = vld [vmem:[%s341 + $0xef0] sm:$0xff]
        %v2231 = vld [vmem:[%s341 + $0xef8] sm:$0xff]
        %v2232 = vld [vmem:[%s341 + $0xf00] sm:$0xff]
        %v2233 = vld [vmem:[%s341 + $0xf08] sm:$0xff]
        %v2234 = vld [vmem:[%s341 + $0xf10] sm:$0xff]
        %v2235 = vld [vmem:[%s341 + $0xf18] sm:$0xff]
        %v2236 = vld [vmem:[%s341 + $0xf20] sm:$0xff]
        %v2237 = vld [vmem:[%s341 + $0xf28] sm:$0xff]
        %v2238 = vld [vmem:[%s341 + $0xf30] sm:$0xff]
        %v2239 = vld [vmem:[%s341 + $0xf38] sm:$0xff]
        %v2240 = vld [vmem:[%s341 + $0xf40] sm:$0xff]
        %v2241 = vld [vmem:[%s341 + $0xf48] sm:$0xff]
        %v2242 = vld [vmem:[%s341 + $0xf50] sm:$0xff]
        %v2243 = vld [vmem:[%s341 + $0xf58] sm:$0xff]
        %v2244 = vld [vmem:[%s341 + $0xf60] sm:$0xff]
        %v2245 = vld [vmem:[%s341 + $0xf68] sm:$0xff]
        %v2246 = vld [vmem:[%s341 + $0xf70] sm:$0xff]
        %v2247 = vld [vmem:[%s341 + $0xf78] sm:$0xff]
        %v2248 = vld [vmem:[%s341 + $0xf80] sm:$0xff]
        %v2249 = vld [vmem:[%s341 + $0xf88] sm:$0xff]
        %v2250 = vld [vmem:[%s341 + $0xf90] sm:$0xff]
        %v2251 = vld [vmem:[%s341 + $0xf98] sm:$0xff]
        %v2252 = vld [vmem:[%s341 + $0xfa0] sm:$0xff]
        %v2253 = vld [vmem:[%s341 + $0xfa8] sm:$0xff]
        %v2254 = vld [vmem:[%s341 + $0xfb0] sm:$0xff]
        %v2255 = vld [vmem:[%s341 + $0xfb8] sm:$0xff]
        %v2256 = vld [vmem:[%s341 + $0xfc0] sm:$0xff]
        %v2257 = vld [vmem:[%s341 + $0xfc8] sm:$0xff]
        %v2258 = vld [vmem:[%s341 + $0xfd0] sm:$0xff]
        %v2259 = vld [vmem:[%s341 + $0xfd8] sm:$0xff]
        %v2260 = vld [vmem:[%s341 + $0xfe0] sm:$0xff]
        %v2261 = vld [vmem:[%s341 + $0xfe8] sm:$0xff]
        %v2262 = vld [vmem:[%s341 + $0xff0] sm:$0xff]
        %v2263 = vld [vmem:[%s341 + $0xff8] sm:$0xff]
        %v2264 = vunpack.c.l.s8.bf16 %v1752
        %v2265 = vunpack.c.l.s8.bf16 %v1753
        %v2266 = vunpack.c.l.s8.bf16 %v1754
        %v2267 = vunpack.c.l.s8.bf16 %v1755
        %v2268 = vunpack.c.h.s8.bf16 %v1752
        %v2269 = vunpack.c.h.s8.bf16 %v1753
        %v2270 = vunpack.c.h.s8.bf16 %v1754
        %v2271 = vunpack.c.h.s8.bf16 %v1755
        %v2272 = vunpack.c.l.s8.bf16 %v1756
        %v2273 = vunpack.c.l.s8.bf16 %v1757
        %v2274 = vunpack.c.l.s8.bf16 %v1758
        %v2275 = vunpack.c.l.s8.bf16 %v1759
        %v2276 = vunpack.c.h.s8.bf16 %v1756
        %v2277 = vunpack.c.h.s8.bf16 %v1757
        %v2278 = vunpack.c.h.s8.bf16 %v1758
        %v2279 = vunpack.c.h.s8.bf16 %v1759
        %v2280 = vunpack.c.l.s8.bf16 %v1760
        %v2281 = vunpack.c.l.s8.bf16 %v1761
        %v2282 = vunpack.c.l.s8.bf16 %v1762
        %v2283 = vunpack.c.l.s8.bf16 %v1763
        %v2284 = vunpack.c.h.s8.bf16 %v1760
        %v2285 = vunpack.c.h.s8.bf16 %v1761
        %v2286 = vunpack.c.h.s8.bf16 %v1762
        %v2287 = vunpack.c.h.s8.bf16 %v1763
        %v2288 = vunpack.c.l.s8.bf16 %v1764
        %v2289 = vunpack.c.l.s8.bf16 %v1765
        %v2290 = vunpack.c.l.s8.bf16 %v1766
        %v2291 = vunpack.c.l.s8.bf16 %v1767
        %v2292 = vunpack.c.h.s8.bf16 %v1764
        %v2293 = vunpack.c.h.s8.bf16 %v1765
        %v2294 = vunpack.c.h.s8.bf16 %v1766
        %v2295 = vunpack.c.h.s8.bf16 %v1767
        %v2296 = vunpack.c.l.s8.bf16 %v1768
        %v2297 = vunpack.c.l.s8.bf16 %v1769
        %v2298 = vunpack.c.l.s8.bf16 %v1770
        %v2299 = vunpack.c.l.s8.bf16 %v1771
        %v2300 = vunpack.c.h.s8.bf16 %v1768
        %v2301 = vunpack.c.h.s8.bf16 %v1769
        %v2302 = vunpack.c.h.s8.bf16 %v1770
        %v2303 = vunpack.c.h.s8.bf16 %v1771
        %v2304 = vunpack.c.l.s8.bf16 %v1772
        %v2305 = vunpack.c.l.s8.bf16 %v1773
        %v2306 = vunpack.c.l.s8.bf16 %v1774
        %v2307 = vunpack.c.l.s8.bf16 %v1775
        %v2308 = vunpack.c.h.s8.bf16 %v1772
        %v2309 = vunpack.c.h.s8.bf16 %v1773
        %v2310 = vunpack.c.h.s8.bf16 %v1774
        %v2311 = vunpack.c.h.s8.bf16 %v1775
        %v2312 = vunpack.c.l.s8.bf16 %v1776
        %v2313 = vunpack.c.l.s8.bf16 %v1777
        %v2314 = vunpack.c.l.s8.bf16 %v1778
        %v2315 = vunpack.c.l.s8.bf16 %v1779
        %v2316 = vunpack.c.h.s8.bf16 %v1776
        %v2317 = vunpack.c.h.s8.bf16 %v1777
        %v2318 = vunpack.c.h.s8.bf16 %v1778
        %v2319 = vunpack.c.h.s8.bf16 %v1779
        %v2320 = vunpack.c.l.s8.bf16 %v1780
        %v2321 = vunpack.c.l.s8.bf16 %v1781
        %v2322 = vunpack.c.l.s8.bf16 %v1782
        %v2323 = vunpack.c.l.s8.bf16 %v1783
        %v2324 = vunpack.c.h.s8.bf16 %v1780
        %v2325 = vunpack.c.h.s8.bf16 %v1781
        %v2326 = vunpack.c.h.s8.bf16 %v1782
        %v2327 = vunpack.c.h.s8.bf16 %v1783
        %v2328 = vunpack.c.l.s8.bf16 %v1784
        %v2329 = vunpack.c.l.s8.bf16 %v1785
        %v2330 = vunpack.c.l.s8.bf16 %v1786
        %v2331 = vunpack.c.l.s8.bf16 %v1787
        %v2332 = vunpack.c.h.s8.bf16 %v1784
        %v2333 = vunpack.c.h.s8.bf16 %v1785
        %v2334 = vunpack.c.h.s8.bf16 %v1786
        %v2335 = vunpack.c.h.s8.bf16 %v1787
        %v2336 = vunpack.c.l.s8.bf16 %v1788
        %v2337 = vunpack.c.l.s8.bf16 %v1789
        %v2338 = vunpack.c.l.s8.bf16 %v1790
        %v2339 = vunpack.c.l.s8.bf16 %v1791
        %v2340 = vunpack.c.h.s8.bf16 %v1788
        %v2341 = vunpack.c.h.s8.bf16 %v1789
        %v2342 = vunpack.c.h.s8.bf16 %v1790
        %v2343 = vunpack.c.h.s8.bf16 %v1791
        %v2344 = vunpack.c.l.s8.bf16 %v1792
        %v2345 = vunpack.c.l.s8.bf16 %v1793
        %v2346 = vunpack.c.l.s8.bf16 %v1794
        %v2347 = vunpack.c.l.s8.bf16 %v1795
        %v2348 = vunpack.c.h.s8.bf16 %v1792
        %v2349 = vunpack.c.h.s8.bf16 %v1793
        %v2350 = vunpack.c.h.s8.bf16 %v1794
        %v2351 = vunpack.c.h.s8.bf16 %v1795
        %v2352 = vunpack.c.l.s8.bf16 %v1796
        %v2353 = vunpack.c.l.s8.bf16 %v1797
        %v2354 = vunpack.c.l.s8.bf16 %v1798
        %v2355 = vunpack.c.l.s8.bf16 %v1799
        %v2356 = vunpack.c.h.s8.bf16 %v1796
        %v2357 = vunpack.c.h.s8.bf16 %v1797
        %v2358 = vunpack.c.h.s8.bf16 %v1798
        %v2359 = vunpack.c.h.s8.bf16 %v1799
        %v2360 = vunpack.c.l.s8.bf16 %v1800
        %v2361 = vunpack.c.l.s8.bf16 %v1801
        %v2362 = vunpack.c.l.s8.bf16 %v1802
        %v2363 = vunpack.c.l.s8.bf16 %v1803
        %v2364 = vunpack.c.h.s8.bf16 %v1800
        %v2365 = vunpack.c.h.s8.bf16 %v1801
        %v2366 = vunpack.c.h.s8.bf16 %v1802
        %v2367 = vunpack.c.h.s8.bf16 %v1803
        %v2368 = vunpack.c.l.s8.bf16 %v1804
        %v2369 = vunpack.c.l.s8.bf16 %v1805
        %v2370 = vunpack.c.l.s8.bf16 %v1806
        %v2371 = vunpack.c.l.s8.bf16 %v1807
        %v2372 = vunpack.c.h.s8.bf16 %v1804
        %v2373 = vunpack.c.h.s8.bf16 %v1805
        %v2374 = vunpack.c.h.s8.bf16 %v1806
        %v2375 = vunpack.c.h.s8.bf16 %v1807
        %v2376 = vunpack.c.l.s8.bf16 %v1808
        %v2377 = vunpack.c.l.s8.bf16 %v1809
        %v2378 = vunpack.c.l.s8.bf16 %v1810
        %v2379 = vunpack.c.l.s8.bf16 %v1811
        %v2380 = vunpack.c.h.s8.bf16 %v1808
        %v2381 = vunpack.c.h.s8.bf16 %v1809
        %v2382 = vunpack.c.h.s8.bf16 %v1810
        %v2383 = vunpack.c.h.s8.bf16 %v1811
        %v2384 = vunpack.c.l.s8.bf16 %v1812
        %v2385 = vunpack.c.l.s8.bf16 %v1813
        %v2386 = vunpack.c.l.s8.bf16 %v1814
        %v2387 = vunpack.c.l.s8.bf16 %v1815
        %v2388 = vunpack.c.h.s8.bf16 %v1812
        %v2389 = vunpack.c.h.s8.bf16 %v1813
        %v2390 = vunpack.c.h.s8.bf16 %v1814
        %v2391 = vunpack.c.h.s8.bf16 %v1815
        %v2392 = vunpack.c.l.s8.bf16 %v1816
        %v2393 = vunpack.c.l.s8.bf16 %v1817
        %v2394 = vunpack.c.l.s8.bf16 %v1818
        %v2395 = vunpack.c.l.s8.bf16 %v1819
        %v2396 = vunpack.c.h.s8.bf16 %v1816
        %v2397 = vunpack.c.h.s8.bf16 %v1817
        %v2398 = vunpack.c.h.s8.bf16 %v1818
        %v2399 = vunpack.c.h.s8.bf16 %v1819
        %v2400 = vunpack.c.l.s8.bf16 %v1820
        %v2401 = vunpack.c.l.s8.bf16 %v1821
        %v2402 = vunpack.c.l.s8.bf16 %v1822
        %v2403 = vunpack.c.l.s8.bf16 %v1823
        %v2404 = vunpack.c.h.s8.bf16 %v1820
        %v2405 = vunpack.c.h.s8.bf16 %v1821
        %v2406 = vunpack.c.h.s8.bf16 %v1822
        %v2407 = vunpack.c.h.s8.bf16 %v1823
        %v2408 = vunpack.c.l.s8.bf16 %v1824
        %v2409 = vunpack.c.l.s8.bf16 %v1825
        %v2410 = vunpack.c.l.s8.bf16 %v1826
        %v2411 = vunpack.c.l.s8.bf16 %v1827
        %v2412 = vunpack.c.h.s8.bf16 %v1824
        %v2413 = vunpack.c.h.s8.bf16 %v1825
        %v2414 = vunpack.c.h.s8.bf16 %v1826
        %v2415 = vunpack.c.h.s8.bf16 %v1827
        %v2416 = vunpack.c.l.s8.bf16 %v1828
        %v2417 = vunpack.c.l.s8.bf16 %v1829
        %v2418 = vunpack.c.l.s8.bf16 %v1830
        %v2419 = vunpack.c.l.s8.bf16 %v1831
        %v2420 = vunpack.c.h.s8.bf16 %v1828
        %v2421 = vunpack.c.h.s8.bf16 %v1829
        %v2422 = vunpack.c.h.s8.bf16 %v1830
        %v2423 = vunpack.c.h.s8.bf16 %v1831
        %v2424 = vunpack.c.l.s8.bf16 %v1832
        %v2425 = vunpack.c.l.s8.bf16 %v1833
        %v2426 = vunpack.c.l.s8.bf16 %v1834
        %v2427 = vunpack.c.l.s8.bf16 %v1835
        %v2428 = vunpack.c.h.s8.bf16 %v1832
        %v2429 = vunpack.c.h.s8.bf16 %v1833
        %v2430 = vunpack.c.h.s8.bf16 %v1834
        %v2431 = vunpack.c.h.s8.bf16 %v1835
        %v2432 = vunpack.c.l.s8.bf16 %v1836
        %v2433 = vunpack.c.l.s8.bf16 %v1837
        %v2434 = vunpack.c.l.s8.bf16 %v1838
        %v2435 = vunpack.c.l.s8.bf16 %v1839
        %v2436 = vunpack.c.h.s8.bf16 %v1836
        %v2437 = vunpack.c.h.s8.bf16 %v1837
        %v2438 = vunpack.c.h.s8.bf16 %v1838
        %v2439 = vunpack.c.h.s8.bf16 %v1839
        %v2440 = vunpack.c.l.s8.bf16 %v1840
        %v2441 = vunpack.c.l.s8.bf16 %v1841
        %v2442 = vunpack.c.l.s8.bf16 %v1842
        %v2443 = vunpack.c.l.s8.bf16 %v1843
        %v2444 = vunpack.c.h.s8.bf16 %v1840
        %v2445 = vunpack.c.h.s8.bf16 %v1841
        %v2446 = vunpack.c.h.s8.bf16 %v1842
        %v2447 = vunpack.c.h.s8.bf16 %v1843
        %v2448 = vunpack.c.l.s8.bf16 %v1844
        %v2449 = vunpack.c.l.s8.bf16 %v1845
        %v2450 = vunpack.c.l.s8.bf16 %v1846
        %v2451 = vunpack.c.l.s8.bf16 %v1847
        %v2452 = vunpack.c.h.s8.bf16 %v1844
        %v2453 = vunpack.c.h.s8.bf16 %v1845
        %v2454 = vunpack.c.h.s8.bf16 %v1846
        %v2455 = vunpack.c.h.s8.bf16 %v1847
        %v2456 = vunpack.c.l.s8.bf16 %v1848
        %v2457 = vunpack.c.l.s8.bf16 %v1849
        %v2458 = vunpack.c.l.s8.bf16 %v1850
        %v2459 = vunpack.c.l.s8.bf16 %v1851
        %v2460 = vunpack.c.h.s8.bf16 %v1848
        %v2461 = vunpack.c.h.s8.bf16 %v1849
        %v2462 = vunpack.c.h.s8.bf16 %v1850
        %v2463 = vunpack.c.h.s8.bf16 %v1851
        %v2464 = vunpack.c.l.s8.bf16 %v1852
        %v2465 = vunpack.c.l.s8.bf16 %v1853
        %v2466 = vunpack.c.l.s8.bf16 %v1854
        %v2467 = vunpack.c.l.s8.bf16 %v1855
        %v2468 = vunpack.c.h.s8.bf16 %v1852
        %v2469 = vunpack.c.h.s8.bf16 %v1853
        %v2470 = vunpack.c.h.s8.bf16 %v1854
        %v2471 = vunpack.c.h.s8.bf16 %v1855
        %v2472 = vunpack.c.l.s8.bf16 %v1856
        %v2473 = vunpack.c.l.s8.bf16 %v1857
        %v2474 = vunpack.c.l.s8.bf16 %v1858
        %v2475 = vunpack.c.l.s8.bf16 %v1859
        %v2476 = vunpack.c.h.s8.bf16 %v1856
        %v2477 = vunpack.c.h.s8.bf16 %v1857
        %v2478 = vunpack.c.h.s8.bf16 %v1858
        %v2479 = vunpack.c.h.s8.bf16 %v1859
        %v2480 = vunpack.c.l.s8.bf16 %v1860
        %v2481 = vunpack.c.l.s8.bf16 %v1861
        %v2482 = vunpack.c.l.s8.bf16 %v1862
        %v2483 = vunpack.c.l.s8.bf16 %v1863
        %v2484 = vunpack.c.h.s8.bf16 %v1860
        %v2485 = vunpack.c.h.s8.bf16 %v1861
        %v2486 = vunpack.c.h.s8.bf16 %v1862
        %v2487 = vunpack.c.h.s8.bf16 %v1863
        %v2488 = vunpack.c.l.s8.bf16 %v1864
        %v2489 = vunpack.c.l.s8.bf16 %v1865
        %v2490 = vunpack.c.l.s8.bf16 %v1866
        %v2491 = vunpack.c.l.s8.bf16 %v1867
        %v2492 = vunpack.c.h.s8.bf16 %v1864
        %v2493 = vunpack.c.h.s8.bf16 %v1865
        %v2494 = vunpack.c.h.s8.bf16 %v1866
        %v2495 = vunpack.c.h.s8.bf16 %v1867
        %v2496 = vunpack.c.l.s8.bf16 %v1868
        %v2497 = vunpack.c.l.s8.bf16 %v1869
        %v2498 = vunpack.c.l.s8.bf16 %v1870
        %v2499 = vunpack.c.l.s8.bf16 %v1871
        %v2500 = vunpack.c.h.s8.bf16 %v1868
        %v2501 = vunpack.c.h.s8.bf16 %v1869
        %v2502 = vunpack.c.h.s8.bf16 %v1870
        %v2503 = vunpack.c.h.s8.bf16 %v1871
        %v2504 = vunpack.c.l.s8.bf16 %v1872
        %v2505 = vunpack.c.l.s8.bf16 %v1873
        %v2506 = vunpack.c.l.s8.bf16 %v1874
        %v2507 = vunpack.c.l.s8.bf16 %v1875
        %v2508 = vunpack.c.h.s8.bf16 %v1872
        %v2509 = vunpack.c.h.s8.bf16 %v1873
        %v2510 = vunpack.c.h.s8.bf16 %v1874
        %v2511 = vunpack.c.h.s8.bf16 %v1875
        %v2512 = vunpack.c.l.s8.bf16 %v1876
        %v2513 = vunpack.c.l.s8.bf16 %v1877
        %v2514 = vunpack.c.l.s8.bf16 %v1878
        %v2515 = vunpack.c.l.s8.bf16 %v1879
        %v2516 = vunpack.c.h.s8.bf16 %v1876
        %v2517 = vunpack.c.h.s8.bf16 %v1877
        %v2518 = vunpack.c.h.s8.bf16 %v1878
        %v2519 = vunpack.c.h.s8.bf16 %v1879
        %v2520 = vunpack.c.l.s8.bf16 %v1880
        %v2521 = vunpack.c.l.s8.bf16 %v1881
        %v2522 = vunpack.c.l.s8.bf16 %v1882
        %v2523 = vunpack.c.l.s8.bf16 %v1883
        %v2524 = vunpack.c.h.s8.bf16 %v1880
        %v2525 = vunpack.c.h.s8.bf16 %v1881
        %v2526 = vunpack.c.h.s8.bf16 %v1882
        %v2527 = vunpack.c.h.s8.bf16 %v1883
        %v2528 = vunpack.c.l.s8.bf16 %v1884
        %v2529 = vunpack.c.l.s8.bf16 %v1885
        %v2530 = vunpack.c.l.s8.bf16 %v1886
        %v2531 = vunpack.c.l.s8.bf16 %v1887
        %v2532 = vunpack.c.h.s8.bf16 %v1884
        %v2533 = vunpack.c.h.s8.bf16 %v1885
        %v2534 = vunpack.c.h.s8.bf16 %v1886
        %v2535 = vunpack.c.h.s8.bf16 %v1887
        %v2536 = vunpack.c.l.s8.bf16 %v1888
        %v2537 = vunpack.c.l.s8.bf16 %v1889
        %v2538 = vunpack.c.l.s8.bf16 %v1890
        %v2539 = vunpack.c.l.s8.bf16 %v1891
        %v2540 = vunpack.c.h.s8.bf16 %v1888
        %v2541 = vunpack.c.h.s8.bf16 %v1889
        %v2542 = vunpack.c.h.s8.bf16 %v1890
        %v2543 = vunpack.c.h.s8.bf16 %v1891
        %v2544 = vunpack.c.l.s8.bf16 %v1892
        %v2545 = vunpack.c.l.s8.bf16 %v1893
        %v2546 = vunpack.c.l.s8.bf16 %v1894
        %v2547 = vunpack.c.l.s8.bf16 %v1895
        %v2548 = vunpack.c.h.s8.bf16 %v1892
        %v2549 = vunpack.c.h.s8.bf16 %v1893
        %v2550 = vunpack.c.h.s8.bf16 %v1894
        %v2551 = vunpack.c.h.s8.bf16 %v1895
        %v2552 = vunpack.c.l.s8.bf16 %v1896
        %v2553 = vunpack.c.l.s8.bf16 %v1897
        %v2554 = vunpack.c.l.s8.bf16 %v1898
        %v2555 = vunpack.c.l.s8.bf16 %v1899
        %v2556 = vunpack.c.h.s8.bf16 %v1896
        %v2557 = vunpack.c.h.s8.bf16 %v1897
        %v2558 = vunpack.c.h.s8.bf16 %v1898
        %v2559 = vunpack.c.h.s8.bf16 %v1899
        %v2560 = vunpack.c.l.s8.bf16 %v1900
        %v2561 = vunpack.c.l.s8.bf16 %v1901
        %v2562 = vunpack.c.l.s8.bf16 %v1902
        %v2563 = vunpack.c.l.s8.bf16 %v1903
        %v2564 = vunpack.c.h.s8.bf16 %v1900
        %v2565 = vunpack.c.h.s8.bf16 %v1901
        %v2566 = vunpack.c.h.s8.bf16 %v1902
        %v2567 = vunpack.c.h.s8.bf16 %v1903
        %v2568 = vunpack.c.l.s8.bf16 %v1904
        %v2569 = vunpack.c.l.s8.bf16 %v1905
        %v2570 = vunpack.c.l.s8.bf16 %v1906
        %v2571 = vunpack.c.l.s8.bf16 %v1907
        %v2572 = vunpack.c.h.s8.bf16 %v1904
        %v2573 = vunpack.c.h.s8.bf16 %v1905
        %v2574 = vunpack.c.h.s8.bf16 %v1906
        %v2575 = vunpack.c.h.s8.bf16 %v1907
        %v2576 = vunpack.c.l.s8.bf16 %v1908
        %v2577 = vunpack.c.l.s8.bf16 %v1909
        %v2578 = vunpack.c.l.s8.bf16 %v1910
        %v2579 = vunpack.c.l.s8.bf16 %v1911
        %v2580 = vunpack.c.h.s8.bf16 %v1908
        %v2581 = vunpack.c.h.s8.bf16 %v1909
        %v2582 = vunpack.c.h.s8.bf16 %v1910
        %v2583 = vunpack.c.h.s8.bf16 %v1911
        %v2584 = vunpack.c.l.s8.bf16 %v1912
        %v2585 = vunpack.c.l.s8.bf16 %v1913
        %v2586 = vunpack.c.l.s8.bf16 %v1914
        %v2587 = vunpack.c.l.s8.bf16 %v1915
        %v2588 = vunpack.c.h.s8.bf16 %v1912
        %v2589 = vunpack.c.h.s8.bf16 %v1913
        %v2590 = vunpack.c.h.s8.bf16 %v1914
        %v2591 = vunpack.c.h.s8.bf16 %v1915
        %v2592 = vunpack.c.l.s8.bf16 %v1916
        %v2593 = vunpack.c.l.s8.bf16 %v1917
        %v2594 = vunpack.c.l.s8.bf16 %v1918
        %v2595 = vunpack.c.l.s8.bf16 %v1919
        %v2596 = vunpack.c.h.s8.bf16 %v1916
        %v2597 = vunpack.c.h.s8.bf16 %v1917
        %v2598 = vunpack.c.h.s8.bf16 %v1918
        %v2599 = vunpack.c.h.s8.bf16 %v1919
        %v2600 = vunpack.c.l.s8.bf16 %v1920
        %v2601 = vunpack.c.l.s8.bf16 %v1921
        %v2602 = vunpack.c.l.s8.bf16 %v1922
        %v2603 = vunpack.c.l.s8.bf16 %v1923
        %v2604 = vunpack.c.h.s8.bf16 %v1920
        %v2605 = vunpack.c.h.s8.bf16 %v1921
        %v2606 = vunpack.c.h.s8.bf16 %v1922
        %v2607 = vunpack.c.h.s8.bf16 %v1923
        %v2608 = vunpack.c.l.s8.bf16 %v1924
        %v2609 = vunpack.c.l.s8.bf16 %v1925
        %v2610 = vunpack.c.l.s8.bf16 %v1926
        %v2611 = vunpack.c.l.s8.bf16 %v1927
        %v2612 = vunpack.c.h.s8.bf16 %v1924
        %v2613 = vunpack.c.h.s8.bf16 %v1925
        %v2614 = vunpack.c.h.s8.bf16 %v1926
        %v2615 = vunpack.c.h.s8.bf16 %v1927
        %v2616 = vunpack.c.l.s8.bf16 %v1928
        %v2617 = vunpack.c.l.s8.bf16 %v1929
        %v2618 = vunpack.c.l.s8.bf16 %v1930
        %v2619 = vunpack.c.l.s8.bf16 %v1931
        %v2620 = vunpack.c.h.s8.bf16 %v1928
        %v2621 = vunpack.c.h.s8.bf16 %v1929
        %v2622 = vunpack.c.h.s8.bf16 %v1930
        %v2623 = vunpack.c.h.s8.bf16 %v1931
        %v2624 = vunpack.c.l.s8.bf16 %v1932
        %v2625 = vunpack.c.l.s8.bf16 %v1933
        %v2626 = vunpack.c.l.s8.bf16 %v1934
        %v2627 = vunpack.c.l.s8.bf16 %v1935
        %v2628 = vunpack.c.h.s8.bf16 %v1932
        %v2629 = vunpack.c.h.s8.bf16 %v1933
        %v2630 = vunpack.c.h.s8.bf16 %v1934
        %v2631 = vunpack.c.h.s8.bf16 %v1935
        %v2632 = vunpack.c.l.s8.bf16 %v1936
        %v2633 = vunpack.c.l.s8.bf16 %v1937
        %v2634 = vunpack.c.l.s8.bf16 %v1938
        %v2635 = vunpack.c.l.s8.bf16 %v1939
        %v2636 = vunpack.c.h.s8.bf16 %v1936
        %v2637 = vunpack.c.h.s8.bf16 %v1937
        %v2638 = vunpack.c.h.s8.bf16 %v1938
        %v2639 = vunpack.c.h.s8.bf16 %v1939
        %v2640 = vunpack.c.l.s8.bf16 %v1940
        %v2641 = vunpack.c.l.s8.bf16 %v1941
        %v2642 = vunpack.c.l.s8.bf16 %v1942
        %v2643 = vunpack.c.l.s8.bf16 %v1943
        %v2644 = vunpack.c.h.s8.bf16 %v1940
        %v2645 = vunpack.c.h.s8.bf16 %v1941
        %v2646 = vunpack.c.h.s8.bf16 %v1942
        %v2647 = vunpack.c.h.s8.bf16 %v1943
        %v2648 = vunpack.c.l.s8.bf16 %v1944
        %v2649 = vunpack.c.l.s8.bf16 %v1945
        %v2650 = vunpack.c.l.s8.bf16 %v1946
        %v2651 = vunpack.c.l.s8.bf16 %v1947
        %v2652 = vunpack.c.h.s8.bf16 %v1944
        %v2653 = vunpack.c.h.s8.bf16 %v1945
        %v2654 = vunpack.c.h.s8.bf16 %v1946
        %v2655 = vunpack.c.h.s8.bf16 %v1947
        %v2656 = vunpack.c.l.s8.bf16 %v1948
        %v2657 = vunpack.c.l.s8.bf16 %v1949
        %v2658 = vunpack.c.l.s8.bf16 %v1950
        %v2659 = vunpack.c.l.s8.bf16 %v1951
        %v2660 = vunpack.c.h.s8.bf16 %v1948
        %v2661 = vunpack.c.h.s8.bf16 %v1949
        %v2662 = vunpack.c.h.s8.bf16 %v1950
        %v2663 = vunpack.c.h.s8.bf16 %v1951
        %v2664 = vunpack.c.l.s8.bf16 %v1952
        %v2665 = vunpack.c.l.s8.bf16 %v1953
        %v2666 = vunpack.c.l.s8.bf16 %v1954
        %v2667 = vunpack.c.l.s8.bf16 %v1955
        %v2668 = vunpack.c.h.s8.bf16 %v1952
        %v2669 = vunpack.c.h.s8.bf16 %v1953
        %v2670 = vunpack.c.h.s8.bf16 %v1954
        %v2671 = vunpack.c.h.s8.bf16 %v1955
        %v2672 = vunpack.c.l.s8.bf16 %v1956
        %v2673 = vunpack.c.l.s8.bf16 %v1957
        %v2674 = vunpack.c.l.s8.bf16 %v1958
        %v2675 = vunpack.c.l.s8.bf16 %v1959
        %v2676 = vunpack.c.h.s8.bf16 %v1956
        %v2677 = vunpack.c.h.s8.bf16 %v1957
        %v2678 = vunpack.c.h.s8.bf16 %v1958
        %v2679 = vunpack.c.h.s8.bf16 %v1959
        %v2680 = vunpack.c.l.s8.bf16 %v1960
        %v2681 = vunpack.c.l.s8.bf16 %v1961
        %v2682 = vunpack.c.l.s8.bf16 %v1962
        %v2683 = vunpack.c.l.s8.bf16 %v1963
        %v2684 = vunpack.c.h.s8.bf16 %v1960
        %v2685 = vunpack.c.h.s8.bf16 %v1961
        %v2686 = vunpack.c.h.s8.bf16 %v1962
        %v2687 = vunpack.c.h.s8.bf16 %v1963
        %v2688 = vunpack.c.l.s8.bf16 %v1964
        %v2689 = vunpack.c.l.s8.bf16 %v1965
        %v2690 = vunpack.c.l.s8.bf16 %v1966
        %v2691 = vunpack.c.l.s8.bf16 %v1967
        %v2692 = vunpack.c.h.s8.bf16 %v1964
        %v2693 = vunpack.c.h.s8.bf16 %v1965
        %v2694 = vunpack.c.h.s8.bf16 %v1966
        %v2695 = vunpack.c.h.s8.bf16 %v1967
        %v2696 = vunpack.c.l.s8.bf16 %v1968
        %v2697 = vunpack.c.l.s8.bf16 %v1969
        %v2698 = vunpack.c.l.s8.bf16 %v1970
        %v2699 = vunpack.c.l.s8.bf16 %v1971
        %v2700 = vunpack.c.h.s8.bf16 %v1968
        %v2701 = vunpack.c.h.s8.bf16 %v1969
        %v2702 = vunpack.c.h.s8.bf16 %v1970
        %v2703 = vunpack.c.h.s8.bf16 %v1971
        %v2704 = vunpack.c.l.s8.bf16 %v1972
        %v2705 = vunpack.c.l.s8.bf16 %v1973
        %v2706 = vunpack.c.l.s8.bf16 %v1974
        %v2707 = vunpack.c.l.s8.bf16 %v1975
        %v2708 = vunpack.c.h.s8.bf16 %v1972
        %v2709 = vunpack.c.h.s8.bf16 %v1973
        %v2710 = vunpack.c.h.s8.bf16 %v1974
        %v2711 = vunpack.c.h.s8.bf16 %v1975
        %v2712 = vunpack.c.l.s8.bf16 %v1976
        %v2713 = vunpack.c.l.s8.bf16 %v1977
        %v2714 = vunpack.c.l.s8.bf16 %v1978
        %v2715 = vunpack.c.l.s8.bf16 %v1979
        %v2716 = vunpack.c.h.s8.bf16 %v1976
        %v2717 = vunpack.c.h.s8.bf16 %v1977
        %v2718 = vunpack.c.h.s8.bf16 %v1978
        %v2719 = vunpack.c.h.s8.bf16 %v1979
        %v2720 = vunpack.c.l.s8.bf16 %v1980
        %v2721 = vunpack.c.l.s8.bf16 %v1981
        %v2722 = vunpack.c.l.s8.bf16 %v1982
        %v2723 = vunpack.c.l.s8.bf16 %v1983
        %v2724 = vunpack.c.h.s8.bf16 %v1980
        %v2725 = vunpack.c.h.s8.bf16 %v1981
        %v2726 = vunpack.c.h.s8.bf16 %v1982
        %v2727 = vunpack.c.h.s8.bf16 %v1983
        %v2728 = vunpack.c.l.s8.bf16 %v1984
        %v2729 = vunpack.c.l.s8.bf16 %v1985
        %v2730 = vunpack.c.l.s8.bf16 %v1986
        %v2731 = vunpack.c.l.s8.bf16 %v1987
        %v2732 = vunpack.c.h.s8.bf16 %v1984
        %v2733 = vunpack.c.h.s8.bf16 %v1985
        %v2734 = vunpack.c.h.s8.bf16 %v1986
        %v2735 = vunpack.c.h.s8.bf16 %v1987
        %v2736 = vunpack.c.l.s8.bf16 %v1988
        %v2737 = vunpack.c.l.s8.bf16 %v1989
        %v2738 = vunpack.c.l.s8.bf16 %v1990
        %v2739 = vunpack.c.l.s8.bf16 %v1991
        %v2740 = vunpack.c.h.s8.bf16 %v1988
        %v2741 = vunpack.c.h.s8.bf16 %v1989
        %v2742 = vunpack.c.h.s8.bf16 %v1990
        %v2743 = vunpack.c.h.s8.bf16 %v1991
        %v2744 = vunpack.c.l.s8.bf16 %v1992
        %v2745 = vunpack.c.l.s8.bf16 %v1993
        %v2746 = vunpack.c.l.s8.bf16 %v1994
        %v2747 = vunpack.c.l.s8.bf16 %v1995
        %v2748 = vunpack.c.h.s8.bf16 %v1992
        %v2749 = vunpack.c.h.s8.bf16 %v1993
        %v2750 = vunpack.c.h.s8.bf16 %v1994
        %v2751 = vunpack.c.h.s8.bf16 %v1995
        %v2752 = vunpack.c.l.s8.bf16 %v1996
        %v2753 = vunpack.c.l.s8.bf16 %v1997
        %v2754 = vunpack.c.l.s8.bf16 %v1998
        %v2755 = vunpack.c.l.s8.bf16 %v1999
        %v2756 = vunpack.c.h.s8.bf16 %v1996
        %v2757 = vunpack.c.h.s8.bf16 %v1997
        %v2758 = vunpack.c.h.s8.bf16 %v1998
        %v2759 = vunpack.c.h.s8.bf16 %v1999
        %v2760 = vunpack.c.l.s8.bf16 %v2000
        %v2761 = vunpack.c.l.s8.bf16 %v2001
        %v2762 = vunpack.c.l.s8.bf16 %v2002
        %v2763 = vunpack.c.l.s8.bf16 %v2003
        %v2764 = vunpack.c.h.s8.bf16 %v2000
        %v2765 = vunpack.c.h.s8.bf16 %v2001
        %v2766 = vunpack.c.h.s8.bf16 %v2002
        %v2767 = vunpack.c.h.s8.bf16 %v2003
        %v2768 = vunpack.c.l.s8.bf16 %v2004
        %v2769 = vunpack.c.l.s8.bf16 %v2005
        %v2770 = vunpack.c.l.s8.bf16 %v2006
        %v2771 = vunpack.c.l.s8.bf16 %v2007
        %v2772 = vunpack.c.h.s8.bf16 %v2004
        %v2773 = vunpack.c.h.s8.bf16 %v2005
        %v2774 = vunpack.c.h.s8.bf16 %v2006
        %v2775 = vunpack.c.h.s8.bf16 %v2007
        %v2776 = vunpack.c.l.s8.bf16 %v2008
        %v2777 = vunpack.c.l.s8.bf16 %v2009
        %v2778 = vunpack.c.l.s8.bf16 %v2010
        %v2779 = vunpack.c.l.s8.bf16 %v2011
        %v2780 = vunpack.c.h.s8.bf16 %v2008
        %v2781 = vunpack.c.h.s8.bf16 %v2009
        %v2782 = vunpack.c.h.s8.bf16 %v2010
        %v2783 = vunpack.c.h.s8.bf16 %v2011
        %v2784 = vunpack.c.l.s8.bf16 %v2012
        %v2785 = vunpack.c.l.s8.bf16 %v2013
        %v2786 = vunpack.c.l.s8.bf16 %v2014
        %v2787 = vunpack.c.l.s8.bf16 %v2015
        %v2788 = vunpack.c.h.s8.bf16 %v2012
        %v2789 = vunpack.c.h.s8.bf16 %v2013
        %v2790 = vunpack.c.h.s8.bf16 %v2014
        %v2791 = vunpack.c.h.s8.bf16 %v2015
        %v2792 = vunpack.c.l.s8.bf16 %v2016
        %v2793 = vunpack.c.l.s8.bf16 %v2017
        %v2794 = vunpack.c.l.s8.bf16 %v2018
        %v2795 = vunpack.c.l.s8.bf16 %v2019
        %v2796 = vunpack.c.h.s8.bf16 %v2016
        %v2797 = vunpack.c.h.s8.bf16 %v2017
        %v2798 = vunpack.c.h.s8.bf16 %v2018
        %v2799 = vunpack.c.h.s8.bf16 %v2019
        %v2800 = vunpack.c.l.s8.bf16 %v2020
        %v2801 = vunpack.c.l.s8.bf16 %v2021
        %v2802 = vunpack.c.l.s8.bf16 %v2022
        %v2803 = vunpack.c.l.s8.bf16 %v2023
        %v2804 = vunpack.c.h.s8.bf16 %v2020
        %v2805 = vunpack.c.h.s8.bf16 %v2021
        %v2806 = vunpack.c.h.s8.bf16 %v2022
        %v2807 = vunpack.c.h.s8.bf16 %v2023
        %v2808 = vunpack.c.l.s8.bf16 %v2024
        %v2809 = vunpack.c.l.s8.bf16 %v2025
        %v2810 = vunpack.c.l.s8.bf16 %v2026
        %v2811 = vunpack.c.l.s8.bf16 %v2027
        %v2812 = vunpack.c.h.s8.bf16 %v2024
        %v2813 = vunpack.c.h.s8.bf16 %v2025
        %v2814 = vunpack.c.h.s8.bf16 %v2026
        %v2815 = vunpack.c.h.s8.bf16 %v2027
        %v2816 = vunpack.c.l.s8.bf16 %v2028
        %v2817 = vunpack.c.l.s8.bf16 %v2029
        %v2818 = vunpack.c.l.s8.bf16 %v2030
        %v2819 = vunpack.c.l.s8.bf16 %v2031
        %v2820 = vunpack.c.h.s8.bf16 %v2028
        %v2821 = vunpack.c.h.s8.bf16 %v2029
        %v2822 = vunpack.c.h.s8.bf16 %v2030
        %v2823 = vunpack.c.h.s8.bf16 %v2031
        %v2824 = vunpack.c.l.s8.bf16 %v2032
        %v2825 = vunpack.c.l.s8.bf16 %v2033
        %v2826 = vunpack.c.l.s8.bf16 %v2034
        %v2827 = vunpack.c.l.s8.bf16 %v2035
        %v2828 = vunpack.c.h.s8.bf16 %v2032
        %v2829 = vunpack.c.h.s8.bf16 %v2033
        %v2830 = vunpack.c.h.s8.bf16 %v2034
        %v2831 = vunpack.c.h.s8.bf16 %v2035
        %v2832 = vunpack.c.l.s8.bf16 %v2036
        %v2833 = vunpack.c.l.s8.bf16 %v2037
        %v2834 = vunpack.c.l.s8.bf16 %v2038
        %v2835 = vunpack.c.l.s8.bf16 %v2039
        %v2836 = vunpack.c.h.s8.bf16 %v2036
        %v2837 = vunpack.c.h.s8.bf16 %v2037
        %v2838 = vunpack.c.h.s8.bf16 %v2038
        %v2839 = vunpack.c.h.s8.bf16 %v2039
        %v2840 = vunpack.c.l.s8.bf16 %v2040
        %v2841 = vunpack.c.l.s8.bf16 %v2041
        %v2842 = vunpack.c.l.s8.bf16 %v2042
        %v2843 = vunpack.c.l.s8.bf16 %v2043
        %v2844 = vunpack.c.h.s8.bf16 %v2040
        %v2845 = vunpack.c.h.s8.bf16 %v2041
        %v2846 = vunpack.c.h.s8.bf16 %v2042
        %v2847 = vunpack.c.h.s8.bf16 %v2043
        %v2848 = vunpack.c.l.s8.bf16 %v2044
        %v2849 = vunpack.c.l.s8.bf16 %v2045
        %v2850 = vunpack.c.l.s8.bf16 %v2046
        %v2851 = vunpack.c.l.s8.bf16 %v2047
        %v2852 = vunpack.c.h.s8.bf16 %v2044
        %v2853 = vunpack.c.h.s8.bf16 %v2045
        %v2854 = vunpack.c.h.s8.bf16 %v2046
        %v2855 = vunpack.c.h.s8.bf16 %v2047
        %v2856 = vunpack.c.l.s8.bf16 %v2048
        %v2857 = vunpack.c.l.s8.bf16 %v2049
        %v2858 = vunpack.c.l.s8.bf16 %v2050
        %v2859 = vunpack.c.l.s8.bf16 %v2051
        %v2860 = vunpack.c.h.s8.bf16 %v2048
        %v2861 = vunpack.c.h.s8.bf16 %v2049
        %v2862 = vunpack.c.h.s8.bf16 %v2050
        %v2863 = vunpack.c.h.s8.bf16 %v2051
        %v2864 = vunpack.c.l.s8.bf16 %v2052
        %v2865 = vunpack.c.l.s8.bf16 %v2053
        %v2866 = vunpack.c.l.s8.bf16 %v2054
        %v2867 = vunpack.c.l.s8.bf16 %v2055
        %v2868 = vunpack.c.h.s8.bf16 %v2052
        %v2869 = vunpack.c.h.s8.bf16 %v2053
        %v2870 = vunpack.c.h.s8.bf16 %v2054
        %v2871 = vunpack.c.h.s8.bf16 %v2055
        %v2872 = vunpack.c.l.s8.bf16 %v2056
        %v2873 = vunpack.c.l.s8.bf16 %v2057
        %v2874 = vunpack.c.l.s8.bf16 %v2058
        %v2875 = vunpack.c.l.s8.bf16 %v2059
        %v2876 = vunpack.c.h.s8.bf16 %v2056
        %v2877 = vunpack.c.h.s8.bf16 %v2057
        %v2878 = vunpack.c.h.s8.bf16 %v2058
        %v2879 = vunpack.c.h.s8.bf16 %v2059
        %v2880 = vunpack.c.l.s8.bf16 %v2060
        %v2881 = vunpack.c.l.s8.bf16 %v2061
        %v2882 = vunpack.c.l.s8.bf16 %v2062
        %v2883 = vunpack.c.l.s8.bf16 %v2063
        %v2884 = vunpack.c.h.s8.bf16 %v2060
        %v2885 = vunpack.c.h.s8.bf16 %v2061
        %v2886 = vunpack.c.h.s8.bf16 %v2062
        %v2887 = vunpack.c.h.s8.bf16 %v2063
        %v2888 = vunpack.c.l.s8.bf16 %v2064
        %v2889 = vunpack.c.l.s8.bf16 %v2065
        %v2890 = vunpack.c.l.s8.bf16 %v2066
        %v2891 = vunpack.c.l.s8.bf16 %v2067
        %v2892 = vunpack.c.h.s8.bf16 %v2064
        %v2893 = vunpack.c.h.s8.bf16 %v2065
        %v2894 = vunpack.c.h.s8.bf16 %v2066
        %v2895 = vunpack.c.h.s8.bf16 %v2067
        %v2896 = vunpack.c.l.s8.bf16 %v2068
        %v2897 = vunpack.c.l.s8.bf16 %v2069
        %v2898 = vunpack.c.l.s8.bf16 %v2070
        %v2899 = vunpack.c.l.s8.bf16 %v2071
        %v2900 = vunpack.c.h.s8.bf16 %v2068
        %v2901 = vunpack.c.h.s8.bf16 %v2069
        %v2902 = vunpack.c.h.s8.bf16 %v2070
        %v2903 = vunpack.c.h.s8.bf16 %v2071
        %v2904 = vunpack.c.l.s8.bf16 %v2072
        %v2905 = vunpack.c.l.s8.bf16 %v2073
        %v2906 = vunpack.c.l.s8.bf16 %v2074
        %v2907 = vunpack.c.l.s8.bf16 %v2075
        %v2908 = vunpack.c.h.s8.bf16 %v2072
        %v2909 = vunpack.c.h.s8.bf16 %v2073
        %v2910 = vunpack.c.h.s8.bf16 %v2074
        %v2911 = vunpack.c.h.s8.bf16 %v2075
        %v2912 = vunpack.c.l.s8.bf16 %v2076
        %v2913 = vunpack.c.l.s8.bf16 %v2077
        %v2914 = vunpack.c.l.s8.bf16 %v2078
        %v2915 = vunpack.c.l.s8.bf16 %v2079
        %v2916 = vunpack.c.h.s8.bf16 %v2076
        %v2917 = vunpack.c.h.s8.bf16 %v2077
        %v2918 = vunpack.c.h.s8.bf16 %v2078
        %v2919 = vunpack.c.h.s8.bf16 %v2079
        %v2920 = vunpack.c.l.s8.bf16 %v2080
        %v2921 = vunpack.c.l.s8.bf16 %v2081
        %v2922 = vunpack.c.l.s8.bf16 %v2082
        %v2923 = vunpack.c.l.s8.bf16 %v2083
        %v2924 = vunpack.c.h.s8.bf16 %v2080
        %v2925 = vunpack.c.h.s8.bf16 %v2081
        %v2926 = vunpack.c.h.s8.bf16 %v2082
        %v2927 = vunpack.c.h.s8.bf16 %v2083
        %v2928 = vunpack.c.l.s8.bf16 %v2084
        %v2929 = vunpack.c.l.s8.bf16 %v2085
        %v2930 = vunpack.c.l.s8.bf16 %v2086
        %v2931 = vunpack.c.l.s8.bf16 %v2087
        %v2932 = vunpack.c.h.s8.bf16 %v2084
        %v2933 = vunpack.c.h.s8.bf16 %v2085
        %v2934 = vunpack.c.h.s8.bf16 %v2086
        %v2935 = vunpack.c.h.s8.bf16 %v2087
        %v2936 = vunpack.c.l.s8.bf16 %v2088
        %v2937 = vunpack.c.l.s8.bf16 %v2089
        %v2938 = vunpack.c.l.s8.bf16 %v2090
        %v2939 = vunpack.c.l.s8.bf16 %v2091
        %v2940 = vunpack.c.h.s8.bf16 %v2088
        %v2941 = vunpack.c.h.s8.bf16 %v2089
        %v2942 = vunpack.c.h.s8.bf16 %v2090
        %v2943 = vunpack.c.h.s8.bf16 %v2091
        %v2944 = vunpack.c.l.s8.bf16 %v2092
        %v2945 = vunpack.c.l.s8.bf16 %v2093
        %v2946 = vunpack.c.l.s8.bf16 %v2094
        %v2947 = vunpack.c.l.s8.bf16 %v2095
        %v2948 = vunpack.c.h.s8.bf16 %v2092
        %v2949 = vunpack.c.h.s8.bf16 %v2093
        %v2950 = vunpack.c.h.s8.bf16 %v2094
        %v2951 = vunpack.c.h.s8.bf16 %v2095
        %v2952 = vunpack.c.l.s8.bf16 %v2096
        %v2953 = vunpack.c.l.s8.bf16 %v2097
        %v2954 = vunpack.c.l.s8.bf16 %v2098
        %v2955 = vunpack.c.l.s8.bf16 %v2099
        %v2956 = vunpack.c.h.s8.bf16 %v2096
        %v2957 = vunpack.c.h.s8.bf16 %v2097
        %v2958 = vunpack.c.h.s8.bf16 %v2098
        %v2959 = vunpack.c.h.s8.bf16 %v2099
        %v2960 = vunpack.c.l.s8.bf16 %v2100
        %v2961 = vunpack.c.l.s8.bf16 %v2101
        %v2962 = vunpack.c.l.s8.bf16 %v2102
        %v2963 = vunpack.c.l.s8.bf16 %v2103
        %v2964 = vunpack.c.h.s8.bf16 %v2100
        %v2965 = vunpack.c.h.s8.bf16 %v2101
        %v2966 = vunpack.c.h.s8.bf16 %v2102
        %v2967 = vunpack.c.h.s8.bf16 %v2103
        %v2968 = vunpack.c.l.s8.bf16 %v2104
        %v2969 = vunpack.c.l.s8.bf16 %v2105
        %v2970 = vunpack.c.l.s8.bf16 %v2106
        %v2971 = vunpack.c.l.s8.bf16 %v2107
        %v2972 = vunpack.c.h.s8.bf16 %v2104
        %v2973 = vunpack.c.h.s8.bf16 %v2105
        %v2974 = vunpack.c.h.s8.bf16 %v2106
        %v2975 = vunpack.c.h.s8.bf16 %v2107
        %v2976 = vunpack.c.l.s8.bf16 %v2108
        %v2977 = vunpack.c.l.s8.bf16 %v2109
        %v2978 = vunpack.c.l.s8.bf16 %v2110
        %v2979 = vunpack.c.l.s8.bf16 %v2111
        %v2980 = vunpack.c.h.s8.bf16 %v2108
        %v2981 = vunpack.c.h.s8.bf16 %v2109
        %v2982 = vunpack.c.h.s8.bf16 %v2110
        %v2983 = vunpack.c.h.s8.bf16 %v2111
        %v2984 = vunpack.c.l.s8.bf16 %v2112
        %v2985 = vunpack.c.l.s8.bf16 %v2113
        %v2986 = vunpack.c.l.s8.bf16 %v2114
        %v2987 = vunpack.c.l.s8.bf16 %v2115
        %v2988 = vunpack.c.h.s8.bf16 %v2112
        %v2989 = vunpack.c.h.s8.bf16 %v2113
        %v2990 = vunpack.c.h.s8.bf16 %v2114
        %v2991 = vunpack.c.h.s8.bf16 %v2115
        %v2992 = vunpack.c.l.s8.bf16 %v2116
        %v2993 = vunpack.c.l.s8.bf16 %v2117
        %v2994 = vunpack.c.l.s8.bf16 %v2118
        %v2995 = vunpack.c.l.s8.bf16 %v2119
        %v2996 = vunpack.c.h.s8.bf16 %v2116
        %v2997 = vunpack.c.h.s8.bf16 %v2117
        %v2998 = vunpack.c.h.s8.bf16 %v2118
        %v2999 = vunpack.c.h.s8.bf16 %v2119
        %v3000 = vunpack.c.l.s8.bf16 %v2120
        %v3001 = vunpack.c.l.s8.bf16 %v2121
        %v3002 = vunpack.c.l.s8.bf16 %v2122
        %v3003 = vunpack.c.l.s8.bf16 %v2123
        %v3004 = vunpack.c.h.s8.bf16 %v2120
        %v3005 = vunpack.c.h.s8.bf16 %v2121
        %v3006 = vunpack.c.h.s8.bf16 %v2122
        %v3007 = vunpack.c.h.s8.bf16 %v2123
        %v3008 = vunpack.c.l.s8.bf16 %v2124
        %v3009 = vunpack.c.l.s8.bf16 %v2125
        %v3010 = vunpack.c.l.s8.bf16 %v2126
        %v3011 = vunpack.c.l.s8.bf16 %v2127
        %v3012 = vunpack.c.h.s8.bf16 %v2124
        %v3013 = vunpack.c.h.s8.bf16 %v2125
        %v3014 = vunpack.c.h.s8.bf16 %v2126
        %v3015 = vunpack.c.h.s8.bf16 %v2127
        %v3016 = vunpack.c.l.s8.bf16 %v2128
        %v3017 = vunpack.c.l.s8.bf16 %v2129
        %v3018 = vunpack.c.l.s8.bf16 %v2130
        %v3019 = vunpack.c.l.s8.bf16 %v2131
        %v3020 = vunpack.c.h.s8.bf16 %v2128
        %v3021 = vunpack.c.h.s8.bf16 %v2129
        %v3022 = vunpack.c.h.s8.bf16 %v2130
        %v3023 = vunpack.c.h.s8.bf16 %v2131
        %v3024 = vunpack.c.l.s8.bf16 %v2132
        %v3025 = vunpack.c.l.s8.bf16 %v2133
        %v3026 = vunpack.c.l.s8.bf16 %v2134
        %v3027 = vunpack.c.l.s8.bf16 %v2135
        %v3028 = vunpack.c.h.s8.bf16 %v2132
        %v3029 = vunpack.c.h.s8.bf16 %v2133
        %v3030 = vunpack.c.h.s8.bf16 %v2134
        %v3031 = vunpack.c.h.s8.bf16 %v2135
        %v3032 = vunpack.c.l.s8.bf16 %v2136
        %v3033 = vunpack.c.l.s8.bf16 %v2137
        %v3034 = vunpack.c.l.s8.bf16 %v2138
        %v3035 = vunpack.c.l.s8.bf16 %v2139
        %v3036 = vunpack.c.h.s8.bf16 %v2136
        %v3037 = vunpack.c.h.s8.bf16 %v2137
        %v3038 = vunpack.c.h.s8.bf16 %v2138
        %v3039 = vunpack.c.h.s8.bf16 %v2139
        %v3040 = vunpack.c.l.s8.bf16 %v2140
        %v3041 = vunpack.c.l.s8.bf16 %v2141
        %v3042 = vunpack.c.l.s8.bf16 %v2142
        %v3043 = vunpack.c.l.s8.bf16 %v2143
        %v3044 = vunpack.c.h.s8.bf16 %v2140
        %v3045 = vunpack.c.h.s8.bf16 %v2141
        %v3046 = vunpack.c.h.s8.bf16 %v2142
        %v3047 = vunpack.c.h.s8.bf16 %v2143
        %v3048 = vunpack.c.l.s8.bf16 %v2144
        %v3049 = vunpack.c.l.s8.bf16 %v2145
        %v3050 = vunpack.c.l.s8.bf16 %v2146
        %v3051 = vunpack.c.l.s8.bf16 %v2147
        %v3052 = vunpack.c.h.s8.bf16 %v2144
        %v3053 = vunpack.c.h.s8.bf16 %v2145
        %v3054 = vunpack.c.h.s8.bf16 %v2146
        %v3055 = vunpack.c.h.s8.bf16 %v2147
        %v3056 = vunpack.c.l.s8.bf16 %v2148
        %v3057 = vunpack.c.l.s8.bf16 %v2149
        %v3058 = vunpack.c.l.s8.bf16 %v2150
        %v3059 = vunpack.c.l.s8.bf16 %v2151
        %v3060 = vunpack.c.h.s8.bf16 %v2148
        %v3061 = vunpack.c.h.s8.bf16 %v2149
        %v3062 = vunpack.c.h.s8.bf16 %v2150
        %v3063 = vunpack.c.h.s8.bf16 %v2151
        %v3064 = vunpack.c.l.s8.bf16 %v2152
        %v3065 = vunpack.c.l.s8.bf16 %v2153
        %v3066 = vunpack.c.l.s8.bf16 %v2154
        %v3067 = vunpack.c.l.s8.bf16 %v2155
        %v3068 = vunpack.c.h.s8.bf16 %v2152
        %v3069 = vunpack.c.h.s8.bf16 %v2153
        %v3070 = vunpack.c.h.s8.bf16 %v2154
        %v3071 = vunpack.c.h.s8.bf16 %v2155
        %v3072 = vunpack.c.l.s8.bf16 %v2156
        %v3073 = vunpack.c.l.s8.bf16 %v2157
        %v3074 = vunpack.c.l.s8.bf16 %v2158
        %v3075 = vunpack.c.l.s8.bf16 %v2159
        %v3076 = vunpack.c.h.s8.bf16 %v2156
        %v3077 = vunpack.c.h.s8.bf16 %v2157
        %v3078 = vunpack.c.h.s8.bf16 %v2158
        %v3079 = vunpack.c.h.s8.bf16 %v2159
        %v3080 = vunpack.c.l.s8.bf16 %v2160
        %v3081 = vunpack.c.l.s8.bf16 %v2161
        %v3082 = vunpack.c.l.s8.bf16 %v2162
        %v3083 = vunpack.c.l.s8.bf16 %v2163
        %v3084 = vunpack.c.h.s8.bf16 %v2160
        %v3085 = vunpack.c.h.s8.bf16 %v2161
        %v3086 = vunpack.c.h.s8.bf16 %v2162
        %v3087 = vunpack.c.h.s8.bf16 %v2163
        %v3088 = vunpack.c.l.s8.bf16 %v2164
        %v3089 = vunpack.c.l.s8.bf16 %v2165
        %v3090 = vunpack.c.l.s8.bf16 %v2166
        %v3091 = vunpack.c.l.s8.bf16 %v2167
        %v3092 = vunpack.c.h.s8.bf16 %v2164
        %v3093 = vunpack.c.h.s8.bf16 %v2165
        %v3094 = vunpack.c.h.s8.bf16 %v2166
        %v3095 = vunpack.c.h.s8.bf16 %v2167
        %v3096 = vunpack.c.l.s8.bf16 %v2168
        %v3097 = vunpack.c.l.s8.bf16 %v2169
        %v3098 = vunpack.c.l.s8.bf16 %v2170
        %v3099 = vunpack.c.l.s8.bf16 %v2171
        %v3100 = vunpack.c.h.s8.bf16 %v2168
        %v3101 = vunpack.c.h.s8.bf16 %v2169
        %v3102 = vunpack.c.h.s8.bf16 %v2170
        %v3103 = vunpack.c.h.s8.bf16 %v2171
        %v3104 = vunpack.c.l.s8.bf16 %v2172
        %v3105 = vunpack.c.l.s8.bf16 %v2173
        %v3106 = vunpack.c.l.s8.bf16 %v2174
        %v3107 = vunpack.c.l.s8.bf16 %v2175
        %v3108 = vunpack.c.h.s8.bf16 %v2172
        %v3109 = vunpack.c.h.s8.bf16 %v2173
        %v3110 = vunpack.c.h.s8.bf16 %v2174
        %v3111 = vunpack.c.h.s8.bf16 %v2175
        %v3112 = vunpack.c.l.s8.bf16 %v2176
        %v3113 = vunpack.c.l.s8.bf16 %v2177
        %v3114 = vunpack.c.l.s8.bf16 %v2178
        %v3115 = vunpack.c.l.s8.bf16 %v2179
        %v3116 = vunpack.c.h.s8.bf16 %v2176
        %v3117 = vunpack.c.h.s8.bf16 %v2177
        %v3118 = vunpack.c.h.s8.bf16 %v2178
        %v3119 = vunpack.c.h.s8.bf16 %v2179
        %v3120 = vunpack.c.l.s8.bf16 %v2180
        %v3121 = vunpack.c.l.s8.bf16 %v2181
        %v3122 = vunpack.c.l.s8.bf16 %v2182
        %v3123 = vunpack.c.l.s8.bf16 %v2183
        %v3124 = vunpack.c.h.s8.bf16 %v2180
        %v3125 = vunpack.c.h.s8.bf16 %v2181
        %v3126 = vunpack.c.h.s8.bf16 %v2182
        %v3127 = vunpack.c.h.s8.bf16 %v2183
        %v3128 = vunpack.c.l.s8.bf16 %v2184
        %v3129 = vunpack.c.l.s8.bf16 %v2185
        %v3130 = vunpack.c.l.s8.bf16 %v2186
        %v3131 = vunpack.c.l.s8.bf16 %v2187
        %v3132 = vunpack.c.h.s8.bf16 %v2184
        %v3133 = vunpack.c.h.s8.bf16 %v2185
        %v3134 = vunpack.c.h.s8.bf16 %v2186
        %v3135 = vunpack.c.h.s8.bf16 %v2187
        %v3136 = vunpack.c.l.s8.bf16 %v2188
        %v3137 = vunpack.c.l.s8.bf16 %v2189
        %v3138 = vunpack.c.l.s8.bf16 %v2190
        %v3139 = vunpack.c.l.s8.bf16 %v2191
        %v3140 = vunpack.c.h.s8.bf16 %v2188
        %v3141 = vunpack.c.h.s8.bf16 %v2189
        %v3142 = vunpack.c.h.s8.bf16 %v2190
        %v3143 = vunpack.c.h.s8.bf16 %v2191
        %v3144 = vunpack.c.l.s8.bf16 %v2192
        %v3145 = vunpack.c.l.s8.bf16 %v2193
        %v3146 = vunpack.c.l.s8.bf16 %v2194
        %v3147 = vunpack.c.l.s8.bf16 %v2195
        %v3148 = vunpack.c.h.s8.bf16 %v2192
        %v3149 = vunpack.c.h.s8.bf16 %v2193
        %v3150 = vunpack.c.h.s8.bf16 %v2194
        %v3151 = vunpack.c.h.s8.bf16 %v2195
        %v3152 = vunpack.c.l.s8.bf16 %v2196
        %v3153 = vunpack.c.l.s8.bf16 %v2197
        %v3154 = vunpack.c.l.s8.bf16 %v2198
        %v3155 = vunpack.c.l.s8.bf16 %v2199
        %v3156 = vunpack.c.h.s8.bf16 %v2196
        %v3157 = vunpack.c.h.s8.bf16 %v2197
        %v3158 = vunpack.c.h.s8.bf16 %v2198
        %v3159 = vunpack.c.h.s8.bf16 %v2199
        %v3160 = vunpack.c.l.s8.bf16 %v2200
        %v3161 = vunpack.c.l.s8.bf16 %v2201
        %v3162 = vunpack.c.l.s8.bf16 %v2202
        %v3163 = vunpack.c.l.s8.bf16 %v2203
        %v3164 = vunpack.c.h.s8.bf16 %v2200
        %v3165 = vunpack.c.h.s8.bf16 %v2201
        %v3166 = vunpack.c.h.s8.bf16 %v2202
        %v3167 = vunpack.c.h.s8.bf16 %v2203
        %v3168 = vunpack.c.l.s8.bf16 %v2204
        %v3169 = vunpack.c.l.s8.bf16 %v2205
        %v3170 = vunpack.c.l.s8.bf16 %v2206
        %v3171 = vunpack.c.l.s8.bf16 %v2207
        %v3172 = vunpack.c.h.s8.bf16 %v2204
        %v3173 = vunpack.c.h.s8.bf16 %v2205
        %v3174 = vunpack.c.h.s8.bf16 %v2206
        %v3175 = vunpack.c.h.s8.bf16 %v2207
        %v3176 = vunpack.c.l.s8.bf16 %v2208
        %v3177 = vunpack.c.l.s8.bf16 %v2209
        %v3178 = vunpack.c.l.s8.bf16 %v2210
        %v3179 = vunpack.c.l.s8.bf16 %v2211
        %v3180 = vunpack.c.h.s8.bf16 %v2208
        %v3181 = vunpack.c.h.s8.bf16 %v2209
        %v3182 = vunpack.c.h.s8.bf16 %v2210
        %v3183 = vunpack.c.h.s8.bf16 %v2211
        %v3184 = vunpack.c.l.s8.bf16 %v2212
        %v3185 = vunpack.c.l.s8.bf16 %v2213
        %v3186 = vunpack.c.l.s8.bf16 %v2214
        %v3187 = vunpack.c.l.s8.bf16 %v2215
        %v3188 = vunpack.c.h.s8.bf16 %v2212
        %v3189 = vunpack.c.h.s8.bf16 %v2213
        %v3190 = vunpack.c.h.s8.bf16 %v2214
        %v3191 = vunpack.c.h.s8.bf16 %v2215
        %v3192 = vunpack.c.l.s8.bf16 %v2216
        %v3193 = vunpack.c.l.s8.bf16 %v2217
        %v3194 = vunpack.c.l.s8.bf16 %v2218
        %v3195 = vunpack.c.l.s8.bf16 %v2219
        %v3196 = vunpack.c.h.s8.bf16 %v2216
        %v3197 = vunpack.c.h.s8.bf16 %v2217
        %v3198 = vunpack.c.h.s8.bf16 %v2218
        %v3199 = vunpack.c.h.s8.bf16 %v2219
        %v3200 = vunpack.c.l.s8.bf16 %v2220
        %v3201 = vunpack.c.l.s8.bf16 %v2221
        %v3202 = vunpack.c.l.s8.bf16 %v2222
        %v3203 = vunpack.c.l.s8.bf16 %v2223
        %v3204 = vunpack.c.h.s8.bf16 %v2220
        %v3205 = vunpack.c.h.s8.bf16 %v2221
        %v3206 = vunpack.c.h.s8.bf16 %v2222
        %v3207 = vunpack.c.h.s8.bf16 %v2223
        %v3208 = vunpack.c.l.s8.bf16 %v2224
        %v3209 = vunpack.c.l.s8.bf16 %v2225
        %v3210 = vunpack.c.l.s8.bf16 %v2226
        %v3211 = vunpack.c.l.s8.bf16 %v2227
        %v3212 = vunpack.c.h.s8.bf16 %v2224
        %v3213 = vunpack.c.h.s8.bf16 %v2225
        %v3214 = vunpack.c.h.s8.bf16 %v2226
        %v3215 = vunpack.c.h.s8.bf16 %v2227
        %v3216 = vunpack.c.l.s8.bf16 %v2228
        %v3217 = vunpack.c.l.s8.bf16 %v2229
        %v3218 = vunpack.c.l.s8.bf16 %v2230
        %v3219 = vunpack.c.l.s8.bf16 %v2231
        %v3220 = vunpack.c.h.s8.bf16 %v2228
        %v3221 = vunpack.c.h.s8.bf16 %v2229
        %v3222 = vunpack.c.h.s8.bf16 %v2230
        %v3223 = vunpack.c.h.s8.bf16 %v2231
        %v3224 = vunpack.c.l.s8.bf16 %v2232
        %v3225 = vunpack.c.l.s8.bf16 %v2233
        %v3226 = vunpack.c.l.s8.bf16 %v2234
        %v3227 = vunpack.c.l.s8.bf16 %v2235
        %v3228 = vunpack.c.h.s8.bf16 %v2232
        %v3229 = vunpack.c.h.s8.bf16 %v2233
        %v3230 = vunpack.c.h.s8.bf16 %v2234
        %v3231 = vunpack.c.h.s8.bf16 %v2235
        %v3232 = vunpack.c.l.s8.bf16 %v2236
        %v3233 = vunpack.c.l.s8.bf16 %v2237
        %v3234 = vunpack.c.l.s8.bf16 %v2238
        %v3235 = vunpack.c.l.s8.bf16 %v2239
        %v3236 = vunpack.c.h.s8.bf16 %v2236
        %v3237 = vunpack.c.h.s8.bf16 %v2237
        %v3238 = vunpack.c.h.s8.bf16 %v2238
        %v3239 = vunpack.c.h.s8.bf16 %v2239
        %v3240 = vunpack.c.l.s8.bf16 %v2240
        %v3241 = vunpack.c.l.s8.bf16 %v2241
        %v3242 = vunpack.c.l.s8.bf16 %v2242
        %v3243 = vunpack.c.l.s8.bf16 %v2243
        %v3244 = vunpack.c.h.s8.bf16 %v2240
        %v3245 = vunpack.c.h.s8.bf16 %v2241
        %v3246 = vunpack.c.h.s8.bf16 %v2242
        %v3247 = vunpack.c.h.s8.bf16 %v2243
        %v3248 = vunpack.c.l.s8.bf16 %v2244
        %v3249 = vunpack.c.l.s8.bf16 %v2245
        %v3250 = vunpack.c.l.s8.bf16 %v2246
        %v3251 = vunpack.c.l.s8.bf16 %v2247
        %v3252 = vunpack.c.h.s8.bf16 %v2244
        %v3253 = vunpack.c.h.s8.bf16 %v2245
        %v3254 = vunpack.c.h.s8.bf16 %v2246
        %v3255 = vunpack.c.h.s8.bf16 %v2247
        %v3256 = vunpack.c.l.s8.bf16 %v2248
        %v3257 = vunpack.c.l.s8.bf16 %v2249
        %v3258 = vunpack.c.l.s8.bf16 %v2250
        %v3259 = vunpack.c.l.s8.bf16 %v2251
        %v3260 = vunpack.c.h.s8.bf16 %v2248
        %v3261 = vunpack.c.h.s8.bf16 %v2249
        %v3262 = vunpack.c.h.s8.bf16 %v2250
        %v3263 = vunpack.c.h.s8.bf16 %v2251
        %v3264 = vunpack.c.l.s8.bf16 %v2252
        %v3265 = vunpack.c.l.s8.bf16 %v2253
        %v3266 = vunpack.c.l.s8.bf16 %v2254
        %v3267 = vunpack.c.l.s8.bf16 %v2255
        %v3268 = vunpack.c.h.s8.bf16 %v2252
        %v3269 = vunpack.c.h.s8.bf16 %v2253
        %v3270 = vunpack.c.h.s8.bf16 %v2254
        %v3271 = vunpack.c.h.s8.bf16 %v2255
        %v3272 = vunpack.c.l.s8.bf16 %v2256
        %v3273 = vunpack.c.l.s8.bf16 %v2257
        %v3274 = vunpack.c.l.s8.bf16 %v2258
        %v3275 = vunpack.c.l.s8.bf16 %v2259
        %v3276 = vunpack.c.h.s8.bf16 %v2256
        %v3277 = vunpack.c.h.s8.bf16 %v2257
        %v3278 = vunpack.c.h.s8.bf16 %v2258
        %v3279 = vunpack.c.h.s8.bf16 %v2259
        %v3280 = vunpack.c.l.s8.bf16 %v2260
        %v3281 = vunpack.c.l.s8.bf16 %v2261
        %v3282 = vunpack.c.l.s8.bf16 %v2262
        %v3283 = vunpack.c.l.s8.bf16 %v2263
        %v3284 = vunpack.c.h.s8.bf16 %v2260
        %v3285 = vunpack.c.h.s8.bf16 %v2261
        %v3286 = vunpack.c.h.s8.bf16 %v2262
        %v3287 = vunpack.c.h.s8.bf16 %v2263
        %v3288 = vld [vmem:[%s397] sm:$0xff]
        %3289 = vmatprep.subr.bf16.mxu0 %v2293
        %3290 = vmatpush1.bf16.msra.mxu0 %v2292
        %3291 = vmatprep.subr.bf16.mxu0 %v2289
        %3292 = vmatpush1.bf16.msra.mxu0 %v2288
        %3293 = vmatprep.subr.bf16.mxu0 %v2285
        %3294 = vmatpush1.bf16.msra.mxu0 %v2284
        %3295 = vmatprep.subr.bf16.mxu0 %v2281
        %3296 = vmatpush1.bf16.msra.mxu0 %v2280
        %3297 = vmatprep.subr.bf16.mxu0 %v2277
        %3298 = vmatpush1.bf16.msra.mxu0 %v2276
        %3299 = vmatprep.subr.bf16.mxu0 %v2273
        %3300 = vmatpush1.bf16.msra.mxu0 %v2272
        %3301 = vmatprep.subr.bf16.mxu0 %v2269
        %3302 = vmatpush1.bf16.msra.mxu0 %v2268
        %3303 = vmatprep.subr.bf16.mxu0 %v2265
        %3304 = vmatpush1.bf16.msra.mxu0 %v2264
        %3305 = vmatprep.subr.bf16.mxu0 %v2325
        %3306 = vmatpush2.bf16.msra.mxu0 %v2324
        %3307 = vmatprep.subr.bf16.mxu0 %v2321
        %3308 = vmatpush2.bf16.msra.mxu0 %v2320
        %3309 = vmatprep.subr.bf16.mxu0 %v2317
        %3310 = vmatpush2.bf16.msra.mxu0 %v2316
        %3311 = vmatprep.subr.bf16.mxu0 %v2313
        %3312 = vmatpush2.bf16.msra.mxu0 %v2312
        %3313 = vmatprep.subr.bf16.mxu0 %v2309
        %3314 = vmatpush2.bf16.msra.mxu0 %v2308
        %3315 = vmatprep.subr.bf16.mxu0 %v2305
        %3316 = vmatpush2.bf16.msra.mxu0 %v2304
        %3317 = vmatprep.subr.bf16.mxu0 %v2301
        %3318 = vmatpush2.bf16.msra.mxu0 %v2300
        %3319 = vmatprep.subr.bf16.mxu0 %v2297
        %3320 = vmatpush2.bf16.msra.mxu0 %v2296
        %3321 = vmatprep.mubr.bf16.mxu0 %v1721
        %3322 = vmatmul.mubr.bf16.gmra.mxu0 %v1720
        %v3323 = vpop.f32.mrf.mxu0
        %v3324 = vadd.f32 0.0, %v3323
        %v3325 = vpop.f32.mrf.mxu0
        %v3326 = vadd.f32 0.0, %v3325
        %v3327 = vpop.f32.mrf.mxu0
        %v3328 = vpop.f32.mrf.mxu0
        %3329 = vdwg.mxu0
        %3330 = vmatprep.subr.bf16.mxu0 %v2357
        %3331 = vmatpush1.bf16.msra.mxu0 %v2356
        %3332 = vmatprep.subr.bf16.mxu0 %v2353
        %3333 = vmatpush1.bf16.msra.mxu0 %v2352
        %3334 = vmatprep.subr.bf16.mxu0 %v2349
        %3335 = vmatpush1.bf16.msra.mxu0 %v2348
        %3336 = vmatprep.subr.bf16.mxu0 %v2345
        %3337 = vmatpush1.bf16.msra.mxu0 %v2344
        %3338 = vmatprep.subr.bf16.mxu0 %v2341
        %3339 = vmatpush1.bf16.msra.mxu0 %v2340
        %3340 = vmatprep.subr.bf16.mxu0 %v2337
        %3341 = vmatpush1.bf16.msra.mxu0 %v2336
        %3342 = vmatprep.subr.bf16.mxu0 %v2333
        %3343 = vmatpush1.bf16.msra.mxu0 %v2332
        %3344 = vmatprep.subr.bf16.mxu0 %v2329
        %3345 = vmatpush1.bf16.msra.mxu0 %v2328
        %3346 = vmatprep.subr.bf16.mxu0 %v2389
        %3347 = vmatpush2.bf16.msra.mxu0 %v2388
        %3348 = vmatprep.subr.bf16.mxu0 %v2385
        %3349 = vmatpush2.bf16.msra.mxu0 %v2384
        %3350 = vmatprep.subr.bf16.mxu0 %v2381
        %3351 = vmatpush2.bf16.msra.mxu0 %v2380
        %3352 = vmatprep.subr.bf16.mxu0 %v2377
        %3353 = vmatpush2.bf16.msra.mxu0 %v2376
        %3354 = vmatprep.subr.bf16.mxu0 %v2373
        %3355 = vmatpush2.bf16.msra.mxu0 %v2372
        %3356 = vmatprep.subr.bf16.mxu0 %v2369
        %3357 = vmatpush2.bf16.msra.mxu0 %v2368
        %3358 = vmatprep.subr.bf16.mxu0 %v2365
        %3359 = vmatpush2.bf16.msra.mxu0 %v2364
        %3360 = vmatprep.subr.bf16.mxu0 %v2361
        %3361 = vmatpush2.bf16.msra.mxu0 %v2360
        %3362 = vmatprep.mubr.bf16.mxu0 %v1723
        %3363 = vmatmul.mubr.bf16.gmra.mxu0 %v1722
        %v3364 = vpop.f32.mrf.mxu0
        %v3365 = vadd.f32 %v3324, %v3364
        %v3366 = vpop.f32.mrf.mxu0
        %v3367 = vadd.f32 %v3326, %v3366
        %v3368 = vpop.f32.mrf.mxu0
        %v3369 = vpop.f32.mrf.mxu0
        %3370 = vdwg.mxu0
        %3371 = vmatprep.subr.bf16.mxu0 %v2421
        %3372 = vmatpush1.bf16.msra.mxu0 %v2420
        %3373 = vmatprep.subr.bf16.mxu0 %v2417
        %3374 = vmatpush1.bf16.msra.mxu0 %v2416
        %3375 = vmatprep.subr.bf16.mxu0 %v2413
        %3376 = vmatpush1.bf16.msra.mxu0 %v2412
        %3377 = vmatprep.subr.bf16.mxu0 %v2409
        %3378 = vmatpush1.bf16.msra.mxu0 %v2408
        %3379 = vmatprep.subr.bf16.mxu0 %v2405
        %3380 = vmatpush1.bf16.msra.mxu0 %v2404
        %3381 = vmatprep.subr.bf16.mxu0 %v2401
        %3382 = vmatpush1.bf16.msra.mxu0 %v2400
        %3383 = vmatprep.subr.bf16.mxu0 %v2397
        %3384 = vmatpush1.bf16.msra.mxu0 %v2396
        %3385 = vmatprep.subr.bf16.mxu0 %v2393
        %3386 = vmatpush1.bf16.msra.mxu0 %v2392
        %3387 = vmatprep.subr.bf16.mxu0 %v2453
        %3388 = vmatpush2.bf16.msra.mxu0 %v2452
        %3389 = vmatprep.subr.bf16.mxu0 %v2449
        %3390 = vmatpush2.bf16.msra.mxu0 %v2448
        %3391 = vmatprep.subr.bf16.mxu0 %v2445
        %3392 = vmatpush2.bf16.msra.mxu0 %v2444
        %3393 = vmatprep.subr.bf16.mxu0 %v2441
        %3394 = vmatpush2.bf16.msra.mxu0 %v2440
        %3395 = vmatprep.subr.bf16.mxu0 %v2437
        %3396 = vmatpush2.bf16.msra.mxu0 %v2436
        %3397 = vmatprep.subr.bf16.mxu0 %v2433
        %3398 = vmatpush2.bf16.msra.mxu0 %v2432
        %3399 = vmatprep.subr.bf16.mxu0 %v2429
        %3400 = vmatpush2.bf16.msra.mxu0 %v2428
        %3401 = vmatprep.subr.bf16.mxu0 %v2425
        %3402 = vmatpush2.bf16.msra.mxu0 %v2424
        %3403 = vmatprep.mubr.bf16.mxu0 %v1725
        %3404 = vmatmul.mubr.bf16.gmra.mxu0 %v1724
        %v3405 = vpop.f32.mrf.mxu0
        %v3406 = vadd.f32 %v3365, %v3405
        %v3407 = vpop.f32.mrf.mxu0
        %v3408 = vadd.f32 %v3367, %v3407
        %v3409 = vpop.f32.mrf.mxu0
        %v3410 = vpop.f32.mrf.mxu0
        %3411 = vdwg.mxu0
        %3412 = vmatprep.subr.bf16.mxu0 %v2485
        %3413 = vmatpush1.bf16.msra.mxu0 %v2484
        %3414 = vmatprep.subr.bf16.mxu0 %v2481
        %3415 = vmatpush1.bf16.msra.mxu0 %v2480
        %3416 = vmatprep.subr.bf16.mxu0 %v2477
        %3417 = vmatpush1.bf16.msra.mxu0 %v2476
        %3418 = vmatprep.subr.bf16.mxu0 %v2473
        %3419 = vmatpush1.bf16.msra.mxu0 %v2472
        %3420 = vmatprep.subr.bf16.mxu0 %v2469
        %3421 = vmatpush1.bf16.msra.mxu0 %v2468
        %3422 = vmatprep.subr.bf16.mxu0 %v2465
        %3423 = vmatpush1.bf16.msra.mxu0 %v2464
        %3424 = vmatprep.subr.bf16.mxu0 %v2461
        %3425 = vmatpush1.bf16.msra.mxu0 %v2460
        %3426 = vmatprep.subr.bf16.mxu0 %v2457
        %3427 = vmatpush1.bf16.msra.mxu0 %v2456
        %3428 = vmatprep.subr.bf16.mxu0 %v2517
        %3429 = vmatpush2.bf16.msra.mxu0 %v2516
        %3430 = vmatprep.subr.bf16.mxu0 %v2513
        %3431 = vmatpush2.bf16.msra.mxu0 %v2512
        %3432 = vmatprep.subr.bf16.mxu0 %v2509
        %3433 = vmatpush2.bf16.msra.mxu0 %v2508
        %3434 = vmatprep.subr.bf16.mxu0 %v2505
        %3435 = vmatpush2.bf16.msra.mxu0 %v2504
        %3436 = vmatprep.subr.bf16.mxu0 %v2501
        %3437 = vmatpush2.bf16.msra.mxu0 %v2500
        %3438 = vmatprep.subr.bf16.mxu0 %v2497
        %3439 = vmatpush2.bf16.msra.mxu0 %v2496
        %3440 = vmatprep.subr.bf16.mxu0 %v2493
        %3441 = vmatpush2.bf16.msra.mxu0 %v2492
        %3442 = vmatprep.subr.bf16.mxu0 %v2489
        %3443 = vmatpush2.bf16.msra.mxu0 %v2488
        %3444 = vmatprep.mubr.bf16.mxu0 %v1727
        %3445 = vmatmul.mubr.bf16.gmra.mxu0 %v1726
        %v3446 = vpop.f32.mrf.mxu0
        %v3447 = vadd.f32 %v3406, %v3446
        %v3448 = vpop.f32.mrf.mxu0
        %v3449 = vadd.f32 %v3408, %v3448
        %v3450 = vpop.f32.mrf.mxu0
        %v3451 = vpop.f32.mrf.mxu0
        %3452 = vdwg.mxu0
        %3453 = vmatprep.subr.bf16.mxu0 %v2549
        %3454 = vmatpush1.bf16.msra.mxu0 %v2548
        %3455 = vmatprep.subr.bf16.mxu0 %v2545
        %3456 = vmatpush1.bf16.msra.mxu0 %v2544
        %3457 = vmatprep.subr.bf16.mxu0 %v2541
        %3458 = vmatpush1.bf16.msra.mxu0 %v2540
        %3459 = vmatprep.subr.bf16.mxu0 %v2537
        %3460 = vmatpush1.bf16.msra.mxu0 %v2536
        %3461 = vmatprep.subr.bf16.mxu0 %v2533
        %3462 = vmatpush1.bf16.msra.mxu0 %v2532
        %3463 = vmatprep.subr.bf16.mxu0 %v2529
        %3464 = vmatpush1.bf16.msra.mxu0 %v2528
        %3465 = vmatprep.subr.bf16.mxu0 %v2525
        %3466 = vmatpush1.bf16.msra.mxu0 %v2524
        %3467 = vmatprep.subr.bf16.mxu0 %v2521
        %3468 = vmatpush1.bf16.msra.mxu0 %v2520
        %3469 = vmatprep.subr.bf16.mxu0 %v2581
        %3470 = vmatpush2.bf16.msra.mxu0 %v2580
        %3471 = vmatprep.subr.bf16.mxu0 %v2577
        %3472 = vmatpush2.bf16.msra.mxu0 %v2576
        %3473 = vmatprep.subr.bf16.mxu0 %v2573
        %3474 = vmatpush2.bf16.msra.mxu0 %v2572
        %3475 = vmatprep.subr.bf16.mxu0 %v2569
        %3476 = vmatpush2.bf16.msra.mxu0 %v2568
        %3477 = vmatprep.subr.bf16.mxu0 %v2565
        %3478 = vmatpush2.bf16.msra.mxu0 %v2564
        %3479 = vmatprep.subr.bf16.mxu0 %v2561
        %3480 = vmatpush2.bf16.msra.mxu0 %v2560
        %3481 = vmatprep.subr.bf16.mxu0 %v2557
        %3482 = vmatpush2.bf16.msra.mxu0 %v2556
        %3483 = vmatprep.subr.bf16.mxu0 %v2553
        %3484 = vmatpush2.bf16.msra.mxu0 %v2552
        %3485 = vmatprep.mubr.bf16.mxu0 %v1729
        %3486 = vmatmul.mubr.bf16.gmra.mxu0 %v1728
        %v3487 = vpop.f32.mrf.mxu0
        %v3488 = vadd.f32 %v3447, %v3487
        %v3489 = vpop.f32.mrf.mxu0
        %v3490 = vadd.f32 %v3449, %v3489
        %v3491 = vpop.f32.mrf.mxu0
        %v3492 = vpop.f32.mrf.mxu0
        %3493 = vdwg.mxu0
        %3494 = vmatprep.subr.bf16.mxu0 %v2613
        %3495 = vmatpush1.bf16.msra.mxu0 %v2612
        %3496 = vmatprep.subr.bf16.mxu0 %v2609
        %3497 = vmatpush1.bf16.msra.mxu0 %v2608
        %3498 = vmatprep.subr.bf16.mxu0 %v2605
        %3499 = vmatpush1.bf16.msra.mxu0 %v2604
        %3500 = vmatprep.subr.bf16.mxu0 %v2601
        %3501 = vmatpush1.bf16.msra.mxu0 %v2600
        %3502 = vmatprep.subr.bf16.mxu0 %v2597
        %3503 = vmatpush1.bf16.msra.mxu0 %v2596
        %3504 = vmatprep.subr.bf16.mxu0 %v2593
        %3505 = vmatpush1.bf16.msra.mxu0 %v2592
        %3506 = vmatprep.subr.bf16.mxu0 %v2589
        %3507 = vmatpush1.bf16.msra.mxu0 %v2588
        %3508 = vmatprep.subr.bf16.mxu0 %v2585
        %3509 = vmatpush1.bf16.msra.mxu0 %v2584
        %3510 = vmatprep.subr.bf16.mxu0 %v2645
        %3511 = vmatpush2.bf16.msra.mxu0 %v2644
        %3512 = vmatprep.subr.bf16.mxu0 %v2641
        %3513 = vmatpush2.bf16.msra.mxu0 %v2640
        %3514 = vmatprep.subr.bf16.mxu0 %v2637
        %3515 = vmatpush2.bf16.msra.mxu0 %v2636
        %3516 = vmatprep.subr.bf16.mxu0 %v2633
        %3517 = vmatpush2.bf16.msra.mxu0 %v2632
        %3518 = vmatprep.subr.bf16.mxu0 %v2629
        %3519 = vmatpush2.bf16.msra.mxu0 %v2628
        %3520 = vmatprep.subr.bf16.mxu0 %v2625
        %3521 = vmatpush2.bf16.msra.mxu0 %v2624
        %3522 = vmatprep.subr.bf16.mxu0 %v2621
        %3523 = vmatpush2.bf16.msra.mxu0 %v2620
        %3524 = vmatprep.subr.bf16.mxu0 %v2617
        %3525 = vmatpush2.bf16.msra.mxu0 %v2616
        %3526 = vmatprep.mubr.bf16.mxu0 %v1731
        %3527 = vmatmul.mubr.bf16.gmra.mxu0 %v1730
        %v3528 = vpop.f32.mrf.mxu0
        %v3529 = vadd.f32 %v3488, %v3528
        %v3530 = vpop.f32.mrf.mxu0
        %v3531 = vadd.f32 %v3490, %v3530
        %v3532 = vpop.f32.mrf.mxu0
        %v3533 = vpop.f32.mrf.mxu0
        %3534 = vdwg.mxu0
        %3535 = vmatprep.subr.bf16.mxu0 %v2677
        %3536 = vmatpush1.bf16.msra.mxu0 %v2676
        %3537 = vmatprep.subr.bf16.mxu0 %v2673
        %3538 = vmatpush1.bf16.msra.mxu0 %v2672
        %3539 = vmatprep.subr.bf16.mxu0 %v2669
        %3540 = vmatpush1.bf16.msra.mxu0 %v2668
        %3541 = vmatprep.subr.bf16.mxu0 %v2665
        %3542 = vmatpush1.bf16.msra.mxu0 %v2664
        %3543 = vmatprep.subr.bf16.mxu0 %v2661
        %3544 = vmatpush1.bf16.msra.mxu0 %v2660
        %3545 = vmatprep.subr.bf16.mxu0 %v2657
        %3546 = vmatpush1.bf16.msra.mxu0 %v2656
        %3547 = vmatprep.subr.bf16.mxu0 %v2653
        %3548 = vmatpush1.bf16.msra.mxu0 %v2652
        %3549 = vmatprep.subr.bf16.mxu0 %v2649
        %3550 = vmatpush1.bf16.msra.mxu0 %v2648
        %3551 = vmatprep.subr.bf16.mxu0 %v2709
        %3552 = vmatpush2.bf16.msra.mxu0 %v2708
        %3553 = vmatprep.subr.bf16.mxu0 %v2705
        %3554 = vmatpush2.bf16.msra.mxu0 %v2704
        %3555 = vmatprep.subr.bf16.mxu0 %v2701
        %3556 = vmatpush2.bf16.msra.mxu0 %v2700
        %3557 = vmatprep.subr.bf16.mxu0 %v2697
        %3558 = vmatpush2.bf16.msra.mxu0 %v2696
        %3559 = vmatprep.subr.bf16.mxu0 %v2693
        %3560 = vmatpush2.bf16.msra.mxu0 %v2692
        %3561 = vmatprep.subr.bf16.mxu0 %v2689
        %3562 = vmatpush2.bf16.msra.mxu0 %v2688
        %3563 = vmatprep.subr.bf16.mxu0 %v2685
        %3564 = vmatpush2.bf16.msra.mxu0 %v2684
        %3565 = vmatprep.subr.bf16.mxu0 %v2681
        %3566 = vmatpush2.bf16.msra.mxu0 %v2680
        %3567 = vmatprep.mubr.bf16.mxu0 %v1733
        %3568 = vmatmul.mubr.bf16.gmra.mxu0 %v1732
        %v3569 = vpop.f32.mrf.mxu0
        %v3570 = vadd.f32 %v3529, %v3569
        %v3571 = vpop.f32.mrf.mxu0
        %v3572 = vadd.f32 %v3531, %v3571
        %v3573 = vpop.f32.mrf.mxu0
        %v3574 = vpop.f32.mrf.mxu0
        %3575 = vdwg.mxu0
        %3576 = vmatprep.subr.bf16.mxu0 %v2741
        %3577 = vmatpush1.bf16.msra.mxu0 %v2740
        %3578 = vmatprep.subr.bf16.mxu0 %v2737
        %3579 = vmatpush1.bf16.msra.mxu0 %v2736
        %3580 = vmatprep.subr.bf16.mxu0 %v2733
        %3581 = vmatpush1.bf16.msra.mxu0 %v2732
        %3582 = vmatprep.subr.bf16.mxu0 %v2729
        %3583 = vmatpush1.bf16.msra.mxu0 %v2728
        %3584 = vmatprep.subr.bf16.mxu0 %v2725
        %3585 = vmatpush1.bf16.msra.mxu0 %v2724
        %3586 = vmatprep.subr.bf16.mxu0 %v2721
        %3587 = vmatpush1.bf16.msra.mxu0 %v2720
        %3588 = vmatprep.subr.bf16.mxu0 %v2717
        %3589 = vmatpush1.bf16.msra.mxu0 %v2716
        %3590 = vmatprep.subr.bf16.mxu0 %v2713
        %3591 = vmatpush1.bf16.msra.mxu0 %v2712
        %3592 = vmatprep.subr.bf16.mxu0 %v2773
        %3593 = vmatpush2.bf16.msra.mxu0 %v2772
        %3594 = vmatprep.subr.bf16.mxu0 %v2769
        %3595 = vmatpush2.bf16.msra.mxu0 %v2768
        %3596 = vmatprep.subr.bf16.mxu0 %v2765
        %3597 = vmatpush2.bf16.msra.mxu0 %v2764
        %3598 = vmatprep.subr.bf16.mxu0 %v2761
        %3599 = vmatpush2.bf16.msra.mxu0 %v2760
        %3600 = vmatprep.subr.bf16.mxu0 %v2757
        %3601 = vmatpush2.bf16.msra.mxu0 %v2756
        %3602 = vmatprep.subr.bf16.mxu0 %v2753
        %3603 = vmatpush2.bf16.msra.mxu0 %v2752
        %3604 = vmatprep.subr.bf16.mxu0 %v2749
        %3605 = vmatpush2.bf16.msra.mxu0 %v2748
        %3606 = vmatprep.subr.bf16.mxu0 %v2745
        %3607 = vmatpush2.bf16.msra.mxu0 %v2744
        %3608 = vmatprep.mubr.bf16.mxu0 %v1735
        %3609 = vmatmul.mubr.bf16.gmra.mxu0 %v1734
        %v3610 = vpop.f32.mrf.mxu0
        %v3611 = vadd.f32 %v3570, %v3610
        %v3612 = vpop.f32.mrf.mxu0
        %v3613 = vadd.f32 %v3572, %v3612
        %v3614 = vpop.f32.mrf.mxu0
        %v3615 = vpop.f32.mrf.mxu0
        %3616 = vdwg.mxu0
        %3617 = vmatprep.subr.bf16.mxu0 %v2805
        %3618 = vmatpush1.bf16.msra.mxu0 %v2804
        %3619 = vmatprep.subr.bf16.mxu0 %v2801
        %3620 = vmatpush1.bf16.msra.mxu0 %v2800
        %3621 = vmatprep.subr.bf16.mxu0 %v2797
        %3622 = vmatpush1.bf16.msra.mxu0 %v2796
        %3623 = vmatprep.subr.bf16.mxu0 %v2793
        %3624 = vmatpush1.bf16.msra.mxu0 %v2792
        %3625 = vmatprep.subr.bf16.mxu0 %v2789
        %3626 = vmatpush1.bf16.msra.mxu0 %v2788
        %3627 = vmatprep.subr.bf16.mxu0 %v2785
        %3628 = vmatpush1.bf16.msra.mxu0 %v2784
        %3629 = vmatprep.subr.bf16.mxu0 %v2781
        %3630 = vmatpush1.bf16.msra.mxu0 %v2780
        %3631 = vmatprep.subr.bf16.mxu0 %v2777
        %3632 = vmatpush1.bf16.msra.mxu0 %v2776
        %3633 = vmatprep.subr.bf16.mxu0 %v2837
        %3634 = vmatpush2.bf16.msra.mxu0 %v2836
        %3635 = vmatprep.subr.bf16.mxu0 %v2833
        %3636 = vmatpush2.bf16.msra.mxu0 %v2832
        %3637 = vmatprep.subr.bf16.mxu0 %v2829
        %3638 = vmatpush2.bf16.msra.mxu0 %v2828
        %3639 = vmatprep.subr.bf16.mxu0 %v2825
        %3640 = vmatpush2.bf16.msra.mxu0 %v2824
        %3641 = vmatprep.subr.bf16.mxu0 %v2821
        %3642 = vmatpush2.bf16.msra.mxu0 %v2820
        %3643 = vmatprep.subr.bf16.mxu0 %v2817
        %3644 = vmatpush2.bf16.msra.mxu0 %v2816
        %3645 = vmatprep.subr.bf16.mxu0 %v2813
        %3646 = vmatpush2.bf16.msra.mxu0 %v2812
        %3647 = vmatprep.subr.bf16.mxu0 %v2809
        %3648 = vmatpush2.bf16.msra.mxu0 %v2808
        %3649 = vmatprep.mubr.bf16.mxu0 %v1737
        %3650 = vmatmul.mubr.bf16.gmra.mxu0 %v1736
        %v3651 = vpop.f32.mrf.mxu0
        %v3652 = vadd.f32 %v3611, %v3651
        %v3653 = vpop.f32.mrf.mxu0
        %v3654 = vadd.f32 %v3613, %v3653
        %v3655 = vpop.f32.mrf.mxu0
        %v3656 = vpop.f32.mrf.mxu0
        %3657 = vdwg.mxu0
        %3658 = vmatprep.subr.bf16.mxu0 %v2869
        %3659 = vmatpush1.bf16.msra.mxu0 %v2868
        %3660 = vmatprep.subr.bf16.mxu0 %v2865
        %3661 = vmatpush1.bf16.msra.mxu0 %v2864
        %3662 = vmatprep.subr.bf16.mxu0 %v2861
        %3663 = vmatpush1.bf16.msra.mxu0 %v2860
        %3664 = vmatprep.subr.bf16.mxu0 %v2857
        %3665 = vmatpush1.bf16.msra.mxu0 %v2856
        %3666 = vmatprep.subr.bf16.mxu0 %v2853
        %3667 = vmatpush1.bf16.msra.mxu0 %v2852
        %3668 = vmatprep.subr.bf16.mxu0 %v2849
        %3669 = vmatpush1.bf16.msra.mxu0 %v2848
        %3670 = vmatprep.subr.bf16.mxu0 %v2845
        %3671 = vmatpush1.bf16.msra.mxu0 %v2844
        %3672 = vmatprep.subr.bf16.mxu0 %v2841
        %3673 = vmatpush1.bf16.msra.mxu0 %v2840
        %3674 = vmatprep.subr.bf16.mxu0 %v2901
        %3675 = vmatpush2.bf16.msra.mxu0 %v2900
        %3676 = vmatprep.subr.bf16.mxu0 %v2897
        %3677 = vmatpush2.bf16.msra.mxu0 %v2896
        %3678 = vmatprep.subr.bf16.mxu0 %v2893
        %3679 = vmatpush2.bf16.msra.mxu0 %v2892
        %3680 = vmatprep.subr.bf16.mxu0 %v2889
        %3681 = vmatpush2.bf16.msra.mxu0 %v2888
        %3682 = vmatprep.subr.bf16.mxu0 %v2885
        %3683 = vmatpush2.bf16.msra.mxu0 %v2884
        %3684 = vmatprep.subr.bf16.mxu0 %v2881
        %3685 = vmatpush2.bf16.msra.mxu0 %v2880
        %3686 = vmatprep.subr.bf16.mxu0 %v2877
        %3687 = vmatpush2.bf16.msra.mxu0 %v2876
        %3688 = vmatprep.subr.bf16.mxu0 %v2873
        %3689 = vmatpush2.bf16.msra.mxu0 %v2872
        %3690 = vmatprep.mubr.bf16.mxu0 %v1739
        %3691 = vmatmul.mubr.bf16.gmra.mxu0 %v1738
        %v3692 = vpop.f32.mrf.mxu0
        %v3693 = vadd.f32 %v3652, %v3692
        %v3694 = vpop.f32.mrf.mxu0
        %v3695 = vadd.f32 %v3654, %v3694
        %v3696 = vpop.f32.mrf.mxu0
        %v3697 = vpop.f32.mrf.mxu0
        %3698 = vdwg.mxu0
        %3699 = vmatprep.subr.bf16.mxu0 %v2933
        %3700 = vmatpush1.bf16.msra.mxu0 %v2932
        %3701 = vmatprep.subr.bf16.mxu0 %v2929
        %3702 = vmatpush1.bf16.msra.mxu0 %v2928
        %3703 = vmatprep.subr.bf16.mxu0 %v2925
        %3704 = vmatpush1.bf16.msra.mxu0 %v2924
        %3705 = vmatprep.subr.bf16.mxu0 %v2921
        %3706 = vmatpush1.bf16.msra.mxu0 %v2920
        %3707 = vmatprep.subr.bf16.mxu0 %v2917
        %3708 = vmatpush1.bf16.msra.mxu0 %v2916
        %3709 = vmatprep.subr.bf16.mxu0 %v2913
        %3710 = vmatpush1.bf16.msra.mxu0 %v2912
        %3711 = vmatprep.subr.bf16.mxu0 %v2909
        %3712 = vmatpush1.bf16.msra.mxu0 %v2908
        %3713 = vmatprep.subr.bf16.mxu0 %v2905
        %3714 = vmatpush1.bf16.msra.mxu0 %v2904
        %3715 = vmatprep.subr.bf16.mxu0 %v2965
        %3716 = vmatpush2.bf16.msra.mxu0 %v2964
        %3717 = vmatprep.subr.bf16.mxu0 %v2961
        %3718 = vmatpush2.bf16.msra.mxu0 %v2960
        %3719 = vmatprep.subr.bf16.mxu0 %v2957
        %3720 = vmatpush2.bf16.msra.mxu0 %v2956
        %3721 = vmatprep.subr.bf16.mxu0 %v2953
        %3722 = vmatpush2.bf16.msra.mxu0 %v2952
        %3723 = vmatprep.subr.bf16.mxu0 %v2949
        %3724 = vmatpush2.bf16.msra.mxu0 %v2948
        %3725 = vmatprep.subr.bf16.mxu0 %v2945
        %3726 = vmatpush2.bf16.msra.mxu0 %v2944
        %3727 = vmatprep.subr.bf16.mxu0 %v2941
        %3728 = vmatpush2.bf16.msra.mxu0 %v2940
        %3729 = vmatprep.subr.bf16.mxu0 %v2937
        %3730 = vmatpush2.bf16.msra.mxu0 %v2936
        %3731 = vmatprep.mubr.bf16.mxu0 %v1741
        %3732 = vmatmul.mubr.bf16.gmra.mxu0 %v1740
        %v3733 = vpop.f32.mrf.mxu0
        %v3734 = vadd.f32 %v3693, %v3733
        %v3735 = vpop.f32.mrf.mxu0
        %v3736 = vadd.f32 %v3695, %v3735
        %v3737 = vpop.f32.mrf.mxu0
        %v3738 = vpop.f32.mrf.mxu0
        %3739 = vdwg.mxu0
        %3740 = vmatprep.subr.bf16.mxu0 %v2997
        %3741 = vmatpush1.bf16.msra.mxu0 %v2996
        %3742 = vmatprep.subr.bf16.mxu0 %v2993
        %3743 = vmatpush1.bf16.msra.mxu0 %v2992
        %3744 = vmatprep.subr.bf16.mxu0 %v2989
        %3745 = vmatpush1.bf16.msra.mxu0 %v2988
        %3746 = vmatprep.subr.bf16.mxu0 %v2985
        %3747 = vmatpush1.bf16.msra.mxu0 %v2984
        %3748 = vmatprep.subr.bf16.mxu0 %v2981
        %3749 = vmatpush1.bf16.msra.mxu0 %v2980
        %3750 = vmatprep.subr.bf16.mxu0 %v2977
        %3751 = vmatpush1.bf16.msra.mxu0 %v2976
        %3752 = vmatprep.subr.bf16.mxu0 %v2973
        %3753 = vmatpush1.bf16.msra.mxu0 %v2972
        %3754 = vmatprep.subr.bf16.mxu0 %v2969
        %3755 = vmatpush1.bf16.msra.mxu0 %v2968
        %3756 = vmatprep.subr.bf16.mxu0 %v3029
        %3757 = vmatpush2.bf16.msra.mxu0 %v3028
        %3758 = vmatprep.subr.bf16.mxu0 %v3025
        %3759 = vmatpush2.bf16.msra.mxu0 %v3024
        %3760 = vmatprep.subr.bf16.mxu0 %v3021
        %3761 = vmatpush2.bf16.msra.mxu0 %v3020
        %3762 = vmatprep.subr.bf16.mxu0 %v3017
        %3763 = vmatpush2.bf16.msra.mxu0 %v3016
        %3764 = vmatprep.subr.bf16.mxu0 %v3013
        %3765 = vmatpush2.bf16.msra.mxu0 %v3012
        %3766 = vmatprep.subr.bf16.mxu0 %v3009
        %3767 = vmatpush2.bf16.msra.mxu0 %v3008
        %3768 = vmatprep.subr.bf16.mxu0 %v3005
        %3769 = vmatpush2.bf16.msra.mxu0 %v3004
        %3770 = vmatprep.subr.bf16.mxu0 %v3001
        %3771 = vmatpush2.bf16.msra.mxu0 %v3000
        %3772 = vmatprep.mubr.bf16.mxu0 %v1743
        %3773 = vmatmul.mubr.bf16.gmra.mxu0 %v1742
        %v3774 = vpop.f32.mrf.mxu0
        %v3775 = vadd.f32 %v3734, %v3774
        %v3776 = vpop.f32.mrf.mxu0
        %v3777 = vadd.f32 %v3736, %v3776
        %v3778 = vpop.f32.mrf.mxu0
        %v3779 = vpop.f32.mrf.mxu0
        %3780 = vdwg.mxu0
        %3781 = vmatprep.subr.bf16.mxu0 %v3061
        %3782 = vmatpush1.bf16.msra.mxu0 %v3060
        %3783 = vmatprep.subr.bf16.mxu0 %v3057
        %3784 = vmatpush1.bf16.msra.mxu0 %v3056
        %3785 = vmatprep.subr.bf16.mxu0 %v3053
        %3786 = vmatpush1.bf16.msra.mxu0 %v3052
        %3787 = vmatprep.subr.bf16.mxu0 %v3049
        %3788 = vmatpush1.bf16.msra.mxu0 %v3048
        %3789 = vmatprep.subr.bf16.mxu0 %v3045
        %3790 = vmatpush1.bf16.msra.mxu0 %v3044
        %3791 = vmatprep.subr.bf16.mxu0 %v3041
        %3792 = vmatpush1.bf16.msra.mxu0 %v3040
        %3793 = vmatprep.subr.bf16.mxu0 %v3037
        %3794 = vmatpush1.bf16.msra.mxu0 %v3036
        %3795 = vmatprep.subr.bf16.mxu0 %v3033
        %3796 = vmatpush1.bf16.msra.mxu0 %v3032
        %3797 = vmatprep.subr.bf16.mxu0 %v3093
        %3798 = vmatpush2.bf16.msra.mxu0 %v3092
        %3799 = vmatprep.subr.bf16.mxu0 %v3089
        %3800 = vmatpush2.bf16.msra.mxu0 %v3088
        %3801 = vmatprep.subr.bf16.mxu0 %v3085
        %3802 = vmatpush2.bf16.msra.mxu0 %v3084
        %3803 = vmatprep.subr.bf16.mxu0 %v3081
        %3804 = vmatpush2.bf16.msra.mxu0 %v3080
        %3805 = vmatprep.subr.bf16.mxu0 %v3077
        %3806 = vmatpush2.bf16.msra.mxu0 %v3076
        %3807 = vmatprep.subr.bf16.mxu0 %v3073
        %3808 = vmatpush2.bf16.msra.mxu0 %v3072
        %3809 = vmatprep.subr.bf16.mxu0 %v3069
        %3810 = vmatpush2.bf16.msra.mxu0 %v3068
        %3811 = vmatprep.subr.bf16.mxu0 %v3065
        %3812 = vmatpush2.bf16.msra.mxu0 %v3064
        %3813 = vmatprep.mubr.bf16.mxu0 %v1745
        %3814 = vmatmul.mubr.bf16.gmra.mxu0 %v1744
        %v3815 = vpop.f32.mrf.mxu0
        %v3816 = vadd.f32 %v3775, %v3815
        %v3817 = vpop.f32.mrf.mxu0
        %v3818 = vadd.f32 %v3777, %v3817
        %v3819 = vpop.f32.mrf.mxu0
        %v3820 = vpop.f32.mrf.mxu0
        %3821 = vdwg.mxu0
        %3822 = vmatprep.subr.bf16.mxu0 %v3125
        %3823 = vmatpush1.bf16.msra.mxu0 %v3124
        %3824 = vmatprep.subr.bf16.mxu0 %v3121
        %3825 = vmatpush1.bf16.msra.mxu0 %v3120
        %3826 = vmatprep.subr.bf16.mxu0 %v3117
        %3827 = vmatpush1.bf16.msra.mxu0 %v3116
        %3828 = vmatprep.subr.bf16.mxu0 %v3113
        %3829 = vmatpush1.bf16.msra.mxu0 %v3112
        %3830 = vmatprep.subr.bf16.mxu0 %v3109
        %3831 = vmatpush1.bf16.msra.mxu0 %v3108
        %3832 = vmatprep.subr.bf16.mxu0 %v3105
        %3833 = vmatpush1.bf16.msra.mxu0 %v3104
        %3834 = vmatprep.subr.bf16.mxu0 %v3101
        %3835 = vmatpush1.bf16.msra.mxu0 %v3100
        %3836 = vmatprep.subr.bf16.mxu0 %v3097
        %3837 = vmatpush1.bf16.msra.mxu0 %v3096
        %3838 = vmatprep.subr.bf16.mxu0 %v3157
        %3839 = vmatpush2.bf16.msra.mxu0 %v3156
        %3840 = vmatprep.subr.bf16.mxu0 %v3153
        %3841 = vmatpush2.bf16.msra.mxu0 %v3152
        %3842 = vmatprep.subr.bf16.mxu0 %v3149
        %3843 = vmatpush2.bf16.msra.mxu0 %v3148
        %3844 = vmatprep.subr.bf16.mxu0 %v3145
        %3845 = vmatpush2.bf16.msra.mxu0 %v3144
        %3846 = vmatprep.subr.bf16.mxu0 %v3141
        %3847 = vmatpush2.bf16.msra.mxu0 %v3140
        %3848 = vmatprep.subr.bf16.mxu0 %v3137
        %3849 = vmatpush2.bf16.msra.mxu0 %v3136
        %3850 = vmatprep.subr.bf16.mxu0 %v3133
        %3851 = vmatpush2.bf16.msra.mxu0 %v3132
        %3852 = vmatprep.subr.bf16.mxu0 %v3129
        %3853 = vmatpush2.bf16.msra.mxu0 %v3128
        %3854 = vmatprep.mubr.bf16.mxu0 %v1747
        %3855 = vmatmul.mubr.bf16.gmra.mxu0 %v1746
        %v3856 = vpop.f32.mrf.mxu0
        %v3857 = vadd.f32 %v3816, %v3856
        %v3858 = vpop.f32.mrf.mxu0
        %v3859 = vadd.f32 %v3818, %v3858
        %v3860 = vpop.f32.mrf.mxu0
        %v3861 = vpop.f32.mrf.mxu0
        %3862 = vdwg.mxu0
        %3863 = vmatprep.subr.bf16.mxu0 %v3189
        %3864 = vmatpush1.bf16.msra.mxu0 %v3188
        %3865 = vmatprep.subr.bf16.mxu0 %v3185
        %3866 = vmatpush1.bf16.msra.mxu0 %v3184
        %3867 = vmatprep.subr.bf16.mxu0 %v3181
        %3868 = vmatpush1.bf16.msra.mxu0 %v3180
        %3869 = vmatprep.subr.bf16.mxu0 %v3177
        %3870 = vmatpush1.bf16.msra.mxu0 %v3176
        %3871 = vmatprep.subr.bf16.mxu0 %v3173
        %3872 = vmatpush1.bf16.msra.mxu0 %v3172
        %3873 = vmatprep.subr.bf16.mxu0 %v3169
        %3874 = vmatpush1.bf16.msra.mxu0 %v3168
        %3875 = vmatprep.subr.bf16.mxu0 %v3165
        %3876 = vmatpush1.bf16.msra.mxu0 %v3164
        %3877 = vmatprep.subr.bf16.mxu0 %v3161
        %3878 = vmatpush1.bf16.msra.mxu0 %v3160
        %3879 = vmatprep.subr.bf16.mxu0 %v3221
        %3880 = vmatpush2.bf16.msra.mxu0 %v3220
        %3881 = vmatprep.subr.bf16.mxu0 %v3217
        %3882 = vmatpush2.bf16.msra.mxu0 %v3216
        %3883 = vmatprep.subr.bf16.mxu0 %v3213
        %3884 = vmatpush2.bf16.msra.mxu0 %v3212
        %3885 = vmatprep.subr.bf16.mxu0 %v3209
        %3886 = vmatpush2.bf16.msra.mxu0 %v3208
        %3887 = vmatprep.subr.bf16.mxu0 %v3205
        %3888 = vmatpush2.bf16.msra.mxu0 %v3204
        %3889 = vmatprep.subr.bf16.mxu0 %v3201
        %3890 = vmatpush2.bf16.msra.mxu0 %v3200
        %3891 = vmatprep.subr.bf16.mxu0 %v3197
        %3892 = vmatpush2.bf16.msra.mxu0 %v3196
        %3893 = vmatprep.subr.bf16.mxu0 %v3193
        %3894 = vmatpush2.bf16.msra.mxu0 %v3192
        %3895 = vmatprep.mubr.bf16.mxu0 %v1749
        %3896 = vmatmul.mubr.bf16.gmra.mxu0 %v1748
        %v3897 = vpop.f32.mrf.mxu0
        %v3898 = vadd.f32 %v3857, %v3897
        %v3899 = vpop.f32.mrf.mxu0
        %v3900 = vadd.f32 %v3859, %v3899
        %v3901 = vpop.f32.mrf.mxu0
        %v3902 = vpop.f32.mrf.mxu0
        %3903 = vdwg.mxu0
        %3904 = vmatprep.subr.bf16.mxu0 %v3253
        %3905 = vmatpush1.bf16.msra.mxu0 %v3252
        %3906 = vmatprep.subr.bf16.mxu0 %v3249
        %3907 = vmatpush1.bf16.msra.mxu0 %v3248
        %3908 = vmatprep.subr.bf16.mxu0 %v3245
        %3909 = vmatpush1.bf16.msra.mxu0 %v3244
        %3910 = vmatprep.subr.bf16.mxu0 %v3241
        %3911 = vmatpush1.bf16.msra.mxu0 %v3240
        %3912 = vmatprep.subr.bf16.mxu0 %v3237
        %3913 = vmatpush1.bf16.msra.mxu0 %v3236
        %3914 = vmatprep.subr.bf16.mxu0 %v3233
        %3915 = vmatpush1.bf16.msra.mxu0 %v3232
        %3916 = vmatprep.subr.bf16.mxu0 %v3229
        %3917 = vmatpush1.bf16.msra.mxu0 %v3228
        %3918 = vmatprep.subr.bf16.mxu0 %v3225
        %3919 = vmatpush1.bf16.msra.mxu0 %v3224
        %3920 = vmatprep.subr.bf16.mxu0 %v3285
        %3921 = vmatpush2.bf16.msra.mxu0 %v3284
        %3922 = vmatprep.subr.bf16.mxu0 %v3281
        %3923 = vmatpush2.bf16.msra.mxu0 %v3280
        %3924 = vmatprep.subr.bf16.mxu0 %v3277
        %3925 = vmatpush2.bf16.msra.mxu0 %v3276
        %3926 = vmatprep.subr.bf16.mxu0 %v3273
        %3927 = vmatpush2.bf16.msra.mxu0 %v3272
        %3928 = vmatprep.subr.bf16.mxu0 %v3269
        %3929 = vmatpush2.bf16.msra.mxu0 %v3268
        %3930 = vmatprep.subr.bf16.mxu0 %v3265
        %3931 = vmatpush2.bf16.msra.mxu0 %v3264
        %3932 = vmatprep.subr.bf16.mxu0 %v3261
        %3933 = vmatpush2.bf16.msra.mxu0 %v3260
        %3934 = vmatprep.subr.bf16.mxu0 %v3257
        %3935 = vmatpush2.bf16.msra.mxu0 %v3256
        %3936 = vmatprep.mubr.bf16.mxu0 %v1751
        %3937 = vmatmul.mubr.bf16.gmra.mxu0 %v1750
        %v3938 = vpop.f32.mrf.mxu0
        %v3939 = vadd.f32 %v3898, %v3938
        %v3940 = vpop.f32.mrf.mxu0
        %v3941 = vadd.f32 %v3900, %v3940
        %v3942 = vpop.f32.mrf.mxu0
        %v3943 = vpop.f32.mrf.mxu0
        %3944 = vdwg.mxu0
        %3945 = vmatprep.subr.bf16.mxu0 %v2295
        %3946 = vmatpush1.bf16.msra.mxu0 %v2294
        %3947 = vmatprep.subr.bf16.mxu0 %v2291
        %3948 = vmatpush1.bf16.msra.mxu0 %v2290
        %3949 = vmatprep.subr.bf16.mxu0 %v2287
        %3950 = vmatpush1.bf16.msra.mxu0 %v2286
        %3951 = vmatprep.subr.bf16.mxu0 %v2283
        %3952 = vmatpush1.bf16.msra.mxu0 %v2282
        %3953 = vmatprep.subr.bf16.mxu0 %v2279
        %3954 = vmatpush1.bf16.msra.mxu0 %v2278
        %3955 = vmatprep.subr.bf16.mxu0 %v2275
        %3956 = vmatpush1.bf16.msra.mxu0 %v2274
        %3957 = vmatprep.subr.bf16.mxu0 %v2271
        %3958 = vmatpush1.bf16.msra.mxu0 %v2270
        %3959 = vmatprep.subr.bf16.mxu0 %v2267
        %3960 = vmatpush1.bf16.msra.mxu0 %v2266
        %3961 = vmatprep.subr.bf16.mxu0 %v2327
        %3962 = vmatpush2.bf16.msra.mxu0 %v2326
        %3963 = vmatprep.subr.bf16.mxu0 %v2323
        %3964 = vmatpush2.bf16.msra.mxu0 %v2322
        %3965 = vmatprep.subr.bf16.mxu0 %v2319
        %3966 = vmatpush2.bf16.msra.mxu0 %v2318
        %3967 = vmatprep.subr.bf16.mxu0 %v2315
        %3968 = vmatpush2.bf16.msra.mxu0 %v2314
        %3969 = vmatprep.subr.bf16.mxu0 %v2311
        %3970 = vmatpush2.bf16.msra.mxu0 %v2310
        %3971 = vmatprep.subr.bf16.mxu0 %v2307
        %3972 = vmatpush2.bf16.msra.mxu0 %v2306
        %3973 = vmatprep.subr.bf16.mxu0 %v2303
        %3974 = vmatpush2.bf16.msra.mxu0 %v2302
        %3975 = vmatprep.subr.bf16.mxu0 %v2299
        %3976 = vmatpush2.bf16.msra.mxu0 %v2298
        %3977 = vmatprep.mubr.bf16.mxu0 %v1721
        %3978 = vmatmul.mubr.bf16.gmra.mxu0 %v1720
        %v3979 = vpop.f32.mrf.mxu0
        %v3980 = vadd.f32 0.0, %v3979
        %v3981 = vpop.f32.mrf.mxu0
        %v3982 = vadd.f32 0.0, %v3981
        %v3983 = vpop.f32.mrf.mxu0
        %v3984 = vpop.f32.mrf.mxu0
        %3985 = vdwg.mxu0
        %3986 = vmatprep.subr.bf16.mxu0 %v2359
        %3987 = vmatpush1.bf16.msra.mxu0 %v2358
        %3988 = vmatprep.subr.bf16.mxu0 %v2355
        %3989 = vmatpush1.bf16.msra.mxu0 %v2354
        %3990 = vmatprep.subr.bf16.mxu0 %v2351
        %3991 = vmatpush1.bf16.msra.mxu0 %v2350
        %3992 = vmatprep.subr.bf16.mxu0 %v2347
        %3993 = vmatpush1.bf16.msra.mxu0 %v2346
        %3994 = vmatprep.subr.bf16.mxu0 %v2343
        %3995 = vmatpush1.bf16.msra.mxu0 %v2342
        %3996 = vmatprep.subr.bf16.mxu0 %v2339
        %3997 = vmatpush1.bf16.msra.mxu0 %v2338
        %3998 = vmatprep.subr.bf16.mxu0 %v2335
        %3999 = vmatpush1.bf16.msra.mxu0 %v2334
        %4000 = vmatprep.subr.bf16.mxu0 %v2331
        %4001 = vmatpush1.bf16.msra.mxu0 %v2330
        %4002 = vmatprep.subr.bf16.mxu0 %v2391
        %4003 = vmatpush2.bf16.msra.mxu0 %v2390
        %4004 = vmatprep.subr.bf16.mxu0 %v2387
        %4005 = vmatpush2.bf16.msra.mxu0 %v2386
        %4006 = vmatprep.subr.bf16.mxu0 %v2383
        %4007 = vmatpush2.bf16.msra.mxu0 %v2382
        %4008 = vmatprep.subr.bf16.mxu0 %v2379
        %4009 = vmatpush2.bf16.msra.mxu0 %v2378
        %4010 = vmatprep.subr.bf16.mxu0 %v2375
        %4011 = vmatpush2.bf16.msra.mxu0 %v2374
        %4012 = vmatprep.subr.bf16.mxu0 %v2371
        %4013 = vmatpush2.bf16.msra.mxu0 %v2370
        %4014 = vmatprep.subr.bf16.mxu0 %v2367
        %4015 = vmatpush2.bf16.msra.mxu0 %v2366
        %4016 = vmatprep.subr.bf16.mxu0 %v2363
        %4017 = vmatpush2.bf16.msra.mxu0 %v2362
        %4018 = vmatprep.mubr.bf16.mxu0 %v1723
        %4019 = vmatmul.mubr.bf16.gmra.mxu0 %v1722
        %v4020 = vpop.f32.mrf.mxu0
        %v4021 = vadd.f32 %v3980, %v4020
        %v4022 = vpop.f32.mrf.mxu0
        %v4023 = vadd.f32 %v3982, %v4022
        %v4024 = vpop.f32.mrf.mxu0
        %v4025 = vpop.f32.mrf.mxu0
        %4026 = vdwg.mxu0
        %4027 = vmatprep.subr.bf16.mxu0 %v2423
        %4028 = vmatpush1.bf16.msra.mxu0 %v2422
        %4029 = vmatprep.subr.bf16.mxu0 %v2419
        %4030 = vmatpush1.bf16.msra.mxu0 %v2418
        %4031 = vmatprep.subr.bf16.mxu0 %v2415
        %4032 = vmatpush1.bf16.msra.mxu0 %v2414
        %4033 = vmatprep.subr.bf16.mxu0 %v2411
        %4034 = vmatpush1.bf16.msra.mxu0 %v2410
        %4035 = vmatprep.subr.bf16.mxu0 %v2407
        %4036 = vmatpush1.bf16.msra.mxu0 %v2406
        %4037 = vmatprep.subr.bf16.mxu0 %v2403
        %4038 = vmatpush1.bf16.msra.mxu0 %v2402
        %4039 = vmatprep.subr.bf16.mxu0 %v2399
        %4040 = vmatpush1.bf16.msra.mxu0 %v2398
        %4041 = vmatprep.subr.bf16.mxu0 %v2395
        %4042 = vmatpush1.bf16.msra.mxu0 %v2394
        %4043 = vmatprep.subr.bf16.mxu0 %v2455
        %4044 = vmatpush2.bf16.msra.mxu0 %v2454
        %4045 = vmatprep.subr.bf16.mxu0 %v2451
        %4046 = vmatpush2.bf16.msra.mxu0 %v2450
        %4047 = vmatprep.subr.bf16.mxu0 %v2447
        %4048 = vmatpush2.bf16.msra.mxu0 %v2446
        %4049 = vmatprep.subr.bf16.mxu0 %v2443
        %4050 = vmatpush2.bf16.msra.mxu0 %v2442
        %4051 = vmatprep.subr.bf16.mxu0 %v2439
        %4052 = vmatpush2.bf16.msra.mxu0 %v2438
        %4053 = vmatprep.subr.bf16.mxu0 %v2435
        %4054 = vmatpush2.bf16.msra.mxu0 %v2434
        %4055 = vmatprep.subr.bf16.mxu0 %v2431
        %4056 = vmatpush2.bf16.msra.mxu0 %v2430
        %4057 = vmatprep.subr.bf16.mxu0 %v2427
        %4058 = vmatpush2.bf16.msra.mxu0 %v2426
        %4059 = vmatprep.mubr.bf16.mxu0 %v1725
        %4060 = vmatmul.mubr.bf16.gmra.mxu0 %v1724
        %v4061 = vpop.f32.mrf.mxu0
        %v4062 = vadd.f32 %v4021, %v4061
        %v4063 = vpop.f32.mrf.mxu0
        %v4064 = vadd.f32 %v4023, %v4063
        %v4065 = vpop.f32.mrf.mxu0
        %v4066 = vpop.f32.mrf.mxu0
        %4067 = vdwg.mxu0
        %4068 = vmatprep.subr.bf16.mxu0 %v2487
        %4069 = vmatpush1.bf16.msra.mxu0 %v2486
        %4070 = vmatprep.subr.bf16.mxu0 %v2483
        %4071 = vmatpush1.bf16.msra.mxu0 %v2482
        %4072 = vmatprep.subr.bf16.mxu0 %v2479
        %4073 = vmatpush1.bf16.msra.mxu0 %v2478
        %4074 = vmatprep.subr.bf16.mxu0 %v2475
        %4075 = vmatpush1.bf16.msra.mxu0 %v2474
        %4076 = vmatprep.subr.bf16.mxu0 %v2471
        %4077 = vmatpush1.bf16.msra.mxu0 %v2470
        %4078 = vmatprep.subr.bf16.mxu0 %v2467
        %4079 = vmatpush1.bf16.msra.mxu0 %v2466
        %4080 = vmatprep.subr.bf16.mxu0 %v2463
        %4081 = vmatpush1.bf16.msra.mxu0 %v2462
        %4082 = vmatprep.subr.bf16.mxu0 %v2459
        %4083 = vmatpush1.bf16.msra.mxu0 %v2458
        %4084 = vmatprep.subr.bf16.mxu0 %v2519
        %4085 = vmatpush2.bf16.msra.mxu0 %v2518
        %4086 = vmatprep.subr.bf16.mxu0 %v2515
        %4087 = vmatpush2.bf16.msra.mxu0 %v2514
        %4088 = vmatprep.subr.bf16.mxu0 %v2511
        %4089 = vmatpush2.bf16.msra.mxu0 %v2510
        %4090 = vmatprep.subr.bf16.mxu0 %v2507
        %4091 = vmatpush2.bf16.msra.mxu0 %v2506
        %4092 = vmatprep.subr.bf16.mxu0 %v2503
        %4093 = vmatpush2.bf16.msra.mxu0 %v2502
        %4094 = vmatprep.subr.bf16.mxu0 %v2499
        %4095 = vmatpush2.bf16.msra.mxu0 %v2498
        %4096 = vmatprep.subr.bf16.mxu0 %v2495
        %4097 = vmatpush2.bf16.msra.mxu0 %v2494
        %4098 = vmatprep.subr.bf16.mxu0 %v2491
        %4099 = vmatpush2.bf16.msra.mxu0 %v2490
        %4100 = vmatprep.mubr.bf16.mxu0 %v1727
        %4101 = vmatmul.mubr.bf16.gmra.mxu0 %v1726
        %v4102 = vpop.f32.mrf.mxu0
        %v4103 = vadd.f32 %v4062, %v4102
        %v4104 = vpop.f32.mrf.mxu0
        %v4105 = vadd.f32 %v4064, %v4104
        %v4106 = vpop.f32.mrf.mxu0
        %v4107 = vpop.f32.mrf.mxu0
        %4108 = vdwg.mxu0
        %4109 = vmatprep.subr.bf16.mxu0 %v2551
        %4110 = vmatpush1.bf16.msra.mxu0 %v2550
        %4111 = vmatprep.subr.bf16.mxu0 %v2547
        %4112 = vmatpush1.bf16.msra.mxu0 %v2546
        %4113 = vmatprep.subr.bf16.mxu0 %v2543
        %4114 = vmatpush1.bf16.msra.mxu0 %v2542
        %4115 = vmatprep.subr.bf16.mxu0 %v2539
        %4116 = vmatpush1.bf16.msra.mxu0 %v2538
        %4117 = vmatprep.subr.bf16.mxu0 %v2535
        %4118 = vmatpush1.bf16.msra.mxu0 %v2534
        %4119 = vmatprep.subr.bf16.mxu0 %v2531
        %4120 = vmatpush1.bf16.msra.mxu0 %v2530
        %4121 = vmatprep.subr.bf16.mxu0 %v2527
        %4122 = vmatpush1.bf16.msra.mxu0 %v2526
        %4123 = vmatprep.subr.bf16.mxu0 %v2523
        %4124 = vmatpush1.bf16.msra.mxu0 %v2522
        %4125 = vmatprep.subr.bf16.mxu0 %v2583
        %4126 = vmatpush2.bf16.msra.mxu0 %v2582
        %4127 = vmatprep.subr.bf16.mxu0 %v2579
        %4128 = vmatpush2.bf16.msra.mxu0 %v2578
        %4129 = vmatprep.subr.bf16.mxu0 %v2575
        %4130 = vmatpush2.bf16.msra.mxu0 %v2574
        %4131 = vmatprep.subr.bf16.mxu0 %v2571
        %4132 = vmatpush2.bf16.msra.mxu0 %v2570
        %4133 = vmatprep.subr.bf16.mxu0 %v2567
        %4134 = vmatpush2.bf16.msra.mxu0 %v2566
        %4135 = vmatprep.subr.bf16.mxu0 %v2563
        %4136 = vmatpush2.bf16.msra.mxu0 %v2562
        %4137 = vmatprep.subr.bf16.mxu0 %v2559
        %4138 = vmatpush2.bf16.msra.mxu0 %v2558
        %4139 = vmatprep.subr.bf16.mxu0 %v2555
        %4140 = vmatpush2.bf16.msra.mxu0 %v2554
        %4141 = vmatprep.mubr.bf16.mxu0 %v1729
        %4142 = vmatmul.mubr.bf16.gmra.mxu0 %v1728
        %v4143 = vpop.f32.mrf.mxu0
        %v4144 = vadd.f32 %v4103, %v4143
        %v4145 = vpop.f32.mrf.mxu0
        %v4146 = vadd.f32 %v4105, %v4145
        %v4147 = vpop.f32.mrf.mxu0
        %v4148 = vpop.f32.mrf.mxu0
        %4149 = vdwg.mxu0
        %4150 = vmatprep.subr.bf16.mxu0 %v2615
        %4151 = vmatpush1.bf16.msra.mxu0 %v2614
        %4152 = vmatprep.subr.bf16.mxu0 %v2611
        %4153 = vmatpush1.bf16.msra.mxu0 %v2610
        %4154 = vmatprep.subr.bf16.mxu0 %v2607
        %4155 = vmatpush1.bf16.msra.mxu0 %v2606
        %4156 = vmatprep.subr.bf16.mxu0 %v2603
        %4157 = vmatpush1.bf16.msra.mxu0 %v2602
        %4158 = vmatprep.subr.bf16.mxu0 %v2599
        %4159 = vmatpush1.bf16.msra.mxu0 %v2598
        %4160 = vmatprep.subr.bf16.mxu0 %v2595
        %4161 = vmatpush1.bf16.msra.mxu0 %v2594
        %4162 = vmatprep.subr.bf16.mxu0 %v2591
        %4163 = vmatpush1.bf16.msra.mxu0 %v2590
        %4164 = vmatprep.subr.bf16.mxu0 %v2587
        %4165 = vmatpush1.bf16.msra.mxu0 %v2586
        %4166 = vmatprep.subr.bf16.mxu0 %v2647
        %4167 = vmatpush2.bf16.msra.mxu0 %v2646
        %4168 = vmatprep.subr.bf16.mxu0 %v2643
        %4169 = vmatpush2.bf16.msra.mxu0 %v2642
        %4170 = vmatprep.subr.bf16.mxu0 %v2639
        %4171 = vmatpush2.bf16.msra.mxu0 %v2638
        %4172 = vmatprep.subr.bf16.mxu0 %v2635
        %4173 = vmatpush2.bf16.msra.mxu0 %v2634
        %4174 = vmatprep.subr.bf16.mxu0 %v2631
        %4175 = vmatpush2.bf16.msra.mxu0 %v2630
        %4176 = vmatprep.subr.bf16.mxu0 %v2627
        %4177 = vmatpush2.bf16.msra.mxu0 %v2626
        %4178 = vmatprep.subr.bf16.mxu0 %v2623
        %4179 = vmatpush2.bf16.msra.mxu0 %v2622
        %4180 = vmatprep.subr.bf16.mxu0 %v2619
        %4181 = vmatpush2.bf16.msra.mxu0 %v2618
        %4182 = vmatprep.mubr.bf16.mxu0 %v1731
        %4183 = vmatmul.mubr.bf16.gmra.mxu0 %v1730
        %v4184 = vpop.f32.mrf.mxu0
        %v4185 = vadd.f32 %v4144, %v4184
        %v4186 = vpop.f32.mrf.mxu0
        %v4187 = vadd.f32 %v4146, %v4186
        %v4188 = vpop.f32.mrf.mxu0
        %v4189 = vpop.f32.mrf.mxu0
        %4190 = vdwg.mxu0
        %4191 = vmatprep.subr.bf16.mxu0 %v2679
        %4192 = vmatpush1.bf16.msra.mxu0 %v2678
        %4193 = vmatprep.subr.bf16.mxu0 %v2675
        %4194 = vmatpush1.bf16.msra.mxu0 %v2674
        %4195 = vmatprep.subr.bf16.mxu0 %v2671
        %4196 = vmatpush1.bf16.msra.mxu0 %v2670
        %4197 = vmatprep.subr.bf16.mxu0 %v2667
        %4198 = vmatpush1.bf16.msra.mxu0 %v2666
        %4199 = vmatprep.subr.bf16.mxu0 %v2663
        %4200 = vmatpush1.bf16.msra.mxu0 %v2662
        %4201 = vmatprep.subr.bf16.mxu0 %v2659
        %4202 = vmatpush1.bf16.msra.mxu0 %v2658
        %4203 = vmatprep.subr.bf16.mxu0 %v2655
        %4204 = vmatpush1.bf16.msra.mxu0 %v2654
        %4205 = vmatprep.subr.bf16.mxu0 %v2651
        %4206 = vmatpush1.bf16.msra.mxu0 %v2650
        %4207 = vmatprep.subr.bf16.mxu0 %v2711
        %4208 = vmatpush2.bf16.msra.mxu0 %v2710
        %4209 = vmatprep.subr.bf16.mxu0 %v2707
        %4210 = vmatpush2.bf16.msra.mxu0 %v2706
        %4211 = vmatprep.subr.bf16.mxu0 %v2703
        %4212 = vmatpush2.bf16.msra.mxu0 %v2702
        %4213 = vmatprep.subr.bf16.mxu0 %v2699
        %4214 = vmatpush2.bf16.msra.mxu0 %v2698
        %4215 = vmatprep.subr.bf16.mxu0 %v2695
        %4216 = vmatpush2.bf16.msra.mxu0 %v2694
        %4217 = vmatprep.subr.bf16.mxu0 %v2691
        %4218 = vmatpush2.bf16.msra.mxu0 %v2690
        %4219 = vmatprep.subr.bf16.mxu0 %v2687
        %4220 = vmatpush2.bf16.msra.mxu0 %v2686
        %4221 = vmatprep.subr.bf16.mxu0 %v2683
        %4222 = vmatpush2.bf16.msra.mxu0 %v2682
        %4223 = vmatprep.mubr.bf16.mxu0 %v1733
        %4224 = vmatmul.mubr.bf16.gmra.mxu0 %v1732
        %v4225 = vpop.f32.mrf.mxu0
        %v4226 = vadd.f32 %v4185, %v4225
        %v4227 = vpop.f32.mrf.mxu0
        %v4228 = vadd.f32 %v4187, %v4227
        %v4229 = vpop.f32.mrf.mxu0
        %v4230 = vpop.f32.mrf.mxu0
        %4231 = vdwg.mxu0
        %4232 = vmatprep.subr.bf16.mxu0 %v2743
        %4233 = vmatpush1.bf16.msra.mxu0 %v2742
        %4234 = vmatprep.subr.bf16.mxu0 %v2739
        %4235 = vmatpush1.bf16.msra.mxu0 %v2738
        %4236 = vmatprep.subr.bf16.mxu0 %v2735
        %4237 = vmatpush1.bf16.msra.mxu0 %v2734
        %4238 = vmatprep.subr.bf16.mxu0 %v2731
        %4239 = vmatpush1.bf16.msra.mxu0 %v2730
        %4240 = vmatprep.subr.bf16.mxu0 %v2727
        %4241 = vmatpush1.bf16.msra.mxu0 %v2726
        %4242 = vmatprep.subr.bf16.mxu0 %v2723
        %4243 = vmatpush1.bf16.msra.mxu0 %v2722
        %4244 = vmatprep.subr.bf16.mxu0 %v2719
        %4245 = vmatpush1.bf16.msra.mxu0 %v2718
        %4246 = vmatprep.subr.bf16.mxu0 %v2715
        %4247 = vmatpush1.bf16.msra.mxu0 %v2714
        %4248 = vmatprep.subr.bf16.mxu0 %v2775
        %4249 = vmatpush2.bf16.msra.mxu0 %v2774
        %4250 = vmatprep.subr.bf16.mxu0 %v2771
        %4251 = vmatpush2.bf16.msra.mxu0 %v2770
        %4252 = vmatprep.subr.bf16.mxu0 %v2767
        %4253 = vmatpush2.bf16.msra.mxu0 %v2766
        %4254 = vmatprep.subr.bf16.mxu0 %v2763
        %4255 = vmatpush2.bf16.msra.mxu0 %v2762
        %4256 = vmatprep.subr.bf16.mxu0 %v2759
        %4257 = vmatpush2.bf16.msra.mxu0 %v2758
        %4258 = vmatprep.subr.bf16.mxu0 %v2755
        %4259 = vmatpush2.bf16.msra.mxu0 %v2754
        %4260 = vmatprep.subr.bf16.mxu0 %v2751
        %4261 = vmatpush2.bf16.msra.mxu0 %v2750
        %4262 = vmatprep.subr.bf16.mxu0 %v2747
        %4263 = vmatpush2.bf16.msra.mxu0 %v2746
        %4264 = vmatprep.mubr.bf16.mxu0 %v1735
        %4265 = vmatmul.mubr.bf16.gmra.mxu0 %v1734
        %v4266 = vpop.f32.mrf.mxu0
        %v4267 = vadd.f32 %v4226, %v4266
        %v4268 = vpop.f32.mrf.mxu0
        %v4269 = vadd.f32 %v4228, %v4268
        %v4270 = vpop.f32.mrf.mxu0
        %v4271 = vpop.f32.mrf.mxu0
        %4272 = vdwg.mxu0
        %4273 = vmatprep.subr.bf16.mxu0 %v2807
        %4274 = vmatpush1.bf16.msra.mxu0 %v2806
        %4275 = vmatprep.subr.bf16.mxu0 %v2803
        %4276 = vmatpush1.bf16.msra.mxu0 %v2802
        %4277 = vmatprep.subr.bf16.mxu0 %v2799
        %4278 = vmatpush1.bf16.msra.mxu0 %v2798
        %4279 = vmatprep.subr.bf16.mxu0 %v2795
        %4280 = vmatpush1.bf16.msra.mxu0 %v2794
        %4281 = vmatprep.subr.bf16.mxu0 %v2791
        %4282 = vmatpush1.bf16.msra.mxu0 %v2790
        %4283 = vmatprep.subr.bf16.mxu0 %v2787
        %4284 = vmatpush1.bf16.msra.mxu0 %v2786
        %4285 = vmatprep.subr.bf16.mxu0 %v2783
        %4286 = vmatpush1.bf16.msra.mxu0 %v2782
        %4287 = vmatprep.subr.bf16.mxu0 %v2779
        %4288 = vmatpush1.bf16.msra.mxu0 %v2778
        %4289 = vmatprep.subr.bf16.mxu0 %v2839
        %4290 = vmatpush2.bf16.msra.mxu0 %v2838
        %4291 = vmatprep.subr.bf16.mxu0 %v2835
        %4292 = vmatpush2.bf16.msra.mxu0 %v2834
        %4293 = vmatprep.subr.bf16.mxu0 %v2831
        %4294 = vmatpush2.bf16.msra.mxu0 %v2830
        %4295 = vmatprep.subr.bf16.mxu0 %v2827
        %4296 = vmatpush2.bf16.msra.mxu0 %v2826
        %4297 = vmatprep.subr.bf16.mxu0 %v2823
        %4298 = vmatpush2.bf16.msra.mxu0 %v2822
        %4299 = vmatprep.subr.bf16.mxu0 %v2819
        %4300 = vmatpush2.bf16.msra.mxu0 %v2818
        %4301 = vmatprep.subr.bf16.mxu0 %v2815
        %4302 = vmatpush2.bf16.msra.mxu0 %v2814
        %4303 = vmatprep.subr.bf16.mxu0 %v2811
        %4304 = vmatpush2.bf16.msra.mxu0 %v2810
        %4305 = vmatprep.mubr.bf16.mxu0 %v1737
        %4306 = vmatmul.mubr.bf16.gmra.mxu0 %v1736
        %v4307 = vpop.f32.mrf.mxu0
        %v4308 = vadd.f32 %v4267, %v4307
        %v4309 = vpop.f32.mrf.mxu0
        %v4310 = vadd.f32 %v4269, %v4309
        %v4311 = vpop.f32.mrf.mxu0
        %v4312 = vpop.f32.mrf.mxu0
        %4313 = vdwg.mxu0
        %4314 = vmatprep.subr.bf16.mxu0 %v2871
        %4315 = vmatpush1.bf16.msra.mxu0 %v2870
        %4316 = vmatprep.subr.bf16.mxu0 %v2867
        %4317 = vmatpush1.bf16.msra.mxu0 %v2866
        %4318 = vmatprep.subr.bf16.mxu0 %v2863
        %4319 = vmatpush1.bf16.msra.mxu0 %v2862
        %4320 = vmatprep.subr.bf16.mxu0 %v2859
        %4321 = vmatpush1.bf16.msra.mxu0 %v2858
        %4322 = vmatprep.subr.bf16.mxu0 %v2855
        %4323 = vmatpush1.bf16.msra.mxu0 %v2854
        %4324 = vmatprep.subr.bf16.mxu0 %v2851
        %4325 = vmatpush1.bf16.msra.mxu0 %v2850
        %4326 = vmatprep.subr.bf16.mxu0 %v2847
        %4327 = vmatpush1.bf16.msra.mxu0 %v2846
        %4328 = vmatprep.subr.bf16.mxu0 %v2843
        %4329 = vmatpush1.bf16.msra.mxu0 %v2842
        %4330 = vmatprep.subr.bf16.mxu0 %v2903
        %4331 = vmatpush2.bf16.msra.mxu0 %v2902
        %4332 = vmatprep.subr.bf16.mxu0 %v2899
        %4333 = vmatpush2.bf16.msra.mxu0 %v2898
        %4334 = vmatprep.subr.bf16.mxu0 %v2895
        %4335 = vmatpush2.bf16.msra.mxu0 %v2894
        %4336 = vmatprep.subr.bf16.mxu0 %v2891
        %4337 = vmatpush2.bf16.msra.mxu0 %v2890
        %4338 = vmatprep.subr.bf16.mxu0 %v2887
        %4339 = vmatpush2.bf16.msra.mxu0 %v2886
        %4340 = vmatprep.subr.bf16.mxu0 %v2883
        %4341 = vmatpush2.bf16.msra.mxu0 %v2882
        %4342 = vmatprep.subr.bf16.mxu0 %v2879
        %4343 = vmatpush2.bf16.msra.mxu0 %v2878
        %4344 = vmatprep.subr.bf16.mxu0 %v2875
        %4345 = vmatpush2.bf16.msra.mxu0 %v2874
        %4346 = vmatprep.mubr.bf16.mxu0 %v1739
        %4347 = vmatmul.mubr.bf16.gmra.mxu0 %v1738
        %v4348 = vpop.f32.mrf.mxu0
        %v4349 = vadd.f32 %v4308, %v4348
        %v4350 = vpop.f32.mrf.mxu0
        %v4351 = vadd.f32 %v4310, %v4350
        %v4352 = vpop.f32.mrf.mxu0
        %v4353 = vpop.f32.mrf.mxu0
        %4354 = vdwg.mxu0
        %4355 = vmatprep.subr.bf16.mxu0 %v2935
        %4356 = vmatpush1.bf16.msra.mxu0 %v2934
        %4357 = vmatprep.subr.bf16.mxu0 %v2931
        %4358 = vmatpush1.bf16.msra.mxu0 %v2930
        %4359 = vmatprep.subr.bf16.mxu0 %v2927
        %4360 = vmatpush1.bf16.msra.mxu0 %v2926
        %4361 = vmatprep.subr.bf16.mxu0 %v2923
        %4362 = vmatpush1.bf16.msra.mxu0 %v2922
        %4363 = vmatprep.subr.bf16.mxu0 %v2919
        %4364 = vmatpush1.bf16.msra.mxu0 %v2918
        %4365 = vmatprep.subr.bf16.mxu0 %v2915
        %4366 = vmatpush1.bf16.msra.mxu0 %v2914
        %4367 = vmatprep.subr.bf16.mxu0 %v2911
        %4368 = vmatpush1.bf16.msra.mxu0 %v2910
        %4369 = vmatprep.subr.bf16.mxu0 %v2907
        %4370 = vmatpush1.bf16.msra.mxu0 %v2906
        %4371 = vmatprep.subr.bf16.mxu0 %v2967
        %4372 = vmatpush2.bf16.msra.mxu0 %v2966
        %4373 = vmatprep.subr.bf16.mxu0 %v2963
        %4374 = vmatpush2.bf16.msra.mxu0 %v2962
        %4375 = vmatprep.subr.bf16.mxu0 %v2959
        %4376 = vmatpush2.bf16.msra.mxu0 %v2958
        %4377 = vmatprep.subr.bf16.mxu0 %v2955
        %4378 = vmatpush2.bf16.msra.mxu0 %v2954
        %4379 = vmatprep.subr.bf16.mxu0 %v2951
        %4380 = vmatpush2.bf16.msra.mxu0 %v2950
        %4381 = vmatprep.subr.bf16.mxu0 %v2947
        %4382 = vmatpush2.bf16.msra.mxu0 %v2946
        %4383 = vmatprep.subr.bf16.mxu0 %v2943
        %4384 = vmatpush2.bf16.msra.mxu0 %v2942
        %4385 = vmatprep.subr.bf16.mxu0 %v2939
        %4386 = vmatpush2.bf16.msra.mxu0 %v2938
        %4387 = vmatprep.mubr.bf16.mxu0 %v1741
        %4388 = vmatmul.mubr.bf16.gmra.mxu0 %v1740
        %v4389 = vpop.f32.mrf.mxu0
        %v4390 = vadd.f32 %v4349, %v4389
        %v4391 = vpop.f32.mrf.mxu0
        %v4392 = vadd.f32 %v4351, %v4391
        %v4393 = vpop.f32.mrf.mxu0
        %v4394 = vpop.f32.mrf.mxu0
        %4395 = vdwg.mxu0
        %4396 = vmatprep.subr.bf16.mxu0 %v2999
        %4397 = vmatpush1.bf16.msra.mxu0 %v2998
        %4398 = vmatprep.subr.bf16.mxu0 %v2995
        %4399 = vmatpush1.bf16.msra.mxu0 %v2994
        %4400 = vmatprep.subr.bf16.mxu0 %v2991
        %4401 = vmatpush1.bf16.msra.mxu0 %v2990
        %4402 = vmatprep.subr.bf16.mxu0 %v2987
        %4403 = vmatpush1.bf16.msra.mxu0 %v2986
        %4404 = vmatprep.subr.bf16.mxu0 %v2983
        %4405 = vmatpush1.bf16.msra.mxu0 %v2982
        %4406 = vmatprep.subr.bf16.mxu0 %v2979
        %4407 = vmatpush1.bf16.msra.mxu0 %v2978
        %4408 = vmatprep.subr.bf16.mxu0 %v2975
        %4409 = vmatpush1.bf16.msra.mxu0 %v2974
        %4410 = vmatprep.subr.bf16.mxu0 %v2971
        %4411 = vmatpush1.bf16.msra.mxu0 %v2970
        %4412 = vmatprep.subr.bf16.mxu0 %v3031
        %4413 = vmatpush2.bf16.msra.mxu0 %v3030
        %4414 = vmatprep.subr.bf16.mxu0 %v3027
        %4415 = vmatpush2.bf16.msra.mxu0 %v3026
        %4416 = vmatprep.subr.bf16.mxu0 %v3023
        %4417 = vmatpush2.bf16.msra.mxu0 %v3022
        %4418 = vmatprep.subr.bf16.mxu0 %v3019
        %4419 = vmatpush2.bf16.msra.mxu0 %v3018
        %4420 = vmatprep.subr.bf16.mxu0 %v3015
        %4421 = vmatpush2.bf16.msra.mxu0 %v3014
        %4422 = vmatprep.subr.bf16.mxu0 %v3011
        %4423 = vmatpush2.bf16.msra.mxu0 %v3010
        %4424 = vmatprep.subr.bf16.mxu0 %v3007
        %4425 = vmatpush2.bf16.msra.mxu0 %v3006
        %4426 = vmatprep.subr.bf16.mxu0 %v3003
        %4427 = vmatpush2.bf16.msra.mxu0 %v3002
        %4428 = vmatprep.mubr.bf16.mxu0 %v1743
        %4429 = vmatmul.mubr.bf16.gmra.mxu0 %v1742
        %v4430 = vpop.f32.mrf.mxu0
        %v4431 = vadd.f32 %v4390, %v4430
        %v4432 = vpop.f32.mrf.mxu0
        %v4433 = vadd.f32 %v4392, %v4432
        %v4434 = vpop.f32.mrf.mxu0
        %v4435 = vpop.f32.mrf.mxu0
        %4436 = vdwg.mxu0
        %4437 = vmatprep.subr.bf16.mxu0 %v3063
        %4438 = vmatpush1.bf16.msra.mxu0 %v3062
        %4439 = vmatprep.subr.bf16.mxu0 %v3059
        %4440 = vmatpush1.bf16.msra.mxu0 %v3058
        %4441 = vmatprep.subr.bf16.mxu0 %v3055
        %4442 = vmatpush1.bf16.msra.mxu0 %v3054
        %4443 = vmatprep.subr.bf16.mxu0 %v3051
        %4444 = vmatpush1.bf16.msra.mxu0 %v3050
        %4445 = vmatprep.subr.bf16.mxu0 %v3047
        %4446 = vmatpush1.bf16.msra.mxu0 %v3046
        %4447 = vmatprep.subr.bf16.mxu0 %v3043
        %4448 = vmatpush1.bf16.msra.mxu0 %v3042
        %4449 = vmatprep.subr.bf16.mxu0 %v3039
        %4450 = vmatpush1.bf16.msra.mxu0 %v3038
        %4451 = vmatprep.subr.bf16.mxu0 %v3035
        %4452 = vmatpush1.bf16.msra.mxu0 %v3034
        %4453 = vmatprep.subr.bf16.mxu0 %v3095
        %4454 = vmatpush2.bf16.msra.mxu0 %v3094
        %4455 = vmatprep.subr.bf16.mxu0 %v3091
        %4456 = vmatpush2.bf16.msra.mxu0 %v3090
        %4457 = vmatprep.subr.bf16.mxu0 %v3087
        %4458 = vmatpush2.bf16.msra.mxu0 %v3086
        %4459 = vmatprep.subr.bf16.mxu0 %v3083
        %4460 = vmatpush2.bf16.msra.mxu0 %v3082
        %4461 = vmatprep.subr.bf16.mxu0 %v3079
        %4462 = vmatpush2.bf16.msra.mxu0 %v3078
        %4463 = vmatprep.subr.bf16.mxu0 %v3075
        %4464 = vmatpush2.bf16.msra.mxu0 %v3074
        %4465 = vmatprep.subr.bf16.mxu0 %v3071
        %4466 = vmatpush2.bf16.msra.mxu0 %v3070
        %4467 = vmatprep.subr.bf16.mxu0 %v3067
        %4468 = vmatpush2.bf16.msra.mxu0 %v3066
        %4469 = vmatprep.mubr.bf16.mxu0 %v1745
        %4470 = vmatmul.mubr.bf16.gmra.mxu0 %v1744
        %v4471 = vpop.f32.mrf.mxu0
        %v4472 = vadd.f32 %v4431, %v4471
        %v4473 = vpop.f32.mrf.mxu0
        %v4474 = vadd.f32 %v4433, %v4473
        %v4475 = vpop.f32.mrf.mxu0
        %v4476 = vpop.f32.mrf.mxu0
        %4477 = vdwg.mxu0
        %4478 = vmatprep.subr.bf16.mxu0 %v3127
        %4479 = vmatpush1.bf16.msra.mxu0 %v3126
        %4480 = vmatprep.subr.bf16.mxu0 %v3123
        %4481 = vmatpush1.bf16.msra.mxu0 %v3122
        %4482 = vmatprep.subr.bf16.mxu0 %v3119
        %4483 = vmatpush1.bf16.msra.mxu0 %v3118
        %4484 = vmatprep.subr.bf16.mxu0 %v3115
        %4485 = vmatpush1.bf16.msra.mxu0 %v3114
        %4486 = vmatprep.subr.bf16.mxu0 %v3111
        %4487 = vmatpush1.bf16.msra.mxu0 %v3110
        %4488 = vmatprep.subr.bf16.mxu0 %v3107
        %4489 = vmatpush1.bf16.msra.mxu0 %v3106
        %4490 = vmatprep.subr.bf16.mxu0 %v3103
        %4491 = vmatpush1.bf16.msra.mxu0 %v3102
        %4492 = vmatprep.subr.bf16.mxu0 %v3099
        %4493 = vmatpush1.bf16.msra.mxu0 %v3098
        %4494 = vmatprep.subr.bf16.mxu0 %v3159
        %4495 = vmatpush2.bf16.msra.mxu0 %v3158
        %4496 = vmatprep.subr.bf16.mxu0 %v3155
        %4497 = vmatpush2.bf16.msra.mxu0 %v3154
        %4498 = vmatprep.subr.bf16.mxu0 %v3151
        %4499 = vmatpush2.bf16.msra.mxu0 %v3150
        %4500 = vmatprep.subr.bf16.mxu0 %v3147
        %4501 = vmatpush2.bf16.msra.mxu0 %v3146
        %4502 = vmatprep.subr.bf16.mxu0 %v3143
        %4503 = vmatpush2.bf16.msra.mxu0 %v3142
        %4504 = vmatprep.subr.bf16.mxu0 %v3139
        %4505 = vmatpush2.bf16.msra.mxu0 %v3138
        %4506 = vmatprep.subr.bf16.mxu0 %v3135
        %4507 = vmatpush2.bf16.msra.mxu0 %v3134
        %4508 = vmatprep.subr.bf16.mxu0 %v3131
        %4509 = vmatpush2.bf16.msra.mxu0 %v3130
        %4510 = vmatprep.mubr.bf16.mxu0 %v1747
        %4511 = vmatmul.mubr.bf16.gmra.mxu0 %v1746
        %v4512 = vpop.f32.mrf.mxu0
        %v4513 = vadd.f32 %v4472, %v4512
        %v4514 = vpop.f32.mrf.mxu0
        %v4515 = vadd.f32 %v4474, %v4514
        %v4516 = vpop.f32.mrf.mxu0
        %v4517 = vpop.f32.mrf.mxu0
        %4518 = vdwg.mxu0
        %4519 = vmatprep.subr.bf16.mxu0 %v3191
        %4520 = vmatpush1.bf16.msra.mxu0 %v3190
        %4521 = vmatprep.subr.bf16.mxu0 %v3187
        %4522 = vmatpush1.bf16.msra.mxu0 %v3186
        %4523 = vmatprep.subr.bf16.mxu0 %v3183
        %4524 = vmatpush1.bf16.msra.mxu0 %v3182
        %4525 = vmatprep.subr.bf16.mxu0 %v3179
        %4526 = vmatpush1.bf16.msra.mxu0 %v3178
        %4527 = vmatprep.subr.bf16.mxu0 %v3175
        %4528 = vmatpush1.bf16.msra.mxu0 %v3174
        %4529 = vmatprep.subr.bf16.mxu0 %v3171
        %4530 = vmatpush1.bf16.msra.mxu0 %v3170
        %4531 = vmatprep.subr.bf16.mxu0 %v3167
        %4532 = vmatpush1.bf16.msra.mxu0 %v3166
        %4533 = vmatprep.subr.bf16.mxu0 %v3163
        %4534 = vmatpush1.bf16.msra.mxu0 %v3162
        %4535 = vmatprep.subr.bf16.mxu0 %v3223
        %4536 = vmatpush2.bf16.msra.mxu0 %v3222
        %4537 = vmatprep.subr.bf16.mxu0 %v3219
        %4538 = vmatpush2.bf16.msra.mxu0 %v3218
        %4539 = vmatprep.subr.bf16.mxu0 %v3215
        %4540 = vmatpush2.bf16.msra.mxu0 %v3214
        %4541 = vmatprep.subr.bf16.mxu0 %v3211
        %4542 = vmatpush2.bf16.msra.mxu0 %v3210
        %4543 = vmatprep.subr.bf16.mxu0 %v3207
        %4544 = vmatpush2.bf16.msra.mxu0 %v3206
        %4545 = vmatprep.subr.bf16.mxu0 %v3203
        %4546 = vmatpush2.bf16.msra.mxu0 %v3202
        %4547 = vmatprep.subr.bf16.mxu0 %v3199
        %4548 = vmatpush2.bf16.msra.mxu0 %v3198
        %4549 = vmatprep.subr.bf16.mxu0 %v3195
        %4550 = vmatpush2.bf16.msra.mxu0 %v3194
        %4551 = vmatprep.mubr.bf16.mxu0 %v1749
        %4552 = vmatmul.mubr.bf16.gmra.mxu0 %v1748
        %v4553 = vpop.f32.mrf.mxu0
        %v4554 = vadd.f32 %v4513, %v4553
        %v4555 = vpop.f32.mrf.mxu0
        %v4556 = vadd.f32 %v4515, %v4555
        %v4557 = vpop.f32.mrf.mxu0
        %v4558 = vpop.f32.mrf.mxu0
        %4559 = vdwg.mxu0
        %4560 = vmatprep.subr.bf16.mxu0 %v3255
        %4561 = vmatpush1.bf16.msra.mxu0 %v3254
        %4562 = vmatprep.subr.bf16.mxu0 %v3251
        %4563 = vmatpush1.bf16.msra.mxu0 %v3250
        %4564 = vmatprep.subr.bf16.mxu0 %v3247
        %4565 = vmatpush1.bf16.msra.mxu0 %v3246
        %4566 = vmatprep.subr.bf16.mxu0 %v3243
        %4567 = vmatpush1.bf16.msra.mxu0 %v3242
        %4568 = vmatprep.subr.bf16.mxu0 %v3239
        %4569 = vmatpush1.bf16.msra.mxu0 %v3238
        %4570 = vmatprep.subr.bf16.mxu0 %v3235
        %4571 = vmatpush1.bf16.msra.mxu0 %v3234
        %4572 = vmatprep.subr.bf16.mxu0 %v3231
        %4573 = vmatpush1.bf16.msra.mxu0 %v3230
        %4574 = vmatprep.subr.bf16.mxu0 %v3227
        %4575 = vmatpush1.bf16.msra.mxu0 %v3226
        %4576 = vmatprep.subr.bf16.mxu0 %v3287
        %4577 = vmatpush2.bf16.msra.mxu0 %v3286
        %4578 = vmatprep.subr.bf16.mxu0 %v3283
        %4579 = vmatpush2.bf16.msra.mxu0 %v3282
        %4580 = vmatprep.subr.bf16.mxu0 %v3279
        %4581 = vmatpush2.bf16.msra.mxu0 %v3278
        %4582 = vmatprep.subr.bf16.mxu0 %v3275
        %4583 = vmatpush2.bf16.msra.mxu0 %v3274
        %4584 = vmatprep.subr.bf16.mxu0 %v3271
        %4585 = vmatpush2.bf16.msra.mxu0 %v3270
        %4586 = vmatprep.subr.bf16.mxu0 %v3267
        %4587 = vmatpush2.bf16.msra.mxu0 %v3266
        %4588 = vmatprep.subr.bf16.mxu0 %v3263
        %4589 = vmatpush2.bf16.msra.mxu0 %v3262
        %4590 = vmatprep.subr.bf16.mxu0 %v3259
        %4591 = vmatpush2.bf16.msra.mxu0 %v3258
        %4592 = vmatprep.mubr.bf16.mxu0 %v1751
        %4593 = vmatmul.mubr.bf16.gmra.mxu0 %v1750
        %v4594 = vpop.f32.mrf.mxu0
        %v4595 = vadd.f32 %v4554, %v4594
        %v4596 = vpop.f32.mrf.mxu0
        %v4597 = vadd.f32 %v4556, %v4596
        %v4598 = vpop.f32.mrf.mxu0
        %v4599 = vpop.f32.mrf.mxu0
        %4600 = vdwg.mxu0
        %v4605 = vcombine.low %v3939, %v3941
        %v4606 = vcombine.low %v4595, %v4597
        %v4608 = vunpack.c.l.s4 1983009808
        %v4609 = vunpack.c.0.s8 %v4608
        %v4610 = vlaneseq
        %v4611 = vshrl.u32 %v4610, 7
        %v4612 = vsub.s32 %v4609, %v4611
        %v4613 = vrot.slane %v4605, %v4612
        %v4615 = vunpack.c.l.s4 1983009808
        %v4616 = vunpack.c.0.s8 %v4615
        %v4617 = vlaneseq
        %v4618 = vshrl.u32 %v4617, 7
        %v4619 = vsub.s32 %v4616, %v4618
        %v4620 = vrot.slane %v4606, %v4619
        %v4621 = vcombine.low %v4613, %v4620
        %v4623 = vadd.f32 %v3288, %v4621
        %4624 = vst [vmem:[%s397] sm:$0xff] %v4623
        // Predicated region
        $region69: #{_encoder_pallas.1} parent=43 // pred_check
          %p4625 = pneg %p406
        $region70: #{_encoder_pallas.1} parent=43 // pred_check_branch
          %4627 = sbr.rel (%p4625) target = $region72
        $region71: #{_encoder_pallas.1} parent=43 // pred_region
          %v4628 = vld [vmem:[%s397] sm:$0xff]
          %v4629 = vld [vmem:[%s350] sm:$0xf]
          %v4631 = vlaneseq
          %v4632 = vshrl.u32 %v4631, 7
          %v4633 = vsub.s32 0, %v4632
          %v4634 = vrot.slane %v4629, %v4633
          %v4635 = vlaneseq
          %v4636 = vshrl.u32 %v4635, 7
          %v4637 = vsub.s32 1, %v4636
          %v4638 = vrot.slane %v4629, %v4637
          %v4639 = vlaneseq
          %v4640 = vshrl.u32 %v4639, 7
          %v4641 = vsub.s32 2, %v4640
          %v4642 = vrot.slane %v4629, %v4641
          %v4643 = vlaneseq
          %v4644 = vshrl.u32 %v4643, 7
          %v4645 = vsub.s32 3, %v4644
          %v4646 = vrot.slane %v4629, %v4645
          %v4647 = vcombine.low %v4634, %v4638
          %v4648 = vcombine.low %v4642, %v4646
          %v4650 = vunpack.c.l.s4 1983009808
          %v4651 = vunpack.c.0.s8 %v4650
          %v4652 = vlaneseq
          %v4653 = vshrl.u32 %v4652, 7
          %v4654 = vsub.s32 %v4651, %v4653
          %v4655 = vrot.slane %v4647, %v4654
          %v4657 = vunpack.c.l.s4 1983009808
          %v4658 = vunpack.c.0.s8 %v4657
          %v4659 = vlaneseq
          %v4660 = vshrl.u32 %v4659, 7
          %v4661 = vsub.s32 %v4658, %v4660
          %v4662 = vrot.slane %v4648, %v4661
          %v4663 = vcombine.low %v4655, %v4662
          %v4665 = vmul.f32 %v4628, %v4663
          %v4666 = vld [vmem:[%s359] sm:$0xf]
          %v4668 = vlaneseq
          %v4669 = vshrl.u32 %v4668, 7
          %v4670 = vsub.s32 0, %v4669
          %v4671 = vrot.slane %v4666, %v4670
          %v4672 = vlaneseq
          %v4673 = vshrl.u32 %v4672, 7
          %v4674 = vsub.s32 1, %v4673
          %v4675 = vrot.slane %v4666, %v4674
          %v4676 = vlaneseq
          %v4677 = vshrl.u32 %v4676, 7
          %v4678 = vsub.s32 2, %v4677
          %v4679 = vrot.slane %v4666, %v4678
          %v4680 = vlaneseq
          %v4681 = vshrl.u32 %v4680, 7
          %v4682 = vsub.s32 3, %v4681
          %v4683 = vrot.slane %v4666, %v4682
          %v4684 = vcombine.low %v4671, %v4675
          %v4685 = vcombine.low %v4679, %v4683
          %v4687 = vunpack.c.l.s4 1983009808
          %v4688 = vunpack.c.0.s8 %v4687
          %v4689 = vlaneseq
          %v4690 = vshrl.u32 %v4689, 7
          %v4691 = vsub.s32 %v4688, %v4690
          %v4692 = vrot.slane %v4684, %v4691
          %v4694 = vunpack.c.l.s4 1983009808
          %v4695 = vunpack.c.0.s8 %v4694
          %v4696 = vlaneseq
          %v4697 = vshrl.u32 %v4696, 7
          %v4698 = vsub.s32 %v4695, %v4697
          %v4699 = vrot.slane %v4685, %v4698
          %v4700 = vcombine.low %v4692, %v4699
          %v4702 = vadd.f32 %v4665, %v4700
          %vm4703 = vcmp.gt.f32.partialorder %v4702, 0.0
          %v4704 = vmul.f32 %v4702, 0.01
          %v4705 = vsel %vm4703, %v4702, %v4704
          %4706 = vst [vmem:[%s397] sm:$0xff] %v4705
        $region72: #{_encoder_pallas.1} parent=43 // pred_fallthru
          _
        %s4707 = sand.u32 %s195, 1
        %s4708 = scalar_lea.sflag [#allocation4], %s4707
        %s4709 = sand.u32 %s195, 1
        %s4710 = smul.addr %s4709, 8
        %s4711 = scalar_lea.vmem [#allocation10], %s4710
        // Predicated region
        $region73: #{_encoder_pallas.1} parent=43 // pred_check
          %p4712 = pneg %p205
        $region74: #{_encoder_pallas.1} parent=43 // pred_check_branch
          %4714 = sbr.rel (%p4712) target = $region76
        $region75: #{_encoder_pallas.1} parent=43 // pred_region
          %s4715 = smul.u32 4, %s26
          %s4717 = ssub.s32 128, 128
          %4718 = vsyncadd %s4708, %s4717
          %s4719 = smul.addr %s4715, 32
          %s4720 = scalar_lea.hbm %s6, %s4719
          %s4722 = sshll.u32 %s4711, 4
          %s4723 = int_to_ptr.vmem [resolvable:$true] %s4722
          %4725 = dma.vmem_to_hbm [thread:$0]  %s4723, 128, %s4720, %s4708
        $region76: #{_encoder_pallas.1} parent=43 // pred_fallthru
          _
      $region44: #{_encoder_pallas.1} parent=5 // pred_fallthru
        _
      %p4726 = scmp.le.s32.totalorder 2, %s17
      // Predicated region
      $region77: #{_encoder_pallas.1} parent=5 // pred_check
        %p4727 = pneg %p4726
      $region78: #{_encoder_pallas.1} parent=5 // pred_check_branch
        %4729 = sbr.rel (%p4727) target = $region80
      $region79: #{_encoder_pallas.1} parent=5 // pred_region
        %s4730 = ssub.s32 %s17, 2
        // Predicated region
        $region81: #{_encoder_pallas.1} parent=79 // pred_check
          %p4731 = pneg %p211
        $region82: #{_encoder_pallas.1} parent=79 // pred_check_branch
          %4733 = sbr.rel (%p4731) target = $region84
        $region83: #{_encoder_pallas.1} parent=79 // pred_region
          %s4734 = sand.u32 %s196, 1
          %s4735 = scalar_lea.sflag [#allocation4], %s4734
          %s4736 = sand.u32 %s196, 1
          %s4737 = smul.addr %s4736, 8
          %s4738 = scalar_lea.vmem [#allocation10], %s4737
          %4739 = dma.done %s4735, 128
        $region84: #{_encoder_pallas.1} parent=79 // pred_fallthru
          _
      $region80: #{_encoder_pallas.1} parent=5 // pred_fallthru
        _
    $region6: #{_encoder_pallas.1} parent=1 // loop_footer
      %s21 = sadd.s32 1, %s17
    $region7: #{_encoder_pallas.1} parent=1 // loop_footer_branch
      %16 = sbr.rel target = $region3
    $region8: #{_encoder_pallas.1} parent=1 // loop_exit
      _
    %4740 = vsyncpa [#allocation3], 1
    %s4741 = scalar_lea.sflag [#allocation3], 1
    %4742 = vsyncpa %s4741, 1
    %4743 = vsyncpa [#allocation6], 1
    %4744 = vsyncpa [#allocation4], 1
    %s4745 = scalar_lea.sflag [#allocation4], 1
    %4746 = vsyncpa %s4745, 1

</llo_original>
